<compile_context>
chip_gen: v7x
topology: tpu7x:2x2x1
jax: 0.10.0
libtpu: 0.0.40
codegen_flags: <defaults>
</compile_context>

<pallas_src>
import jax
import jax.numpy as jnp
from jax.experimental import pallas as pl
from jax.experimental.pallas import tpu as pltpu


# ------------------------------ fused kernel ---------------------------------

def _make_fused_kernel(B, T, H, num_layers):
    """Kernel over refs:
       x2d, (w_ih^T, w_hh^T, bias) * num_layers, w_dec^T, b_dec, out2d,
       xtm_scr (B*T, Cin), seq_scr (B*T, H)."""

    def kernel(*refs):
        x_ref = refs[0]
        layer_refs = refs[1:1 + 3 * num_layers]
        wd_ref = refs[1 + 3 * num_layers]
        bd_ref = refs[2 + 3 * num_layers]
        out_ref = refs[3 + 3 * num_layers]
        xtm_scr = refs[4 + 3 * num_layers]
        seq_scr = refs[5 + 3 * num_layers]

        # ---- 0. one-time reorder of the batch-major input rows (b*T + t)
        #         into time-major rows (t*B + b); B*T tiny single-row copies.
        for b in range(B):
            for t in range(T):
                xtm_scr[pl.ds(t * B + b, 1), :] = x_ref[pl.ds(b * T + t, 1), :]

        for layer in range(num_layers):
            wih_ref, whh_ref, bias_ref = layer_refs[3 * layer:3 * layer + 3]
            last = layer == num_layers - 1

            # ---- 1. hoisted input projection for ALL T*B positions:
            #         one batched matmul + bias (time-major rows t*B + b).
            seq_in = xtm_scr[...] if layer == 0 else seq_scr[...]
            gin = (jnp.dot(seq_in, wih_ref[...],
                           preferred_element_type=jnp.float32)
                   + bias_ref[...])                       # (B*T, 4H)

            # ---- 2. recurrence: only h @ W_hh^T stays in the serial loop.
            whh = whh_ref[...]                            # (H, 4H), resident
            h = jnp.zeros((B, H), jnp.float32)
            c = jnp.zeros((B, H), jnp.float32)
            for t in range(T):                            # static unroll
                gates = gin[t * B:(t + 1) * B, :] + jnp.dot(
                    h, whh, preferred_element_type=jnp.float32)   # (B, 4H)
                i_g = jax.nn.sigmoid(gates[:, 0 * H:1 * H])
                f_g = jax.nn.sigmoid(gates[:, 1 * H:2 * H])
                g_g = jnp.tanh(gates[:, 2 * H:3 * H])
                o_g = jax.nn.sigmoid(gates[:, 3 * H:4 * H])
                c = f_g * c + i_g * g_g
                h = o_g * jnp.tanh(c)

                if not last:
                    # intermediate layer: keep the sequence time-major so the
                    # next layer's hoisted projection reads it contiguously.
                    seq_scr[pl.ds(t * B, B), :] = h
                else:
                    # final layer: store batch-major (row b*T + t) so the
                    # decoder output is a single (B*T, C) slab store.
                    for b in range(B):
                        seq_scr[pl.ds(b * T + t, 1), :] = h[b:b + 1, :]

        # ---- 3. decoder: one batched matmul over all T*B rows + single store.
        out_ref[...] = (jnp.dot(seq_scr[...], wd_ref[...],
                                preferred_element_type=jnp.float32)
                        + bd_ref[...]).astype(out_ref.dtype)

    return kernel


# ------------------------------- full forward --------------------------------

def lstm_model_forward(x, params):
    """x: (B, T, Cin) batch-first -> logits (B, T, num_classes)."""
    B, T, Cin = x.shape
    layers = params["lstm"]
    num_layers = len(layers)
    H = layers[0]["w_hh"].shape[1]
    C = params["dec_w"].shape[0]

    # Weight prep (tiny, fused by XLA): PyTorch (4H, Din) -> (Din, 4H),
    # both biases folded into one row vector.  Activations are only reshaped
    # (free bitcasts) -- no transposes of activations anywhere.
    inputs = [x.reshape(B * T, Cin)]
    for lyr in layers:
        inputs += [lyr["w_ih"].T, lyr["w_hh"].T,
                   (lyr["b_ih"] + lyr["b_hh"]).reshape(1, -1)]
    inputs += [params["dec_w"].T, params["dec_b"].reshape(1, C)]

    out2d = pl.pallas_call(
        _make_fused_kernel(B, T, H, num_layers),
        out_shape=jax.ShapeDtypeStruct((B * T, C), jnp.float32),
        scratch_shapes=[
            pltpu.VMEM((B * T, Cin), jnp.float32),   # time-major input copy
            pltpu.VMEM((B * T, H), jnp.float32),     # layer output sequence
        ],
    )(*inputs)
    return out2d.reshape(B, T, C)


# ------------------------------ parameter init --------------------------------

def init_params(key, in_channels=6, embed_dims=64, num_layers=2, num_classes=5,
                init_std=0.02):
    def xavier_uniform(k, shape):
        fan_out, fan_in = shape
        bound = (6.0 / (fan_in + fan_out)) ** 0.5
        return jax.random.uniform(k, shape, jnp.float32, -bound, bound)

    params = {"lstm": []}
    hb = 1.0 / (embed_dims ** 0.5)
    for layer in range(num_layers):
        din = in_channels if layer == 0 else embed_dims
        key, k1, k2, k3, k4 = jax.random.split(key, 5)
        params["lstm"].append({
            "w_ih": xavier_uniform(k1, (4 * embed_dims, din)),
            "w_hh": xavier_uniform(k2, (4 * embed_dims, embed_dims)),
            "b_ih": jax.random.uniform(k3, (4 * embed_dims,), jnp.float32, -hb, hb),
            "b_hh": jax.random.uniform(k4, (4 * embed_dims,), jnp.float32, -hb, hb),
        })
    key, kw, kb = jax.random.split(key, 3)
    params["dec_w"] = (jax.random.truncated_normal(
        kw, -2.0, 2.0, (num_classes, embed_dims), jnp.float32) * init_std)
    params["dec_b"] = jax.random.uniform(kb, (num_classes,), jnp.float32, -hb, hb)
    return params


# ----------------------------- pure-JAX reference ------------------------------

def reference_forward(x, params):
    h_seq = jnp.transpose(x, (1, 0, 2))   # (T, B, Din)
    B = x.shape[0]
    for layer in params["lstm"]:
        H = layer["w_hh"].shape[1]
        wih_t, whh_t = layer["w_ih"].T, layer["w_hh"].T
        b = layer["b_ih"] + layer["b_hh"]

        def step(carry, x_t):
            h, c = carry
            g = x_t @ wih_t + h @ whh_t + b
            i, f, gg, o = jnp.split(g, 4, axis=-1)
            c = jax.nn.sigmoid(f) * c + jax.nn.sigmoid(i) * jnp.tanh(gg)
            h = jax.nn.sigmoid(o) * jnp.tanh(c)
            return (h, c), h

        init = (jnp.zeros((B, H), jnp.float32), jnp.zeros((B, H), jnp.float32))
        _, h_seq = jax.lax.scan(step, init, h_seq)
    out = h_seq @ params["dec_w"].T + params["dec_b"]
    return jnp.transpose(out, (1, 0, 2))


# ------------------------------------ main ------------------------------------

if __name__ == "__main__":
    key = jax.random.PRNGKey(0)
    kx, kp = jax.random.split(key)

    B, T, Cin = 2, 8, 6
    x = jax.random.normal(kx, (B, T, Cin), jnp.float32)
    params = init_params(kp, in_channels=Cin, embed_dims=64,
                         num_layers=2, num_classes=5)

    out = jax.jit(lstm_model_forward)(x, params)
    out = jax.block_until_ready(out)

    ref = reference_forward(x, params)
    assert out.shape == (B, T, 5), out.shape
    assert jnp.allclose(out, ref, atol=2e-5, rtol=2e-5), \
        float(jnp.max(jnp.abs(out - ref)))

    print("KERNEL_OK")
</pallas_src>

<mosaic_0001>
module attributes {stable_mosaic.version = 11 : i64} {
  func.func @kernel(%arg0: memref<16x6xf32, #tpu.memory_space<vmem>>, %arg1: memref<6x256xf32, #tpu.memory_space<vmem>>, %arg2: memref<64x256xf32, #tpu.memory_space<vmem>>, %arg3: memref<1x256xf32, #tpu.memory_space<vmem>>, %arg4: memref<64x256xf32, #tpu.memory_space<vmem>>, %arg5: memref<64x256xf32, #tpu.memory_space<vmem>>, %arg6: memref<1x256xf32, #tpu.memory_space<vmem>>, %arg7: memref<64x5xf32, #tpu.memory_space<vmem>>, %arg8: memref<1x5xf32, #tpu.memory_space<vmem>>, %arg9: memref<16x5xf32, #tpu.memory_space<vmem>>, %arg10: memref<16x6xf32, #tpu.memory_space<vmem>>, %arg11: memref<16x64xf32, #tpu.memory_space<vmem>>) attributes {dimension_semantics = [], scalar_prefetch = 0 : i64, scratch_operands = 2 : i64, tpu.core_type = #tpu.core_type<tc>} {
    %c0 = arith.constant 0 : index
    %c0_0 = arith.constant 0 : index
    %0 = vector.load %arg0[%c0, %c0_0] : memref<16x6xf32, #tpu.memory_space<vmem>>, vector<1x6xf32>
    %c0_1 = arith.constant 0 : index
    %c0_2 = arith.constant 0 : index
    %1 = vector.load %arg10[%c0_1, %c0_2] : memref<16x6xf32, #tpu.memory_space<vmem>>, vector<1x6xf32>
    tpu.vector_store %arg10[%c0_1, %c0_2], %0 {strides = array<i32>} : memref<16x6xf32, #tpu.memory_space<vmem>>, vector<1x6xf32>,
    %c1 = arith.constant 1 : index
    %c0_3 = arith.constant 0 : index
    %2 = vector.load %arg0[%c1, %c0_3] : memref<16x6xf32, #tpu.memory_space<vmem>>, vector<1x6xf32>
    %c2 = arith.constant 2 : index
    %c0_4 = arith.constant 0 : index
    %3 = vector.load %arg10[%c2, %c0_4] : memref<16x6xf32, #tpu.memory_space<vmem>>, vector<1x6xf32>
    tpu.vector_store %arg10[%c2, %c0_4], %2 {strides = array<i32>} : memref<16x6xf32, #tpu.memory_space<vmem>>, vector<1x6xf32>,
    %c2_5 = arith.constant 2 : index
    %c0_6 = arith.constant 0 : index
    %4 = vector.load %arg0[%c2_5, %c0_6] : memref<16x6xf32, #tpu.memory_space<vmem>>, vector<1x6xf32>
    %c4 = arith.constant 4 : index
    %c0_7 = arith.constant 0 : index
    %5 = vector.load %arg10[%c4, %c0_7] : memref<16x6xf32, #tpu.memory_space<vmem>>, vector<1x6xf32>
    tpu.vector_store %arg10[%c4, %c0_7], %4 {strides = array<i32>} : memref<16x6xf32, #tpu.memory_space<vmem>>, vector<1x6xf32>,
    %c3 = arith.constant 3 : index
    %c0_8 = arith.constant 0 : index
    %6 = vector.load %arg0[%c3, %c0_8] : memref<16x6xf32, #tpu.memory_space<vmem>>, vector<1x6xf32>
    %c6 = arith.constant 6 : index
    %c0_9 = arith.constant 0 : index
    %7 = vector.load %arg10[%c6, %c0_9] : memref<16x6xf32, #tpu.memory_space<vmem>>, vector<1x6xf32>
    tpu.vector_store %arg10[%c6, %c0_9], %6 {strides = array<i32>} : memref<16x6xf32, #tpu.memory_space<vmem>>, vector<1x6xf32>,
    %c4_10 = arith.constant 4 : index
    %c0_11 = arith.constant 0 : index
    %8 = vector.load %arg0[%c4_10, %c0_11] : memref<16x6xf32, #tpu.memory_space<vmem>>, vector<1x6xf32>
    %c8 = arith.constant 8 : index
    %c0_12 = arith.constant 0 : index
    %9 = vector.load %arg10[%c8, %c0_12] : memref<16x6xf32, #tpu.memory_space<vmem>>, vector<1x6xf32>
    tpu.vector_store %arg10[%c8, %c0_12], %8 {strides = array<i32>} : memref<16x6xf32, #tpu.memory_space<vmem>>, vector<1x6xf32>,
    %c5 = arith.constant 5 : index
    %c0_13 = arith.constant 0 : index
    %10 = vector.load %arg0[%c5, %c0_13] : memref<16x6xf32, #tpu.memory_space<vmem>>, vector<1x6xf32>
    %c10 = arith.constant 10 : index
    %c0_14 = arith.constant 0 : index
    %11 = vector.load %arg10[%c10, %c0_14] : memref<16x6xf32, #tpu.memory_space<vmem>>, vector<1x6xf32>
    tpu.vector_store %arg10[%c10, %c0_14], %10 {strides = array<i32>} : memref<16x6xf32, #tpu.memory_space<vmem>>, vector<1x6xf32>,
    %c6_15 = arith.constant 6 : index
    %c0_16 = arith.constant 0 : index
    %12 = vector.load %arg0[%c6_15, %c0_16] : memref<16x6xf32, #tpu.memory_space<vmem>>, vector<1x6xf32>
    %c12 = arith.constant 12 : index
    %c0_17 = arith.constant 0 : index
    %13 = vector.load %arg10[%c12, %c0_17] : memref<16x6xf32, #tpu.memory_space<vmem>>, vector<1x6xf32>
    tpu.vector_store %arg10[%c12, %c0_17], %12 {strides = array<i32>} : memref<16x6xf32, #tpu.memory_space<vmem>>, vector<1x6xf32>,
    %c7 = arith.constant 7 : index
    %c0_18 = arith.constant 0 : index
    %14 = vector.load %arg0[%c7, %c0_18] : memref<16x6xf32, #tpu.memory_space<vmem>>, vector<1x6xf32>
    %c14 = arith.constant 14 : index
    %c0_19 = arith.constant 0 : index
    %15 = vector.load %arg10[%c14, %c0_19] : memref<16x6xf32, #tpu.memory_space<vmem>>, vector<1x6xf32>
    tpu.vector_store %arg10[%c14, %c0_19], %14 {strides = array<i32>} : memref<16x6xf32, #tpu.memory_space<vmem>>, vector<1x6xf32>,
    %c8_20 = arith.constant 8 : index
    %c0_21 = arith.constant 0 : index
    %16 = vector.load %arg0[%c8_20, %c0_21] : memref<16x6xf32, #tpu.memory_space<vmem>>, vector<1x6xf32>
    %c1_22 = arith.constant 1 : index
    %c0_23 = arith.constant 0 : index
    %17 = vector.load %arg10[%c1_22, %c0_23] : memref<16x6xf32, #tpu.memory_space<vmem>>, vector<1x6xf32>
    tpu.vector_store %arg10[%c1_22, %c0_23], %16 {strides = array<i32>} : memref<16x6xf32, #tpu.memory_space<vmem>>, vector<1x6xf32>,
    %c9 = arith.constant 9 : index
    %c0_24 = arith.constant 0 : index
    %18 = vector.load %arg0[%c9, %c0_24] : memref<16x6xf32, #tpu.memory_space<vmem>>, vector<1x6xf32>
    %c3_25 = arith.constant 3 : index
    %c0_26 = arith.constant 0 : index
    %19 = vector.load %arg10[%c3_25, %c0_26] : memref<16x6xf32, #tpu.memory_space<vmem>>, vector<1x6xf32>
    tpu.vector_store %arg10[%c3_25, %c0_26], %18 {strides = array<i32>} : memref<16x6xf32, #tpu.memory_space<vmem>>, vector<1x6xf32>,
    %c10_27 = arith.constant 10 : index
    %c0_28 = arith.constant 0 : index
    %20 = vector.load %arg0[%c10_27, %c0_28] : memref<16x6xf32, #tpu.memory_space<vmem>>, vector<1x6xf32>
    %c5_29 = arith.constant 5 : index
    %c0_30 = arith.constant 0 : index
    %21 = vector.load %arg10[%c5_29, %c0_30] : memref<16x6xf32, #tpu.memory_space<vmem>>, vector<1x6xf32>
    tpu.vector_store %arg10[%c5_29, %c0_30], %20 {strides = array<i32>} : memref<16x6xf32, #tpu.memory_space<vmem>>, vector<1x6xf32>,
    %c11 = arith.constant 11 : index
    %c0_31 = arith.constant 0 : index
    %22 = vector.load %arg0[%c11, %c0_31] : memref<16x6xf32, #tpu.memory_space<vmem>>, vector<1x6xf32>
    %c7_32 = arith.constant 7 : index
    %c0_33 = arith.constant 0 : index
    %23 = vector.load %arg10[%c7_32, %c0_33] : memref<16x6xf32, #tpu.memory_space<vmem>>, vector<1x6xf32>
    tpu.vector_store %arg10[%c7_32, %c0_33], %22 {strides = array<i32>} : memref<16x6xf32, #tpu.memory_space<vmem>>, vector<1x6xf32>,
    %c12_34 = arith.constant 12 : index
    %c0_35 = arith.constant 0 : index
    %24 = vector.load %arg0[%c12_34, %c0_35] : memref<16x6xf32, #tpu.memory_space<vmem>>, vector<1x6xf32>
    %c9_36 = arith.constant 9 : index
    %c0_37 = arith.constant 0 : index
    %25 = vector.load %arg10[%c9_36, %c0_37] : memref<16x6xf32, #tpu.memory_space<vmem>>, vector<1x6xf32>
    tpu.vector_store %arg10[%c9_36, %c0_37], %24 {strides = array<i32>} : memref<16x6xf32, #tpu.memory_space<vmem>>, vector<1x6xf32>,
    %c13 = arith.constant 13 : index
    %c0_38 = arith.constant 0 : index
    %26 = vector.load %arg0[%c13, %c0_38] : memref<16x6xf32, #tpu.memory_space<vmem>>, vector<1x6xf32>
    %c11_39 = arith.constant 11 : index
    %c0_40 = arith.constant 0 : index
    %27 = vector.load %arg10[%c11_39, %c0_40] : memref<16x6xf32, #tpu.memory_space<vmem>>, vector<1x6xf32>
    tpu.vector_store %arg10[%c11_39, %c0_40], %26 {strides = array<i32>} : memref<16x6xf32, #tpu.memory_space<vmem>>, vector<1x6xf32>,
    %c14_41 = arith.constant 14 : index
    %c0_42 = arith.constant 0 : index
    %28 = vector.load %arg0[%c14_41, %c0_42] : memref<16x6xf32, #tpu.memory_space<vmem>>, vector<1x6xf32>
    %c13_43 = arith.constant 13 : index
    %c0_44 = arith.constant 0 : index
    %29 = vector.load %arg10[%c13_43, %c0_44] : memref<16x6xf32, #tpu.memory_space<vmem>>, vector<1x6xf32>
    tpu.vector_store %arg10[%c13_43, %c0_44], %28 {strides = array<i32>} : memref<16x6xf32, #tpu.memory_space<vmem>>, vector<1x6xf32>,
    %c15 = arith.constant 15 : index
    %c0_45 = arith.constant 0 : index
    %30 = vector.load %arg0[%c15, %c0_45] : memref<16x6xf32, #tpu.memory_space<vmem>>, vector<1x6xf32>
    %c15_46 = arith.constant 15 : index
    %c0_47 = arith.constant 0 : index
    %31 = vector.load %arg10[%c15_46, %c0_47] : memref<16x6xf32, #tpu.memory_space<vmem>>, vector<1x6xf32>
    tpu.vector_store %arg10[%c15_46, %c0_47], %30 {strides = array<i32>} : memref<16x6xf32, #tpu.memory_space<vmem>>, vector<1x6xf32>,
    %c0_48 = arith.constant 0 : index
    %c0_49 = arith.constant 0 : index
    %32 = vector.load %arg10[%c0_48, %c0_49] : memref<16x6xf32, #tpu.memory_space<vmem>>, vector<16x6xf32>
    %c0_50 = arith.constant 0 : index
    %c0_51 = arith.constant 0 : index
    %33 = vector.load %arg1[%c0_50, %c0_51] : memref<6x256xf32, #tpu.memory_space<vmem>>, vector<6x256xf32>
    %cst = arith.constant dense<0.000000e+00> : vector<16x256xf32>
    %34 = tpu.matmul %32, %33, %cst {dimension_numbers = #tpu.dot_dimension_numbers<[1], [0], [0], [1], [0, 0, 1, 1], [], []>} : vector<16x6xf32>, vector<6x256xf32>, vector<16x256xf32> -> vector<16x256xf32>
    %c0_52 = arith.constant 0 : index
    %c0_53 = arith.constant 0 : index
    %35 = vector.load %arg3[%c0_52, %c0_53] : memref<1x256xf32, #tpu.memory_space<vmem>>, vector<1x256xf32>
    %36 = vector.broadcast %35 : vector<1x256xf32> to vector<16x256xf32>
    %37 = arith.addf %34, %36 : vector<16x256xf32>
    %c0_54 = arith.constant 0 : index
    %c0_55 = arith.constant 0 : index
    %38 = vector.load %arg2[%c0_54, %c0_55] : memref<64x256xf32, #tpu.memory_space<vmem>>, vector<64x256xf32>
    %cst_56 = arith.constant 0.000000e+00 : f32
    %39 = vector.broadcast %cst_56 : f32 to vector<2x64xf32>
    %cst_57 = arith.constant 0.000000e+00 : f32
    %40 = vector.broadcast %cst_57 : f32 to vector<2x64xf32>
    %41 = vector.extract_strided_slice %37 {offsets = [0, 0], sizes = [2, 256], strides = [1, 1]} : vector<16x256xf32> to vector<2x256xf32>
    %cst_58 = arith.constant dense<0.000000e+00> : vector<2x256xf32>
    %42 = tpu.matmul %39, %38, %cst_58 {dimension_numbers = #tpu.dot_dimension_numbers<[1], [0], [0], [1], [0, 0, 1, 1], [], []>} : vector<2x64xf32>, vector<64x256xf32>, vector<2x256xf32> -> vector<2x256xf32>
    %43 = arith.addf %41, %42 : vector<2x256xf32>
    %44 = vector.extract_strided_slice %43 {offsets = [0, 0], sizes = [2, 64], strides = [1, 1]} : vector<2x256xf32> to vector<2x64xf32>
    %45 = arith.negf %44 : vector<2x64xf32>
    %46 = math.exp %45 : vector<2x64xf32>
    %cst_59 = arith.constant 1.000000e+00 : f32
    %47 = vector.broadcast %cst_59 : f32 to vector<2x64xf32>
    %48 = arith.addf %47, %46 : vector<2x64xf32>
    %49 = arith.divf %47, %48 : vector<2x64xf32>
    %50 = vector.extract_strided_slice %43 {offsets = [0, 64], sizes = [2, 64], strides = [1, 1]} : vector<2x256xf32> to vector<2x64xf32>
    %51 = arith.negf %50 : vector<2x64xf32>
    %52 = math.exp %51 : vector<2x64xf32>
    %cst_60 = arith.constant 1.000000e+00 : f32
    %53 = vector.broadcast %cst_60 : f32 to vector<2x64xf32>
    %54 = arith.addf %53, %52 : vector<2x64xf32>
    %55 = arith.divf %53, %54 : vector<2x64xf32>
    %56 = vector.extract_strided_slice %43 {offsets = [0, 128], sizes = [2, 64], strides = [1, 1]} : vector<2x256xf32> to vector<2x64xf32>
    %57 = math.tanh %56 : vector<2x64xf32>
    %58 = vector.extract_strided_slice %43 {offsets = [0, 192], sizes = [2, 64], strides = [1, 1]} : vector<2x256xf32> to vector<2x64xf32>
    %59 = arith.negf %58 : vector<2x64xf32>
    %60 = math.exp %59 : vector<2x64xf32>
    %cst_61 = arith.constant 1.000000e+00 : f32
    %61 = vector.broadcast %cst_61 : f32 to vector<2x64xf32>
    %62 = arith.addf %61, %60 : vector<2x64xf32>
    %63 = arith.divf %61, %62 : vector<2x64xf32>
    %64 = arith.mulf %55, %40 : vector<2x64xf32>
    %65 = arith.mulf %49, %57 : vector<2x64xf32>
    %66 = arith.addf %64, %65 : vector<2x64xf32>
    %67 = math.tanh %66 : vector<2x64xf32>
    %68 = arith.mulf %63, %67 : vector<2x64xf32>
    %c0_62 = arith.constant 0 : index
    %c0_63 = arith.constant 0 : index
    %69 = vector.load %arg11[%c0_62, %c0_63] : memref<16x64xf32, #tpu.memory_space<vmem>>, vector<2x64xf32>
    tpu.vector_store %arg11[%c0_62, %c0_63], %68 {strides = array<i32>} : memref<16x64xf32, #tpu.memory_space<vmem>>, vector<2x64xf32>,
    %70 = vector.extract_strided_slice %37 {offsets = [2, 0], sizes = [2, 256], strides = [1, 1]} : vector<16x256xf32> to vector<2x256xf32>
    %cst_64 = arith.constant dense<0.000000e+00> : vector<2x256xf32>
    %71 = tpu.matmul %68, %38, %cst_64 {dimension_numbers = #tpu.dot_dimension_numbers<[1], [0], [0], [1], [0, 0, 1, 1], [], []>} : vector<2x64xf32>, vector<64x256xf32>, vector<2x256xf32> -> vector<2x256xf32>
    %72 = arith.addf %70, %71 : vector<2x256xf32>
    %73 = vector.extract_strided_slice %72 {offsets = [0, 0], sizes = [2, 64], strides = [1, 1]} : vector<2x256xf32> to vector<2x64xf32>
    %74 = arith.negf %73 : vector<2x64xf32>
    %75 = math.exp %74 : vector<2x64xf32>
    %cst_65 = arith.constant 1.000000e+00 : f32
    %76 = vector.broadcast %cst_65 : f32 to vector<2x64xf32>
    %77 = arith.addf %76, %75 : vector<2x64xf32>
    %78 = arith.divf %76, %77 : vector<2x64xf32>
    %79 = vector.extract_strided_slice %72 {offsets = [0, 64], sizes = [2, 64], strides = [1, 1]} : vector<2x256xf32> to vector<2x64xf32>
    %80 = arith.negf %79 : vector<2x64xf32>
    %81 = math.exp %80 : vector<2x64xf32>
    %cst_66 = arith.constant 1.000000e+00 : f32
    %82 = vector.broadcast %cst_66 : f32 to vector<2x64xf32>
    %83 = arith.addf %82, %81 : vector<2x64xf32>
    %84 = arith.divf %82, %83 : vector<2x64xf32>
    %85 = vector.extract_strided_slice %72 {offsets = [0, 128], sizes = [2, 64], strides = [1, 1]} : vector<2x256xf32> to vector<2x64xf32>
    %86 = math.tanh %85 : vector<2x64xf32>
    %87 = vector.extract_strided_slice %72 {offsets = [0, 192], sizes = [2, 64], strides = [1, 1]} : vector<2x256xf32> to vector<2x64xf32>
    %88 = arith.negf %87 : vector<2x64xf32>
    %89 = math.exp %88 : vector<2x64xf32>
    %cst_67 = arith.constant 1.000000e+00 : f32
    %90 = vector.broadcast %cst_67 : f32 to vector<2x64xf32>
    %91 = arith.addf %90, %89 : vector<2x64xf32>
    %92 = arith.divf %90, %91 : vector<2x64xf32>
    %93 = arith.mulf %84, %66 : vector<2x64xf32>
    %94 = arith.mulf %78, %86 : vector<2x64xf32>
    %95 = arith.addf %93, %94 : vector<2x64xf32>
    %96 = math.tanh %95 : vector<2x64xf32>
    %97 = arith.mulf %92, %96 : vector<2x64xf32>
    %c2_68 = arith.constant 2 : index
    %c0_69 = arith.constant 0 : index
    %98 = vector.load %arg11[%c2_68, %c0_69] : memref<16x64xf32, #tpu.memory_space<vmem>>, vector<2x64xf32>
    tpu.vector_store %arg11[%c2_68, %c0_69], %97 {strides = array<i32>} : memref<16x64xf32, #tpu.memory_space<vmem>>, vector<2x64xf32>,
    %99 = vector.extract_strided_slice %37 {offsets = [4, 0], sizes = [2, 256], strides = [1, 1]} : vector<16x256xf32> to vector<2x256xf32>
    %cst_70 = arith.constant dense<0.000000e+00> : vector<2x256xf32>
    %100 = tpu.matmul %97, %38, %cst_70 {dimension_numbers = #tpu.dot_dimension_numbers<[1], [0], [0], [1], [0, 0, 1, 1], [], []>} : vector<2x64xf32>, vector<64x256xf32>, vector<2x256xf32> -> vector<2x256xf32>
    %101 = arith.addf %99, %100 : vector<2x256xf32>
    %102 = vector.extract_strided_slice %101 {offsets = [0, 0], sizes = [2, 64], strides = [1, 1]} : vector<2x256xf32> to vector<2x64xf32>
    %103 = arith.negf %102 : vector<2x64xf32>
    %104 = math.exp %103 : vector<2x64xf32>
    %cst_71 = arith.constant 1.000000e+00 : f32
    %105 = vector.broadcast %cst_71 : f32 to vector<2x64xf32>
    %106 = arith.addf %105, %104 : vector<2x64xf32>
    %107 = arith.divf %105, %106 : vector<2x64xf32>
    %108 = vector.extract_strided_slice %101 {offsets = [0, 64], sizes = [2, 64], strides = [1, 1]} : vector<2x256xf32> to vector<2x64xf32>
    %109 = arith.negf %108 : vector<2x64xf32>
    %110 = math.exp %109 : vector<2x64xf32>
    %cst_72 = arith.constant 1.000000e+00 : f32
    %111 = vector.broadcast %cst_72 : f32 to vector<2x64xf32>
    %112 = arith.addf %111, %110 : vector<2x64xf32>
    %113 = arith.divf %111, %112 : vector<2x64xf32>
    %114 = vector.extract_strided_slice %101 {offsets = [0, 128], sizes = [2, 64], strides = [1, 1]} : vector<2x256xf32> to vector<2x64xf32>
    %115 = math.tanh %114 : vector<2x64xf32>
    %116 = vector.extract_strided_slice %101 {offsets = [0, 192], sizes = [2, 64], strides = [1, 1]} : vector<2x256xf32> to vector<2x64xf32>
    %117 = arith.negf %116 : vector<2x64xf32>
    %118 = math.exp %117 : vector<2x64xf32>
    %cst_73 = arith.constant 1.000000e+00 : f32
    %119 = vector.broadcast %cst_73 : f32 to vector<2x64xf32>
    %120 = arith.addf %119, %118 : vector<2x64xf32>
    %121 = arith.divf %119, %120 : vector<2x64xf32>
    %122 = arith.mulf %113, %95 : vector<2x64xf32>
    %123 = arith.mulf %107, %115 : vector<2x64xf32>
    %124 = arith.addf %122, %123 : vector<2x64xf32>
    %125 = math.tanh %124 : vector<2x64xf32>
    %126 = arith.mulf %121, %125 : vector<2x64xf32>
    %c4_74 = arith.constant 4 : index
    %c0_75 = arith.constant 0 : index
    %127 = vector.load %arg11[%c4_74, %c0_75] : memref<16x64xf32, #tpu.memory_space<vmem>>, vector<2x64xf32>
    tpu.vector_store %arg11[%c4_74, %c0_75], %126 {strides = array<i32>} : memref<16x64xf32, #tpu.memory_space<vmem>>, vector<2x64xf32>,
    %128 = vector.extract_strided_slice %37 {offsets = [6, 0], sizes = [2, 256], strides = [1, 1]} : vector<16x256xf32> to vector<2x256xf32>
    %cst_76 = arith.constant dense<0.000000e+00> : vector<2x256xf32>
    %129 = tpu.matmul %126, %38, %cst_76 {dimension_numbers = #tpu.dot_dimension_numbers<[1], [0], [0], [1], [0, 0, 1, 1], [], []>} : vector<2x64xf32>, vector<64x256xf32>, vector<2x256xf32> -> vector<2x256xf32>
    %130 = arith.addf %128, %129 : vector<2x256xf32>
    %131 = vector.extract_strided_slice %130 {offsets = [0, 0], sizes = [2, 64], strides = [1, 1]} : vector<2x256xf32> to vector<2x64xf32>
    %132 = arith.negf %131 : vector<2x64xf32>
    %133 = math.exp %132 : vector<2x64xf32>
    %cst_77 = arith.constant 1.000000e+00 : f32
    %134 = vector.broadcast %cst_77 : f32 to vector<2x64xf32>
    %135 = arith.addf %134, %133 : vector<2x64xf32>
    %136 = arith.divf %134, %135 : vector<2x64xf32>
    %137 = vector.extract_strided_slice %130 {offsets = [0, 64], sizes = [2, 64], strides = [1, 1]} : vector<2x256xf32> to vector<2x64xf32>
    %138 = arith.negf %137 : vector<2x64xf32>
    %139 = math.exp %138 : vector<2x64xf32>
    %cst_78 = arith.constant 1.000000e+00 : f32
    %140 = vector.broadcast %cst_78 : f32 to vector<2x64xf32>
    %141 = arith.addf %140, %139 : vector<2x64xf32>
    %142 = arith.divf %140, %141 : vector<2x64xf32>
    %143 = vector.extract_strided_slice %130 {offsets = [0, 128], sizes = [2, 64], strides = [1, 1]} : vector<2x256xf32> to vector<2x64xf32>
    %144 = math.tanh %143 : vector<2x64xf32>
    %145 = vector.extract_strided_slice %130 {offsets = [0, 192], sizes = [2, 64], strides = [1, 1]} : vector<2x256xf32> to vector<2x64xf32>
    %146 = arith.negf %145 : vector<2x64xf32>
    %147 = math.exp %146 : vector<2x64xf32>
    %cst_79 = arith.constant 1.000000e+00 : f32
    %148 = vector.broadcast %cst_79 : f32 to vector<2x64xf32>
    %149 = arith.addf %148, %147 : vector<2x64xf32>
    %150 = arith.divf %148, %149 : vector<2x64xf32>
    %151 = arith.mulf %142, %124 : vector<2x64xf32>
    %152 = arith.mulf %136, %144 : vector<2x64xf32>
    %153 = arith.addf %151, %152 : vector<2x64xf32>
    %154 = math.tanh %153 : vector<2x64xf32>
    %155 = arith.mulf %150, %154 : vector<2x64xf32>
    %c6_80 = arith.constant 6 : index
    %c0_81 = arith.constant 0 : index
    %156 = vector.load %arg11[%c6_80, %c0_81] : memref<16x64xf32, #tpu.memory_space<vmem>>, vector<2x64xf32>
    tpu.vector_store %arg11[%c6_80, %c0_81], %155 {strides = array<i32>} : memref<16x64xf32, #tpu.memory_space<vmem>>, vector<2x64xf32>,
    %157 = vector.extract_strided_slice %37 {offsets = [8, 0], sizes = [2, 256], strides = [1, 1]} : vector<16x256xf32> to vector<2x256xf32>
    %cst_82 = arith.constant dense<0.000000e+00> : vector<2x256xf32>
    %158 = tpu.matmul %155, %38, %cst_82 {dimension_numbers = #tpu.dot_dimension_numbers<[1], [0], [0], [1], [0, 0, 1, 1], [], []>} : vector<2x64xf32>, vector<64x256xf32>, vector<2x256xf32> -> vector<2x256xf32>
    %159 = arith.addf %157, %158 : vector<2x256xf32>
    %160 = vector.extract_strided_slice %159 {offsets = [0, 0], sizes = [2, 64], strides = [1, 1]} : vector<2x256xf32> to vector<2x64xf32>
    %161 = arith.negf %160 : vector<2x64xf32>
    %162 = math.exp %161 : vector<2x64xf32>
    %cst_83 = arith.constant 1.000000e+00 : f32
    %163 = vector.broadcast %cst_83 : f32 to vector<2x64xf32>
    %164 = arith.addf %163, %162 : vector<2x64xf32>
    %165 = arith.divf %163, %164 : vector<2x64xf32>
    %166 = vector.extract_strided_slice %159 {offsets = [0, 64], sizes = [2, 64], strides = [1, 1]} : vector<2x256xf32> to vector<2x64xf32>
    %167 = arith.negf %166 : vector<2x64xf32>
    %168 = math.exp %167 : vector<2x64xf32>
    %cst_84 = arith.constant 1.000000e+00 : f32
    %169 = vector.broadcast %cst_84 : f32 to vector<2x64xf32>
    %170 = arith.addf %169, %168 : vector<2x64xf32>
    %171 = arith.divf %169, %170 : vector<2x64xf32>
    %172 = vector.extract_strided_slice %159 {offsets = [0, 128], sizes = [2, 64], strides = [1, 1]} : vector<2x256xf32> to vector<2x64xf32>
    %173 = math.tanh %172 : vector<2x64xf32>
    %174 = vector.extract_strided_slice %159 {offsets = [0, 192], sizes = [2, 64], strides = [1, 1]} : vector<2x256xf32> to vector<2x64xf32>
    %175 = arith.negf %174 : vector<2x64xf32>
    %176 = math.exp %175 : vector<2x64xf32>
    %cst_85 = arith.constant 1.000000e+00 : f32
    %177 = vector.broadcast %cst_85 : f32 to vector<2x64xf32>
    %178 = arith.addf %177, %176 : vector<2x64xf32>
    %179 = arith.divf %177, %178 : vector<2x64xf32>
    %180 = arith.mulf %171, %153 : vector<2x64xf32>
    %181 = arith.mulf %165, %173 : vector<2x64xf32>
    %182 = arith.addf %180, %181 : vector<2x64xf32>
    %183 = math.tanh %182 : vector<2x64xf32>
    %184 = arith.mulf %179, %183 : vector<2x64xf32>
    %c8_86 = arith.constant 8 : index
    %c0_87 = arith.constant 0 : index
    %185 = vector.load %arg11[%c8_86, %c0_87] : memref<16x64xf32, #tpu.memory_space<vmem>>, vector<2x64xf32>
    tpu.vector_store %arg11[%c8_86, %c0_87], %184 {strides = array<i32>} : memref<16x64xf32, #tpu.memory_space<vmem>>, vector<2x64xf32>,
    %186 = vector.extract_strided_slice %37 {offsets = [10, 0], sizes = [2, 256], strides = [1, 1]} : vector<16x256xf32> to vector<2x256xf32>
    %cst_88 = arith.constant dense<0.000000e+00> : vector<2x256xf32>
    %187 = tpu.matmul %184, %38, %cst_88 {dimension_numbers = #tpu.dot_dimension_numbers<[1], [0], [0], [1], [0, 0, 1, 1], [], []>} : vector<2x64xf32>, vector<64x256xf32>, vector<2x256xf32> -> vector<2x256xf32>
    %188 = arith.addf %186, %187 : vector<2x256xf32>
    %189 = vector.extract_strided_slice %188 {offsets = [0, 0], sizes = [2, 64], strides = [1, 1]} : vector<2x256xf32> to vector<2x64xf32>
    %190 = arith.negf %189 : vector<2x64xf32>
    %191 = math.exp %190 : vector<2x64xf32>
    %cst_89 = arith.constant 1.000000e+00 : f32
    %192 = vector.broadcast %cst_89 : f32 to vector<2x64xf32>
    %193 = arith.addf %192, %191 : vector<2x64xf32>
    %194 = arith.divf %192, %193 : vector<2x64xf32>
    %195 = vector.extract_strided_slice %188 {offsets = [0, 64], sizes = [2, 64], strides = [1, 1]} : vector<2x256xf32> to vector<2x64xf32>
    %196 = arith.negf %195 : vector<2x64xf32>
    %197 = math.exp %196 : vector<2x64xf32>
    %cst_90 = arith.constant 1.000000e+00 : f32
    %198 = vector.broadcast %cst_90 : f32 to vector<2x64xf32>
    %199 = arith.addf %198, %197 : vector<2x64xf32>
    %200 = arith.divf %198, %199 : vector<2x64xf32>
    %201 = vector.extract_strided_slice %188 {offsets = [0, 128], sizes = [2, 64], strides = [1, 1]} : vector<2x256xf32> to vector<2x64xf32>
    %202 = math.tanh %201 : vector<2x64xf32>
    %203 = vector.extract_strided_slice %188 {offsets = [0, 192], sizes = [2, 64], strides = [1, 1]} : vector<2x256xf32> to vector<2x64xf32>
    %204 = arith.negf %203 : vector<2x64xf32>
    %205 = math.exp %204 : vector<2x64xf32>
    %cst_91 = arith.constant 1.000000e+00 : f32
    %206 = vector.broadcast %cst_91 : f32 to vector<2x64xf32>
    %207 = arith.addf %206, %205 : vector<2x64xf32>
    %208 = arith.divf %206, %207 : vector<2x64xf32>
    %209 = arith.mulf %200, %182 : vector<2x64xf32>
    %210 = arith.mulf %194, %202 : vector<2x64xf32>
    %211 = arith.addf %209, %210 : vector<2x64xf32>
    %212 = math.tanh %211 : vector<2x64xf32>
    %213 = arith.mulf %208, %212 : vector<2x64xf32>
    %c10_92 = arith.constant 10 : index
    %c0_93 = arith.constant 0 : index
    %214 = vector.load %arg11[%c10_92, %c0_93] : memref<16x64xf32, #tpu.memory_space<vmem>>, vector<2x64xf32>
    tpu.vector_store %arg11[%c10_92, %c0_93], %213 {strides = array<i32>} : memref<16x64xf32, #tpu.memory_space<vmem>>, vector<2x64xf32>,
    %215 = vector.extract_strided_slice %37 {offsets = [12, 0], sizes = [2, 256], strides = [1, 1]} : vector<16x256xf32> to vector<2x256xf32>
    %cst_94 = arith.constant dense<0.000000e+00> : vector<2x256xf32>
    %216 = tpu.matmul %213, %38, %cst_94 {dimension_numbers = #tpu.dot_dimension_numbers<[1], [0], [0], [1], [0, 0, 1, 1], [], []>} : vector<2x64xf32>, vector<64x256xf32>, vector<2x256xf32> -> vector<2x256xf32>
    %217 = arith.addf %215, %216 : vector<2x256xf32>
    %218 = vector.extract_strided_slice %217 {offsets = [0, 0], sizes = [2, 64], strides = [1, 1]} : vector<2x256xf32> to vector<2x64xf32>
    %219 = arith.negf %218 : vector<2x64xf32>
    %220 = math.exp %219 : vector<2x64xf32>
    %cst_95 = arith.constant 1.000000e+00 : f32
    %221 = vector.broadcast %cst_95 : f32 to vector<2x64xf32>
    %222 = arith.addf %221, %220 : vector<2x64xf32>
    %223 = arith.divf %221, %222 : vector<2x64xf32>
    %224 = vector.extract_strided_slice %217 {offsets = [0, 64], sizes = [2, 64], strides = [1, 1]} : vector<2x256xf32> to vector<2x64xf32>
    %225 = arith.negf %224 : vector<2x64xf32>
    %226 = math.exp %225 : vector<2x64xf32>
    %cst_96 = arith.constant 1.000000e+00 : f32
    %227 = vector.broadcast %cst_96 : f32 to vector<2x64xf32>
    %228 = arith.addf %227, %226 : vector<2x64xf32>
    %229 = arith.divf %227, %228 : vector<2x64xf32>
    %230 = vector.extract_strided_slice %217 {offsets = [0, 128], sizes = [2, 64], strides = [1, 1]} : vector<2x256xf32> to vector<2x64xf32>
    %231 = math.tanh %230 : vector<2x64xf32>
    %232 = vector.extract_strided_slice %217 {offsets = [0, 192], sizes = [2, 64], strides = [1, 1]} : vector<2x256xf32> to vector<2x64xf32>
    %233 = arith.negf %232 : vector<2x64xf32>
    %234 = math.exp %233 : vector<2x64xf32>
    %cst_97 = arith.constant 1.000000e+00 : f32
    %235 = vector.broadcast %cst_97 : f32 to vector<2x64xf32>
    %236 = arith.addf %235, %234 : vector<2x64xf32>
    %237 = arith.divf %235, %236 : vector<2x64xf32>
    %238 = arith.mulf %229, %211 : vector<2x64xf32>
    %239 = arith.mulf %223, %231 : vector<2x64xf32>
    %240 = arith.addf %238, %239 : vector<2x64xf32>
    %241 = math.tanh %240 : vector<2x64xf32>
    %242 = arith.mulf %237, %241 : vector<2x64xf32>
    %c12_98 = arith.constant 12 : index
    %c0_99 = arith.constant 0 : index
    %243 = vector.load %arg11[%c12_98, %c0_99] : memref<16x64xf32, #tpu.memory_space<vmem>>, vector<2x64xf32>
    tpu.vector_store %arg11[%c12_98, %c0_99], %242 {strides = array<i32>} : memref<16x64xf32, #tpu.memory_space<vmem>>, vector<2x64xf32>,
    %244 = vector.extract_strided_slice %37 {offsets = [14, 0], sizes = [2, 256], strides = [1, 1]} : vector<16x256xf32> to vector<2x256xf32>
    %cst_100 = arith.constant dense<0.000000e+00> : vector<2x256xf32>
    %245 = tpu.matmul %242, %38, %cst_100 {dimension_numbers = #tpu.dot_dimension_numbers<[1], [0], [0], [1], [0, 0, 1, 1], [], []>} : vector<2x64xf32>, vector<64x256xf32>, vector<2x256xf32> -> vector<2x256xf32>
    %246 = arith.addf %244, %245 : vector<2x256xf32>
    %247 = vector.extract_strided_slice %246 {offsets = [0, 0], sizes = [2, 64], strides = [1, 1]} : vector<2x256xf32> to vector<2x64xf32>
    %248 = arith.negf %247 : vector<2x64xf32>
    %249 = math.exp %248 : vector<2x64xf32>
    %cst_101 = arith.constant 1.000000e+00 : f32
    %250 = vector.broadcast %cst_101 : f32 to vector<2x64xf32>
    %251 = arith.addf %250, %249 : vector<2x64xf32>
    %252 = arith.divf %250, %251 : vector<2x64xf32>
    %253 = vector.extract_strided_slice %246 {offsets = [0, 64], sizes = [2, 64], strides = [1, 1]} : vector<2x256xf32> to vector<2x64xf32>
    %254 = arith.negf %253 : vector<2x64xf32>
    %255 = math.exp %254 : vector<2x64xf32>
    %cst_102 = arith.constant 1.000000e+00 : f32
    %256 = vector.broadcast %cst_102 : f32 to vector<2x64xf32>
    %257 = arith.addf %256, %255 : vector<2x64xf32>
    %258 = arith.divf %256, %257 : vector<2x64xf32>
    %259 = vector.extract_strided_slice %246 {offsets = [0, 128], sizes = [2, 64], strides = [1, 1]} : vector<2x256xf32> to vector<2x64xf32>
    %260 = math.tanh %259 : vector<2x64xf32>
    %261 = vector.extract_strided_slice %246 {offsets = [0, 192], sizes = [2, 64], strides = [1, 1]} : vector<2x256xf32> to vector<2x64xf32>
    %262 = arith.negf %261 : vector<2x64xf32>
    %263 = math.exp %262 : vector<2x64xf32>
    %cst_103 = arith.constant 1.000000e+00 : f32
    %264 = vector.broadcast %cst_103 : f32 to vector<2x64xf32>
    %265 = arith.addf %264, %263 : vector<2x64xf32>
    %266 = arith.divf %264, %265 : vector<2x64xf32>
    %267 = arith.mulf %258, %240 : vector<2x64xf32>
    %268 = arith.mulf %252, %260 : vector<2x64xf32>
    %269 = arith.addf %267, %268 : vector<2x64xf32>
    %270 = math.tanh %269 : vector<2x64xf32>
    %271 = arith.mulf %266, %270 : vector<2x64xf32>
    %c14_104 = arith.constant 14 : index
    %c0_105 = arith.constant 0 : index
    %272 = vector.load %arg11[%c14_104, %c0_105] : memref<16x64xf32, #tpu.memory_space<vmem>>, vector<2x64xf32>
    tpu.vector_store %arg11[%c14_104, %c0_105], %271 {strides = array<i32>} : memref<16x64xf32, #tpu.memory_space<vmem>>, vector<2x64xf32>,
    %c0_106 = arith.constant 0 : index
    %c0_107 = arith.constant 0 : index
    %273 = vector.load %arg11[%c0_106, %c0_107] : memref<16x64xf32, #tpu.memory_space<vmem>>, vector<16x64xf32>
    %c0_108 = arith.constant 0 : index
    %c0_109 = arith.constant 0 : index
    %274 = vector.load %arg4[%c0_108, %c0_109] : memref<64x256xf32, #tpu.memory_space<vmem>>, vector<64x256xf32>
    %cst_110 = arith.constant dense<0.000000e+00> : vector<16x256xf32>
    %275 = tpu.matmul %273, %274, %cst_110 {dimension_numbers = #tpu.dot_dimension_numbers<[1], [0], [0], [1], [0, 0, 1, 1], [], []>} : vector<16x64xf32>, vector<64x256xf32>, vector<16x256xf32> -> vector<16x256xf32>
    %c0_111 = arith.constant 0 : index
    %c0_112 = arith.constant 0 : index
    %276 = vector.load %arg6[%c0_111, %c0_112] : memref<1x256xf32, #tpu.memory_space<vmem>>, vector<1x256xf32>
    %277 = vector.broadcast %276 : vector<1x256xf32> to vector<16x256xf32>
    %278 = arith.addf %275, %277 : vector<16x256xf32>
    %c0_113 = arith.constant 0 : index
    %c0_114 = arith.constant 0 : index
    %279 = vector.load %arg5[%c0_113, %c0_114] : memref<64x256xf32, #tpu.memory_space<vmem>>, vector<64x256xf32>
    %cst_115 = arith.constant 0.000000e+00 : f32
    %280 = vector.broadcast %cst_115 : f32 to vector<2x64xf32>
    %cst_116 = arith.constant 0.000000e+00 : f32
    %281 = vector.broadcast %cst_116 : f32 to vector<2x64xf32>
    %282 = vector.extract_strided_slice %278 {offsets = [0, 0], sizes = [2, 256], strides = [1, 1]} : vector<16x256xf32> to vector<2x256xf32>
    %cst_117 = arith.constant dense<0.000000e+00> : vector<2x256xf32>
    %283 = tpu.matmul %280, %279, %cst_117 {dimension_numbers = #tpu.dot_dimension_numbers<[1], [0], [0], [1], [0, 0, 1, 1], [], []>} : vector<2x64xf32>, vector<64x256xf32>, vector<2x256xf32> -> vector<2x256xf32>
    %284 = arith.addf %282, %283 : vector<2x256xf32>
    %285 = vector.extract_strided_slice %284 {offsets = [0, 0], sizes = [2, 64], strides = [1, 1]} : vector<2x256xf32> to vector<2x64xf32>
    %286 = arith.negf %285 : vector<2x64xf32>
    %287 = math.exp %286 : vector<2x64xf32>
    %cst_118 = arith.constant 1.000000e+00 : f32
    %288 = vector.broadcast %cst_118 : f32 to vector<2x64xf32>
    %289 = arith.addf %288, %287 : vector<2x64xf32>
    %290 = arith.divf %288, %289 : vector<2x64xf32>
    %291 = vector.extract_strided_slice %284 {offsets = [0, 64], sizes = [2, 64], strides = [1, 1]} : vector<2x256xf32> to vector<2x64xf32>
    %292 = arith.negf %291 : vector<2x64xf32>
    %293 = math.exp %292 : vector<2x64xf32>
    %cst_119 = arith.constant 1.000000e+00 : f32
    %294 = vector.broadcast %cst_119 : f32 to vector<2x64xf32>
    %295 = arith.addf %294, %293 : vector<2x64xf32>
    %296 = arith.divf %294, %295 : vector<2x64xf32>
    %297 = vector.extract_strided_slice %284 {offsets = [0, 128], sizes = [2, 64], strides = [1, 1]} : vector<2x256xf32> to vector<2x64xf32>
    %298 = math.tanh %297 : vector<2x64xf32>
    %299 = vector.extract_strided_slice %284 {offsets = [0, 192], sizes = [2, 64], strides = [1, 1]} : vector<2x256xf32> to vector<2x64xf32>
    %300 = arith.negf %299 : vector<2x64xf32>
    %301 = math.exp %300 : vector<2x64xf32>
    %cst_120 = arith.constant 1.000000e+00 : f32
    %302 = vector.broadcast %cst_120 : f32 to vector<2x64xf32>
    %303 = arith.addf %302, %301 : vector<2x64xf32>
    %304 = arith.divf %302, %303 : vector<2x64xf32>
    %305 = arith.mulf %296, %281 : vector<2x64xf32>
    %306 = arith.mulf %290, %298 : vector<2x64xf32>
    %307 = arith.addf %305, %306 : vector<2x64xf32>
    %308 = math.tanh %307 : vector<2x64xf32>
    %309 = arith.mulf %304, %308 : vector<2x64xf32>
    %310 = vector.extract_strided_slice %309 {offsets = [0, 0], sizes = [1, 64], strides = [1, 1]} : vector<2x64xf32> to vector<1x64xf32>
    %c0_121 = arith.constant 0 : index
    %c0_122 = arith.constant 0 : index
    %311 = vector.load %arg11[%c0_121, %c0_122] : memref<16x64xf32, #tpu.memory_space<vmem>>, vector<1x64xf32>
    tpu.vector_store %arg11[%c0_121, %c0_122], %310 {strides = array<i32>} : memref<16x64xf32, #tpu.memory_space<vmem>>, vector<1x64xf32>,
    %312 = vector.extract_strided_slice %309 {offsets = [1, 0], sizes = [1, 64], strides = [1, 1]} : vector<2x64xf32> to vector<1x64xf32>
    %c8_123 = arith.constant 8 : index
    %c0_124 = arith.constant 0 : index
    %313 = vector.load %arg11[%c8_123, %c0_124] : memref<16x64xf32, #tpu.memory_space<vmem>>, vector<1x64xf32>
    tpu.vector_store %arg11[%c8_123, %c0_124], %312 {strides = array<i32>} : memref<16x64xf32, #tpu.memory_space<vmem>>, vector<1x64xf32>,
    %314 = vector.extract_strided_slice %278 {offsets = [2, 0], sizes = [2, 256], strides = [1, 1]} : vector<16x256xf32> to vector<2x256xf32>
    %cst_125 = arith.constant dense<0.000000e+00> : vector<2x256xf32>
    %315 = tpu.matmul %309, %279, %cst_125 {dimension_numbers = #tpu.dot_dimension_numbers<[1], [0], [0], [1], [0, 0, 1, 1], [], []>} : vector<2x64xf32>, vector<64x256xf32>, vector<2x256xf32> -> vector<2x256xf32>
    %316 = arith.addf %314, %315 : vector<2x256xf32>
    %317 = vector.extract_strided_slice %316 {offsets = [0, 0], sizes = [2, 64], strides = [1, 1]} : vector<2x256xf32> to vector<2x64xf32>
    %318 = arith.negf %317 : vector<2x64xf32>
    %319 = math.exp %318 : vector<2x64xf32>
    %cst_126 = arith.constant 1.000000e+00 : f32
    %320 = vector.broadcast %cst_126 : f32 to vector<2x64xf32>
    %321 = arith.addf %320, %319 : vector<2x64xf32>
    %322 = arith.divf %320, %321 : vector<2x64xf32>
    %323 = vector.extract_strided_slice %316 {offsets = [0, 64], sizes = [2, 64], strides = [1, 1]} : vector<2x256xf32> to vector<2x64xf32>
    %324 = arith.negf %323 : vector<2x64xf32>
    %325 = math.exp %324 : vector<2x64xf32>
    %cst_127 = arith.constant 1.000000e+00 : f32
    %326 = vector.broadcast %cst_127 : f32 to vector<2x64xf32>
    %327 = arith.addf %326, %325 : vector<2x64xf32>
    %328 = arith.divf %326, %327 : vector<2x64xf32>
    %329 = vector.extract_strided_slice %316 {offsets = [0, 128], sizes = [2, 64], strides = [1, 1]} : vector<2x256xf32> to vector<2x64xf32>
    %330 = math.tanh %329 : vector<2x64xf32>
    %331 = vector.extract_strided_slice %316 {offsets = [0, 192], sizes = [2, 64], strides = [1, 1]} : vector<2x256xf32> to vector<2x64xf32>
    %332 = arith.negf %331 : vector<2x64xf32>
    %333 = math.exp %332 : vector<2x64xf32>
    %cst_128 = arith.constant 1.000000e+00 : f32
    %334 = vector.broadcast %cst_128 : f32 to vector<2x64xf32>
    %335 = arith.addf %334, %333 : vector<2x64xf32>
    %336 = arith.divf %334, %335 : vector<2x64xf32>
    %337 = arith.mulf %328, %307 : vector<2x64xf32>
    %338 = arith.mulf %322, %330 : vector<2x64xf32>
    %339 = arith.addf %337, %338 : vector<2x64xf32>
    %340 = math.tanh %339 : vector<2x64xf32>
    %341 = arith.mulf %336, %340 : vector<2x64xf32>
    %342 = vector.extract_strided_slice %341 {offsets = [0, 0], sizes = [1, 64], strides = [1, 1]} : vector<2x64xf32> to vector<1x64xf32>
    %c1_129 = arith.constant 1 : index
    %c0_130 = arith.constant 0 : index
    %343 = vector.load %arg11[%c1_129, %c0_130] : memref<16x64xf32, #tpu.memory_space<vmem>>, vector<1x64xf32>
    tpu.vector_store %arg11[%c1_129, %c0_130], %342 {strides = array<i32>} : memref<16x64xf32, #tpu.memory_space<vmem>>, vector<1x64xf32>,
    %344 = vector.extract_strided_slice %341 {offsets = [1, 0], sizes = [1, 64], strides = [1, 1]} : vector<2x64xf32> to vector<1x64xf32>
    %c9_131 = arith.constant 9 : index
    %c0_132 = arith.constant 0 : index
    %345 = vector.load %arg11[%c9_131, %c0_132] : memref<16x64xf32, #tpu.memory_space<vmem>>, vector<1x64xf32>
    tpu.vector_store %arg11[%c9_131, %c0_132], %344 {strides = array<i32>} : memref<16x64xf32, #tpu.memory_space<vmem>>, vector<1x64xf32>,
    %346 = vector.extract_strided_slice %278 {offsets = [4, 0], sizes = [2, 256], strides = [1, 1]} : vector<16x256xf32> to vector<2x256xf32>
    %cst_133 = arith.constant dense<0.000000e+00> : vector<2x256xf32>
    %347 = tpu.matmul %341, %279, %cst_133 {dimension_numbers = #tpu.dot_dimension_numbers<[1], [0], [0], [1], [0, 0, 1, 1], [], []>} : vector<2x64xf32>, vector<64x256xf32>, vector<2x256xf32> -> vector<2x256xf32>
    %348 = arith.addf %346, %347 : vector<2x256xf32>
    %349 = vector.extract_strided_slice %348 {offsets = [0, 0], sizes = [2, 64], strides = [1, 1]} : vector<2x256xf32> to vector<2x64xf32>
    %350 = arith.negf %349 : vector<2x64xf32>
    %351 = math.exp %350 : vector<2x64xf32>
    %cst_134 = arith.constant 1.000000e+00 : f32
    %352 = vector.broadcast %cst_134 : f32 to vector<2x64xf32>
    %353 = arith.addf %352, %351 : vector<2x64xf32>
    %354 = arith.divf %352, %353 : vector<2x64xf32>
    %355 = vector.extract_strided_slice %348 {offsets = [0, 64], sizes = [2, 64], strides = [1, 1]} : vector<2x256xf32> to vector<2x64xf32>
    %356 = arith.negf %355 : vector<2x64xf32>
    %357 = math.exp %356 : vector<2x64xf32>
    %cst_135 = arith.constant 1.000000e+00 : f32
    %358 = vector.broadcast %cst_135 : f32 to vector<2x64xf32>
    %359 = arith.addf %358, %357 : vector<2x64xf32>
    %360 = arith.divf %358, %359 : vector<2x64xf32>
    %361 = vector.extract_strided_slice %348 {offsets = [0, 128], sizes = [2, 64], strides = [1, 1]} : vector<2x256xf32> to vector<2x64xf32>
    %362 = math.tanh %361 : vector<2x64xf32>
    %363 = vector.extract_strided_slice %348 {offsets = [0, 192], sizes = [2, 64], strides = [1, 1]} : vector<2x256xf32> to vector<2x64xf32>
    %364 = arith.negf %363 : vector<2x64xf32>
    %365 = math.exp %364 : vector<2x64xf32>
    %cst_136 = arith.constant 1.000000e+00 : f32
    %366 = vector.broadcast %cst_136 : f32 to vector<2x64xf32>
    %367 = arith.addf %366, %365 : vector<2x64xf32>
    %368 = arith.divf %366, %367 : vector<2x64xf32>
    %369 = arith.mulf %360, %339 : vector<2x64xf32>
    %370 = arith.mulf %354, %362 : vector<2x64xf32>
    %371 = arith.addf %369, %370 : vector<2x64xf32>
    %372 = math.tanh %371 : vector<2x64xf32>
    %373 = arith.mulf %368, %372 : vector<2x64xf32>
    %374 = vector.extract_strided_slice %373 {offsets = [0, 0], sizes = [1, 64], strides = [1, 1]} : vector<2x64xf32> to vector<1x64xf32>
    %c2_137 = arith.constant 2 : index
    %c0_138 = arith.constant 0 : index
    %375 = vector.load %arg11[%c2_137, %c0_138] : memref<16x64xf32, #tpu.memory_space<vmem>>, vector<1x64xf32>
    tpu.vector_store %arg11[%c2_137, %c0_138], %374 {strides = array<i32>} : memref<16x64xf32, #tpu.memory_space<vmem>>, vector<1x64xf32>,
    %376 = vector.extract_strided_slice %373 {offsets = [1, 0], sizes = [1, 64], strides = [1, 1]} : vector<2x64xf32> to vector<1x64xf32>
    %c10_139 = arith.constant 10 : index
    %c0_140 = arith.constant 0 : index
    %377 = vector.load %arg11[%c10_139, %c0_140] : memref<16x64xf32, #tpu.memory_space<vmem>>, vector<1x64xf32>
    tpu.vector_store %arg11[%c10_139, %c0_140], %376 {strides = array<i32>} : memref<16x64xf32, #tpu.memory_space<vmem>>, vector<1x64xf32>,
    %378 = vector.extract_strided_slice %278 {offsets = [6, 0], sizes = [2, 256], strides = [1, 1]} : vector<16x256xf32> to vector<2x256xf32>
    %cst_141 = arith.constant dense<0.000000e+00> : vector<2x256xf32>
    %379 = tpu.matmul %373, %279, %cst_141 {dimension_numbers = #tpu.dot_dimension_numbers<[1], [0], [0], [1], [0, 0, 1, 1], [], []>} : vector<2x64xf32>, vector<64x256xf32>, vector<2x256xf32> -> vector<2x256xf32>
    %380 = arith.addf %378, %379 : vector<2x256xf32>
    %381 = vector.extract_strided_slice %380 {offsets = [0, 0], sizes = [2, 64], strides = [1, 1]} : vector<2x256xf32> to vector<2x64xf32>
    %382 = arith.negf %381 : vector<2x64xf32>
    %383 = math.exp %382 : vector<2x64xf32>
    %cst_142 = arith.constant 1.000000e+00 : f32
    %384 = vector.broadcast %cst_142 : f32 to vector<2x64xf32>
    %385 = arith.addf %384, %383 : vector<2x64xf32>
    %386 = arith.divf %384, %385 : vector<2x64xf32>
    %387 = vector.extract_strided_slice %380 {offsets = [0, 64], sizes = [2, 64], strides = [1, 1]} : vector<2x256xf32> to vector<2x64xf32>
    %388 = arith.negf %387 : vector<2x64xf32>
    %389 = math.exp %388 : vector<2x64xf32>
    %cst_143 = arith.constant 1.000000e+00 : f32
    %390 = vector.broadcast %cst_143 : f32 to vector<2x64xf32>
    %391 = arith.addf %390, %389 : vector<2x64xf32>
    %392 = arith.divf %390, %391 : vector<2x64xf32>
    %393 = vector.extract_strided_slice %380 {offsets = [0, 128], sizes = [2, 64], strides = [1, 1]} : vector<2x256xf32> to vector<2x64xf32>
    %394 = math.tanh %393 : vector<2x64xf32>
    %395 = vector.extract_strided_slice %380 {offsets = [0, 192], sizes = [2, 64], strides = [1, 1]} : vector<2x256xf32> to vector<2x64xf32>
    %396 = arith.negf %395 : vector<2x64xf32>
    %397 = math.exp %396 : vector<2x64xf32>
    %cst_144 = arith.constant 1.000000e+00 : f32
    %398 = vector.broadcast %cst_144 : f32 to vector<2x64xf32>
    %399 = arith.addf %398, %397 : vector<2x64xf32>
    %400 = arith.divf %398, %399 : vector<2x64xf32>
    %401 = arith.mulf %392, %371 : vector<2x64xf32>
    %402 = arith.mulf %386, %394 : vector<2x64xf32>
    %403 = arith.addf %401, %402 : vector<2x64xf32>
    %404 = math.tanh %403 : vector<2x64xf32>
    %405 = arith.mulf %400, %404 : vector<2x64xf32>
    %406 = vector.extract_strided_slice %405 {offsets = [0, 0], sizes = [1, 64], strides = [1, 1]} : vector<2x64xf32> to vector<1x64xf32>
    %c3_145 = arith.constant 3 : index
    %c0_146 = arith.constant 0 : index
    %407 = vector.load %arg11[%c3_145, %c0_146] : memref<16x64xf32, #tpu.memory_space<vmem>>, vector<1x64xf32>
    tpu.vector_store %arg11[%c3_145, %c0_146], %406 {strides = array<i32>} : memref<16x64xf32, #tpu.memory_space<vmem>>, vector<1x64xf32>,
    %408 = vector.extract_strided_slice %405 {offsets = [1, 0], sizes = [1, 64], strides = [1, 1]} : vector<2x64xf32> to vector<1x64xf32>
    %c11_147 = arith.constant 11 : index
    %c0_148 = arith.constant 0 : index
    %409 = vector.load %arg11[%c11_147, %c0_148] : memref<16x64xf32, #tpu.memory_space<vmem>>, vector<1x64xf32>
    tpu.vector_store %arg11[%c11_147, %c0_148], %408 {strides = array<i32>} : memref<16x64xf32, #tpu.memory_space<vmem>>, vector<1x64xf32>,
    %410 = vector.extract_strided_slice %278 {offsets = [8, 0], sizes = [2, 256], strides = [1, 1]} : vector<16x256xf32> to vector<2x256xf32>
    %cst_149 = arith.constant dense<0.000000e+00> : vector<2x256xf32>
    %411 = tpu.matmul %405, %279, %cst_149 {dimension_numbers = #tpu.dot_dimension_numbers<[1], [0], [0], [1], [0, 0, 1, 1], [], []>} : vector<2x64xf32>, vector<64x256xf32>, vector<2x256xf32> -> vector<2x256xf32>
    %412 = arith.addf %410, %411 : vector<2x256xf32>
    %413 = vector.extract_strided_slice %412 {offsets = [0, 0], sizes = [2, 64], strides = [1, 1]} : vector<2x256xf32> to vector<2x64xf32>
    %414 = arith.negf %413 : vector<2x64xf32>
    %415 = math.exp %414 : vector<2x64xf32>
    %cst_150 = arith.constant 1.000000e+00 : f32
    %416 = vector.broadcast %cst_150 : f32 to vector<2x64xf32>
    %417 = arith.addf %416, %415 : vector<2x64xf32>
    %418 = arith.divf %416, %417 : vector<2x64xf32>
    %419 = vector.extract_strided_slice %412 {offsets = [0, 64], sizes = [2, 64], strides = [1, 1]} : vector<2x256xf32> to vector<2x64xf32>
    %420 = arith.negf %419 : vector<2x64xf32>
    %421 = math.exp %420 : vector<2x64xf32>
    %cst_151 = arith.constant 1.000000e+00 : f32
    %422 = vector.broadcast %cst_151 : f32 to vector<2x64xf32>
    %423 = arith.addf %422, %421 : vector<2x64xf32>
    %424 = arith.divf %422, %423 : vector<2x64xf32>
    %425 = vector.extract_strided_slice %412 {offsets = [0, 128], sizes = [2, 64], strides = [1, 1]} : vector<2x256xf32> to vector<2x64xf32>
    %426 = math.tanh %425 : vector<2x64xf32>
    %427 = vector.extract_strided_slice %412 {offsets = [0, 192], sizes = [2, 64], strides = [1, 1]} : vector<2x256xf32> to vector<2x64xf32>
    %428 = arith.negf %427 : vector<2x64xf32>
    %429 = math.exp %428 : vector<2x64xf32>
    %cst_152 = arith.constant 1.000000e+00 : f32
    %430 = vector.broadcast %cst_152 : f32 to vector<2x64xf32>
    %431 = arith.addf %430, %429 : vector<2x64xf32>
    %432 = arith.divf %430, %431 : vector<2x64xf32>
    %433 = arith.mulf %424, %403 : vector<2x64xf32>
    %434 = arith.mulf %418, %426 : vector<2x64xf32>
    %435 = arith.addf %433, %434 : vector<2x64xf32>
    %436 = math.tanh %435 : vector<2x64xf32>
    %437 = arith.mulf %432, %436 : vector<2x64xf32>
    %438 = vector.extract_strided_slice %437 {offsets = [0, 0], sizes = [1, 64], strides = [1, 1]} : vector<2x64xf32> to vector<1x64xf32>
    %c4_153 = arith.constant 4 : index
    %c0_154 = arith.constant 0 : index
    %439 = vector.load %arg11[%c4_153, %c0_154] : memref<16x64xf32, #tpu.memory_space<vmem>>, vector<1x64xf32>
    tpu.vector_store %arg11[%c4_153, %c0_154], %438 {strides = array<i32>} : memref<16x64xf32, #tpu.memory_space<vmem>>, vector<1x64xf32>,
    %440 = vector.extract_strided_slice %437 {offsets = [1, 0], sizes = [1, 64], strides = [1, 1]} : vector<2x64xf32> to vector<1x64xf32>
    %c12_155 = arith.constant 12 : index
    %c0_156 = arith.constant 0 : index
    %441 = vector.load %arg11[%c12_155, %c0_156] : memref<16x64xf32, #tpu.memory_space<vmem>>, vector<1x64xf32>
    tpu.vector_store %arg11[%c12_155, %c0_156], %440 {strides = array<i32>} : memref<16x64xf32, #tpu.memory_space<vmem>>, vector<1x64xf32>,
    %442 = vector.extract_strided_slice %278 {offsets = [10, 0], sizes = [2, 256], strides = [1, 1]} : vector<16x256xf32> to vector<2x256xf32>
    %cst_157 = arith.constant dense<0.000000e+00> : vector<2x256xf32>
    %443 = tpu.matmul %437, %279, %cst_157 {dimension_numbers = #tpu.dot_dimension_numbers<[1], [0], [0], [1], [0, 0, 1, 1], [], []>} : vector<2x64xf32>, vector<64x256xf32>, vector<2x256xf32> -> vector<2x256xf32>
    %444 = arith.addf %442, %443 : vector<2x256xf32>
    %445 = vector.extract_strided_slice %444 {offsets = [0, 0], sizes = [2, 64], strides = [1, 1]} : vector<2x256xf32> to vector<2x64xf32>
    %446 = arith.negf %445 : vector<2x64xf32>
    %447 = math.exp %446 : vector<2x64xf32>
    %cst_158 = arith.constant 1.000000e+00 : f32
    %448 = vector.broadcast %cst_158 : f32 to vector<2x64xf32>
    %449 = arith.addf %448, %447 : vector<2x64xf32>
    %450 = arith.divf %448, %449 : vector<2x64xf32>
    %451 = vector.extract_strided_slice %444 {offsets = [0, 64], sizes = [2, 64], strides = [1, 1]} : vector<2x256xf32> to vector<2x64xf32>
    %452 = arith.negf %451 : vector<2x64xf32>
    %453 = math.exp %452 : vector<2x64xf32>
    %cst_159 = arith.constant 1.000000e+00 : f32
    %454 = vector.broadcast %cst_159 : f32 to vector<2x64xf32>
    %455 = arith.addf %454, %453 : vector<2x64xf32>
    %456 = arith.divf %454, %455 : vector<2x64xf32>
    %457 = vector.extract_strided_slice %444 {offsets = [0, 128], sizes = [2, 64], strides = [1, 1]} : vector<2x256xf32> to vector<2x64xf32>
    %458 = math.tanh %457 : vector<2x64xf32>
    %459 = vector.extract_strided_slice %444 {offsets = [0, 192], sizes = [2, 64], strides = [1, 1]} : vector<2x256xf32> to vector<2x64xf32>
    %460 = arith.negf %459 : vector<2x64xf32>
    %461 = math.exp %460 : vector<2x64xf32>
    %cst_160 = arith.constant 1.000000e+00 : f32
    %462 = vector.broadcast %cst_160 : f32 to vector<2x64xf32>
    %463 = arith.addf %462, %461 : vector<2x64xf32>
    %464 = arith.divf %462, %463 : vector<2x64xf32>
    %465 = arith.mulf %456, %435 : vector<2x64xf32>
    %466 = arith.mulf %450, %458 : vector<2x64xf32>
    %467 = arith.addf %465, %466 : vector<2x64xf32>
    %468 = math.tanh %467 : vector<2x64xf32>
    %469 = arith.mulf %464, %468 : vector<2x64xf32>
    %470 = vector.extract_strided_slice %469 {offsets = [0, 0], sizes = [1, 64], strides = [1, 1]} : vector<2x64xf32> to vector<1x64xf32>
    %c5_161 = arith.constant 5 : index
    %c0_162 = arith.constant 0 : index
    %471 = vector.load %arg11[%c5_161, %c0_162] : memref<16x64xf32, #tpu.memory_space<vmem>>, vector<1x64xf32>
    tpu.vector_store %arg11[%c5_161, %c0_162], %470 {strides = array<i32>} : memref<16x64xf32, #tpu.memory_space<vmem>>, vector<1x64xf32>,
    %472 = vector.extract_strided_slice %469 {offsets = [1, 0], sizes = [1, 64], strides = [1, 1]} : vector<2x64xf32> to vector<1x64xf32>
    %c13_163 = arith.constant 13 : index
    %c0_164 = arith.constant 0 : index
    %473 = vector.load %arg11[%c13_163, %c0_164] : memref<16x64xf32, #tpu.memory_space<vmem>>, vector<1x64xf32>
    tpu.vector_store %arg11[%c13_163, %c0_164], %472 {strides = array<i32>} : memref<16x64xf32, #tpu.memory_space<vmem>>, vector<1x64xf32>,
    %474 = vector.extract_strided_slice %278 {offsets = [12, 0], sizes = [2, 256], strides = [1, 1]} : vector<16x256xf32> to vector<2x256xf32>
    %cst_165 = arith.constant dense<0.000000e+00> : vector<2x256xf32>
    %475 = tpu.matmul %469, %279, %cst_165 {dimension_numbers = #tpu.dot_dimension_numbers<[1], [0], [0], [1], [0, 0, 1, 1], [], []>} : vector<2x64xf32>, vector<64x256xf32>, vector<2x256xf32> -> vector<2x256xf32>
    %476 = arith.addf %474, %475 : vector<2x256xf32>
    %477 = vector.extract_strided_slice %476 {offsets = [0, 0], sizes = [2, 64], strides = [1, 1]} : vector<2x256xf32> to vector<2x64xf32>
    %478 = arith.negf %477 : vector<2x64xf32>
    %479 = math.exp %478 : vector<2x64xf32>
    %cst_166 = arith.constant 1.000000e+00 : f32
    %480 = vector.broadcast %cst_166 : f32 to vector<2x64xf32>
    %481 = arith.addf %480, %479 : vector<2x64xf32>
    %482 = arith.divf %480, %481 : vector<2x64xf32>
    %483 = vector.extract_strided_slice %476 {offsets = [0, 64], sizes = [2, 64], strides = [1, 1]} : vector<2x256xf32> to vector<2x64xf32>
    %484 = arith.negf %483 : vector<2x64xf32>
    %485 = math.exp %484 : vector<2x64xf32>
    %cst_167 = arith.constant 1.000000e+00 : f32
    %486 = vector.broadcast %cst_167 : f32 to vector<2x64xf32>
    %487 = arith.addf %486, %485 : vector<2x64xf32>
    %488 = arith.divf %486, %487 : vector<2x64xf32>
    %489 = vector.extract_strided_slice %476 {offsets = [0, 128], sizes = [2, 64], strides = [1, 1]} : vector<2x256xf32> to vector<2x64xf32>
    %490 = math.tanh %489 : vector<2x64xf32>
    %491 = vector.extract_strided_slice %476 {offsets = [0, 192], sizes = [2, 64], strides = [1, 1]} : vector<2x256xf32> to vector<2x64xf32>
    %492 = arith.negf %491 : vector<2x64xf32>
    %493 = math.exp %492 : vector<2x64xf32>
    %cst_168 = arith.constant 1.000000e+00 : f32
    %494 = vector.broadcast %cst_168 : f32 to vector<2x64xf32>
    %495 = arith.addf %494, %493 : vector<2x64xf32>
    %496 = arith.divf %494, %495 : vector<2x64xf32>
    %497 = arith.mulf %488, %467 : vector<2x64xf32>
    %498 = arith.mulf %482, %490 : vector<2x64xf32>
    %499 = arith.addf %497, %498 : vector<2x64xf32>
    %500 = math.tanh %499 : vector<2x64xf32>
    %501 = arith.mulf %496, %500 : vector<2x64xf32>
    %502 = vector.extract_strided_slice %501 {offsets = [0, 0], sizes = [1, 64], strides = [1, 1]} : vector<2x64xf32> to vector<1x64xf32>
    %c6_169 = arith.constant 6 : index
    %c0_170 = arith.constant 0 : index
    %503 = vector.load %arg11[%c6_169, %c0_170] : memref<16x64xf32, #tpu.memory_space<vmem>>, vector<1x64xf32>
    tpu.vector_store %arg11[%c6_169, %c0_170], %502 {strides = array<i32>} : memref<16x64xf32, #tpu.memory_space<vmem>>, vector<1x64xf32>,
    %504 = vector.extract_strided_slice %501 {offsets = [1, 0], sizes = [1, 64], strides = [1, 1]} : vector<2x64xf32> to vector<1x64xf32>
    %c14_171 = arith.constant 14 : index
    %c0_172 = arith.constant 0 : index
    %505 = vector.load %arg11[%c14_171, %c0_172] : memref<16x64xf32, #tpu.memory_space<vmem>>, vector<1x64xf32>
    tpu.vector_store %arg11[%c14_171, %c0_172], %504 {strides = array<i32>} : memref<16x64xf32, #tpu.memory_space<vmem>>, vector<1x64xf32>,
    %506 = vector.extract_strided_slice %278 {offsets = [14, 0], sizes = [2, 256], strides = [1, 1]} : vector<16x256xf32> to vector<2x256xf32>
    %cst_173 = arith.constant dense<0.000000e+00> : vector<2x256xf32>
    %507 = tpu.matmul %501, %279, %cst_173 {dimension_numbers = #tpu.dot_dimension_numbers<[1], [0], [0], [1], [0, 0, 1, 1], [], []>} : vector<2x64xf32>, vector<64x256xf32>, vector<2x256xf32> -> vector<2x256xf32>
    %508 = arith.addf %506, %507 : vector<2x256xf32>
    %509 = vector.extract_strided_slice %508 {offsets = [0, 0], sizes = [2, 64], strides = [1, 1]} : vector<2x256xf32> to vector<2x64xf32>
    %510 = arith.negf %509 : vector<2x64xf32>
    %511 = math.exp %510 : vector<2x64xf32>
    %cst_174 = arith.constant 1.000000e+00 : f32
    %512 = vector.broadcast %cst_174 : f32 to vector<2x64xf32>
    %513 = arith.addf %512, %511 : vector<2x64xf32>
    %514 = arith.divf %512, %513 : vector<2x64xf32>
    %515 = vector.extract_strided_slice %508 {offsets = [0, 64], sizes = [2, 64], strides = [1, 1]} : vector<2x256xf32> to vector<2x64xf32>
    %516 = arith.negf %515 : vector<2x64xf32>
    %517 = math.exp %516 : vector<2x64xf32>
    %cst_175 = arith.constant 1.000000e+00 : f32
    %518 = vector.broadcast %cst_175 : f32 to vector<2x64xf32>
    %519 = arith.addf %518, %517 : vector<2x64xf32>
    %520 = arith.divf %518, %519 : vector<2x64xf32>
    %521 = vector.extract_strided_slice %508 {offsets = [0, 128], sizes = [2, 64], strides = [1, 1]} : vector<2x256xf32> to vector<2x64xf32>
    %522 = math.tanh %521 : vector<2x64xf32>
    %523 = vector.extract_strided_slice %508 {offsets = [0, 192], sizes = [2, 64], strides = [1, 1]} : vector<2x256xf32> to vector<2x64xf32>
    %524 = arith.negf %523 : vector<2x64xf32>
    %525 = math.exp %524 : vector<2x64xf32>
    %cst_176 = arith.constant 1.000000e+00 : f32
    %526 = vector.broadcast %cst_176 : f32 to vector<2x64xf32>
    %527 = arith.addf %526, %525 : vector<2x64xf32>
    %528 = arith.divf %526, %527 : vector<2x64xf32>
    %529 = arith.mulf %520, %499 : vector<2x64xf32>
    %530 = arith.mulf %514, %522 : vector<2x64xf32>
    %531 = arith.addf %529, %530 : vector<2x64xf32>
    %532 = math.tanh %531 : vector<2x64xf32>
    %533 = arith.mulf %528, %532 : vector<2x64xf32>
    %534 = vector.extract_strided_slice %533 {offsets = [0, 0], sizes = [1, 64], strides = [1, 1]} : vector<2x64xf32> to vector<1x64xf32>
    %c7_177 = arith.constant 7 : index
    %c0_178 = arith.constant 0 : index
    %535 = vector.load %arg11[%c7_177, %c0_178] : memref<16x64xf32, #tpu.memory_space<vmem>>, vector<1x64xf32>
    tpu.vector_store %arg11[%c7_177, %c0_178], %534 {strides = array<i32>} : memref<16x64xf32, #tpu.memory_space<vmem>>, vector<1x64xf32>,
    %536 = vector.extract_strided_slice %533 {offsets = [1, 0], sizes = [1, 64], strides = [1, 1]} : vector<2x64xf32> to vector<1x64xf32>
    %c15_179 = arith.constant 15 : index
    %c0_180 = arith.constant 0 : index
    %537 = vector.load %arg11[%c15_179, %c0_180] : memref<16x64xf32, #tpu.memory_space<vmem>>, vector<1x64xf32>
    tpu.vector_store %arg11[%c15_179, %c0_180], %536 {strides = array<i32>} : memref<16x64xf32, #tpu.memory_space<vmem>>, vector<1x64xf32>,
    %c0_181 = arith.constant 0 : index
    %c0_182 = arith.constant 0 : index
    %538 = vector.load %arg11[%c0_181, %c0_182] : memref<16x64xf32, #tpu.memory_space<vmem>>, vector<16x64xf32>
    %c0_183 = arith.constant 0 : index
    %c0_184 = arith.constant 0 : index
    %539 = vector.load %arg7[%c0_183, %c0_184] : memref<64x5xf32, #tpu.memory_space<vmem>>, vector<64x5xf32>
    %cst_185 = arith.constant dense<0.000000e+00> : vector<16x5xf32>
    %540 = tpu.matmul %538, %539, %cst_185 {dimension_numbers = #tpu.dot_dimension_numbers<[1], [0], [0], [1], [0, 0, 1, 1], [], []>} : vector<16x64xf32>, vector<64x5xf32>, vector<16x5xf32> -> vector<16x5xf32>
    %c0_186 = arith.constant 0 : index
    %c0_187 = arith.constant 0 : index
    %541 = vector.load %arg8[%c0_186, %c0_187] : memref<1x5xf32, #tpu.memory_space<vmem>>, vector<1x5xf32>
    %542 = vector.broadcast %541 : vector<1x5xf32> to vector<16x5xf32>
    %543 = arith.addf %540, %542 : vector<16x5xf32>
    %c0_188 = arith.constant 0 : index
    %c0_189 = arith.constant 0 : index
    %544 = vector.load %arg9[%c0_188, %c0_189] : memref<16x5xf32, #tpu.memory_space<vmem>>, vector<16x5xf32>
    tpu.vector_store %arg9[%c0_188, %c0_189], %543 {strides = array<i32>} : memref<16x5xf32, #tpu.memory_space<vmem>>, vector<16x5xf32>,
    return
  }
}

</mosaic_0001>

<llo_original>
// kernel: lstm_model_forward.1
$region0: #{lstm_model_forward.1}
  #allocation0 [shape = 'u32[]', space=smem, size = 0x4, offset = 0x4, fixed_abs, tag = 'smem constant byte address 0x4 - core index']
  #allocation1 [shape = 'u32[144,128]{1,0:T(1,128)}', space=vmem, size = 0x12000, scoped, tag = 'internal scratch']
  #allocation2 [shape = 'f32[16,6]{1,0:T(8,128)}', space=vmem, size = 0x2000, scoped, tag = 'scratch operand']
  #allocation3 [shape = 'f32[16,64]{1,0:T(8,128)}', space=vmem, size = 0x2000, scoped, tag = 'scratch operand']
  %s0 = inlined_call_operand.vmem [shape: f32[16,6], index: 0, kind: input, shape index: {}]
  %s1 = inlined_call_operand.vmem [shape: f32[6,256], index: 1, kind: input, shape index: {}]
  %s2 = inlined_call_operand.vmem [shape: f32[64,256], index: 2, kind: input, shape index: {}]
  %s3 = inlined_call_operand.vmem [shape: f32[1,256], index: 3, kind: input, shape index: {}]
  %s4 = inlined_call_operand.hbm [shape: f32[64,256], index: 4, kind: input, shape index: {}]
  %s5 = inlined_call_operand.hbm [shape: f32[64,256], index: 5, kind: input, shape index: {}]
  %s6 = inlined_call_operand.vmem [shape: f32[1,256], index: 6, kind: input, shape index: {}]
  %s7 = inlined_call_operand.vmem [shape: f32[64,5], index: 7, kind: input, shape index: {}]
  %s8 = inlined_call_operand.vmem [shape: f32[1,5], index: 8, kind: input, shape index: {}]
  %s9 = inlined_call_operand.vmem [shape: f32[16,5], index: 9, kind: output, shape index: {}]
  %s10 = sld [smem:[#allocation0]]
  $region54: #{lstm_model_forward.1} parent=0
    _
  %s12 = ssub.s32 1, %s10
  %s13 = scalar_select 0, %s12, %s10
  $region1: #{lstm_model_forward.1} parent=0
    #allocation4 [shape = 'u8[65536]{0}', space=vmem, size = 0x10000, scoped, tag = 'input window, operand 4, single buffered']
    #allocation5 [shape = 's32[1]{0}', space=sflag, size = 0x4, scoped, tag = 'scoped memory for lstm_model_forward.1']
    #allocation6 [shape = 'u8[65536]{0}', space=vmem, size = 0x10000, scoped, tag = 'input window, operand 5, single buffered']
    #allocation7 [shape = 's32[1]{0}', space=sflag, size = 0x4, scoped, tag = 'scoped memory for lstm_model_forward.1']
    %14 = vsyncpa [#allocation5], 0
    %15 = vsyncpa [#allocation7], 0
    // Predicated region
    $region2: #{lstm_model_forward.1} parent=1 // pred_check
      _
    $region3: #{lstm_model_forward.1} parent=1 // pred_check_branch
      %17 = sbr.rel (0) target = $region5
    $region4: #{lstm_model_forward.1} parent=1 // pred_region
      _
    $region5: #{lstm_model_forward.1} parent=1 // pred_fallthru
      _
    // Predicated region
    $region6: #{lstm_model_forward.1} parent=1 // pred_check
      _
    $region7: #{lstm_model_forward.1} parent=1 // pred_check_branch
      %19 = sbr.rel (0) target = $region9
    $region8: #{lstm_model_forward.1} parent=1 // pred_region
      _
    $region9: #{lstm_model_forward.1} parent=1 // pred_fallthru
      _
    // Predicated region
    $region10: #{lstm_model_forward.1} parent=1 // pred_check
      _
    $region11: #{lstm_model_forward.1} parent=1 // pred_check_branch
      %21 = sbr.rel (0) target = $region13
    $region12: #{lstm_model_forward.1} parent=1 // pred_region
      _
    $region13: #{lstm_model_forward.1} parent=1 // pred_fallthru
      _
    // Predicated region
    $region14: #{lstm_model_forward.1} parent=1 // pred_check
      _
    $region15: #{lstm_model_forward.1} parent=1 // pred_check_branch
      %23 = sbr.rel (0) target = $region17
    $region16: #{lstm_model_forward.1} parent=1 // pred_region
      _
    $region17: #{lstm_model_forward.1} parent=1 // pred_fallthru
      _
    // Predicated region
    $region18: #{lstm_model_forward.1} parent=1 // pred_check
      _
    $region19: #{lstm_model_forward.1} parent=1 // pred_check_branch
      %25 = sbr.rel (0) target = $region21
    $region20: #{lstm_model_forward.1} parent=1 // pred_region
      %s27 = ssub.s32 2048, 2048
      %28 = vsyncadd [#allocation5], %s27
      %s29 = sshll.u32 [#allocation4], 4
      %s30 = int_to_ptr.vmem [resolvable:$true] %s29
      %35 = dma.hbm_to_vmem [thread:$0]  %s4, 2048, %s30, [#allocation5], 256, 256, 16
    $region21: #{lstm_model_forward.1} parent=1 // pred_fallthru
      _
    // Predicated region
    $region22: #{lstm_model_forward.1} parent=1 // pred_check
      _
    $region23: #{lstm_model_forward.1} parent=1 // pred_check_branch
      %37 = sbr.rel (0) target = $region25
    $region24: #{lstm_model_forward.1} parent=1 // pred_region
      %s39 = ssub.s32 2048, 2048
      %40 = vsyncadd [#allocation7], %s39
      %s41 = sshll.u32 [#allocation6], 4
      %s42 = int_to_ptr.vmem [resolvable:$true] %s41
      %47 = dma.hbm_to_vmem [thread:$0]  %s5, 2048, %s42, [#allocation7], 256, 256, 16
    $region25: #{lstm_model_forward.1} parent=1 // pred_fallthru
      _
    // Predicated region
    $region26: #{lstm_model_forward.1} parent=1 // pred_check
      _
    $region27: #{lstm_model_forward.1} parent=1 // pred_check_branch
      %49 = sbr.rel (0) target = $region29
    $region28: #{lstm_model_forward.1} parent=1 // pred_region
      _
    $region29: #{lstm_model_forward.1} parent=1 // pred_fallthru
      _
    // Predicated region
    $region30: #{lstm_model_forward.1} parent=1 // pred_check
      _
    $region31: #{lstm_model_forward.1} parent=1 // pred_check_branch
      %51 = sbr.rel (0) target = $region33
    $region32: #{lstm_model_forward.1} parent=1 // pred_region
      _
    $region33: #{lstm_model_forward.1} parent=1 // pred_fallthru
      _
    // Predicated region
    $region34: #{lstm_model_forward.1} parent=1 // pred_check
      _
    $region35: #{lstm_model_forward.1} parent=1 // pred_check_branch
      %53 = sbr.rel (0) target = $region37
    $region36: #{lstm_model_forward.1} parent=1 // pred_region
      _
    $region37: #{lstm_model_forward.1} parent=1 // pred_fallthru
      _
    // Predicated region
    $region38: #{lstm_model_forward.1} parent=1 // pred_check
      _
    $region39: #{lstm_model_forward.1} parent=1 // pred_check_branch
      %55 = sbr.rel (0) target = $region41
    $region40: #{lstm_model_forward.1} parent=1 // pred_region
      %56 = dma.done [#allocation5], 2048
    $region41: #{lstm_model_forward.1} parent=1 // pred_fallthru
      _
    // Predicated region
    $region42: #{lstm_model_forward.1} parent=1 // pred_check
      _
    $region43: #{lstm_model_forward.1} parent=1 // pred_check_branch
      %58 = sbr.rel (0) target = $region45
    $region44: #{lstm_model_forward.1} parent=1 // pred_region
      %59 = dma.done [#allocation7], 2048
    $region45: #{lstm_model_forward.1} parent=1 // pred_fallthru
      _
    %v60 = vld [vmem:[%s0] sm:$0x1]
    %vm61 = vcmask 40960
    %62 = vst.msk [vmem:[#allocation2] sm:$0x1] %vm61, %v60
    %v63 = vld [vmem:[%s0 + $0x1] sm:$0x1]
    %64 = vst.msk [vmem:[#allocation2 + $0x2] sm:$0x1] %vm61, %v63
    %v65 = vld [vmem:[%s0 + $0x2] sm:$0x1]
    %66 = vst.msk [vmem:[#allocation2 + $0x4] sm:$0x1] %vm61, %v65
    %v67 = vld [vmem:[%s0 + $0x3] sm:$0x1]
    %68 = vst.msk [vmem:[#allocation2 + $0x6] sm:$0x1] %vm61, %v67
    %v69 = vld [vmem:[%s0 + $0x4] sm:$0x1]
    %70 = vst.msk [vmem:[#allocation2 + $0x8] sm:$0x1] %vm61, %v69
    %v71 = vld [vmem:[%s0 + $0x5] sm:$0x1]
    %72 = vst.msk [vmem:[#allocation2 + $0xa] sm:$0x1] %vm61, %v71
    %v73 = vld [vmem:[%s0 + $0x6] sm:$0x1]
    %74 = vst.msk [vmem:[#allocation2 + $0xc] sm:$0x1] %vm61, %v73
    %v75 = vld [vmem:[%s0 + $0x7] sm:$0x1]
    %76 = vst.msk [vmem:[#allocation2 + $0xe] sm:$0x1] %vm61, %v75
    %v77 = vld [vmem:[%s0 + $0x8] sm:$0x1]
    %78 = vst.msk [vmem:[#allocation2 + $0x1] sm:$0x1] %vm61, %v77
    %v79 = vld [vmem:[%s0 + $0x9] sm:$0x1]
    %80 = vst.msk [vmem:[#allocation2 + $0x3] sm:$0x1] %vm61, %v79
    %v81 = vld [vmem:[%s0 + $0xa] sm:$0x1]
    %82 = vst.msk [vmem:[#allocation2 + $0x5] sm:$0x1] %vm61, %v81
    %v83 = vld [vmem:[%s0 + $0xb] sm:$0x1]
    %84 = vst.msk [vmem:[#allocation2 + $0x7] sm:$0x1] %vm61, %v83
    %v85 = vld [vmem:[%s0 + $0xc] sm:$0x1]
    %86 = vst.msk [vmem:[#allocation2 + $0x9] sm:$0x1] %vm61, %v85
    %v87 = vld [vmem:[%s0 + $0xd] sm:$0x1]
    %88 = vst.msk [vmem:[#allocation2 + $0xb] sm:$0x1] %vm61, %v87
    %v89 = vld [vmem:[%s0 + $0xe] sm:$0x1]
    %90 = vst.msk [vmem:[#allocation2 + $0xd] sm:$0x1] %vm61, %v89
    %v91 = vld [vmem:[%s0 + $0xf] sm:$0x1]
    %92 = vst.msk [vmem:[#allocation2 + $0xf] sm:$0x1] %vm61, %v91
    %v93 = vld [vmem:[#allocation2] sm:$0xff]
    %v94 = vld [vmem:[#allocation2 + $0x8] sm:$0xff]
    %v95 = vld [vmem:[%s1] sm:$0x3f]
    %v96 = vld [vmem:[%s1 + $0x8] sm:$0x3f]
    %v97 = vld [vmem:[%s3] sm:$0x3]
    %v99 = vlaneseq
    %v100 = vshrl.u32 %v99, 7
    %v101 = vsub.s32 0, %v100
    %v102 = vrot.slane %v97, %v101
    %v103 = vlaneseq
    %v104 = vshrl.u32 %v103, 7
    %v105 = vsub.s32 1, %v104
    %v106 = vrot.slane %v97, %v105
    %vm109 = vcmask 48128
    %v111 = vsel %vm109, %v93, 0
    %v114 = vsel %vm109, %v94, 0
    %vm116 = vcmask 1045504
    %v118 = vsel %vm116, %v95, 0
    %v121 = vsel %vm116, %v96, 0
    %123 = vmatprep.subr.mxu0 %v121
    %124 = vmatpush1.msra.mxu0 %v118
    %125 = vmatprep.subr.mxu0 0.0
    %126 = vmatpush1.msra.mxu0 0.0
    %127 = vmatprep.subr.mxu0 0.0
    %128 = vmatpush1.msra.mxu0 0.0
    %129 = vmatprep.subr.mxu0 0.0
    %130 = vmatpush1.msra.mxu0 0.0
    %131 = vmatprep.subr.mxu0 0.0
    %132 = vmatpush1.msra.mxu0 0.0
    %133 = vmatprep.subr.mxu0 0.0
    %134 = vmatpush1.msra.mxu0 0.0
    %135 = vmatprep.subr.mxu0 0.0
    %136 = vmatpush1.msra.mxu0 0.0
    %137 = vmatprep.subr.mxu0 0.0
    %138 = vmatpush1.msra.mxu0 0.0
    %139 = vmatprep.subr.mxu0 0.0
    %140 = vmatpush1.msra.mxu0 0.0
    %141 = vmatprep.subr.mxu0 0.0
    %142 = vmatpush1.msra.mxu0 0.0
    %143 = vmatprep.subr.mxu0 0.0
    %144 = vmatpush1.msra.mxu0 0.0
    %145 = vmatprep.subr.mxu0 0.0
    %146 = vmatpush1.msra.mxu0 0.0
    %147 = vmatprep.subr.mxu0 0.0
    %148 = vmatpush1.msra.mxu0 0.0
    %149 = vmatprep.subr.mxu0 0.0
    %150 = vmatpush1.msra.mxu0 0.0
    %151 = vmatprep.subr.mxu0 0.0
    %152 = vmatpush1.msra.mxu0 0.0
    %153 = vmatprep.subr.mxu0 0.0
    %154 = vmatpush1.msra.mxu0 0.0
    %155 = vmatprep.subr.mxu0 0.0
    %156 = vmatpush1.msra.mxu0 0.0
    %157 = vmatprep.subr.mxu0 0.0
    %158 = vmatpush1.msra.mxu0 0.0
    %159 = vmatprep.subr.mxu0 0.0
    %160 = vmatpush1.msra.mxu0 0.0
    %161 = vmatprep.subr.mxu0 0.0
    %162 = vmatpush1.msra.mxu0 0.0
    %163 = vmatprep.subr.mxu0 0.0
    %164 = vmatpush1.msra.mxu0 0.0
    %165 = vmatprep.subr.mxu0 0.0
    %166 = vmatpush1.msra.mxu0 0.0
    %167 = vmatprep.subr.mxu0 0.0
    %168 = vmatpush1.msra.mxu0 0.0
    %169 = vmatprep.subr.mxu0 0.0
    %170 = vmatpush1.msra.mxu0 0.0
    %171 = vmatprep.subr.mxu0 0.0
    %172 = vmatpush1.msra.mxu0 0.0
    %173 = vmatprep.subr.mxu0 0.0
    %174 = vmatpush1.msra.mxu0 0.0
    %175 = vmatprep.subr.mxu0 0.0
    %176 = vmatpush1.msra.mxu0 0.0
    %177 = vmatprep.subr.mxu0 0.0
    %178 = vmatpush1.msra.mxu0 0.0
    %179 = vmatprep.subr.mxu0 0.0
    %180 = vmatpush1.msra.mxu0 0.0
    %181 = vmatprep.subr.mxu0 0.0
    %182 = vmatpush1.msra.mxu0 0.0
    %183 = vmatprep.subr.mxu0 0.0
    %184 = vmatpush1.msra.mxu0 0.0
    %185 = vmatprep.subr.mxu0 0.0
    %186 = vmatpush1.msra.mxu0 0.0
    %187 = vmatprep.mubr.f32.mxu0 0.0
    %188 = vmatmul.mubr.f32.gmra.mrb[0].mxu0 %v111
    %v189 = vpop.f32.mrb[0].mxu0
    %v190 = vadd.f32 %v102, %v189
    %v191 = vpop.f32.mrb[0].mxu0
    %v192 = vadd.f32 %v106, %v191
    %193 = vmatprep.mubr.f32.mxu0 0.0
    %194 = vmatmul.mubr.f32.gmra.mrb[0].mxu0 %v114
    %v195 = vpop.f32.mrb[0].mxu0
    %v196 = vadd.f32 %v102, %v195
    %v197 = vpop.f32.mrb[0].mxu0
    %v198 = vadd.f32 %v106, %v197
    %199 = vdwg.mxu0
    %v200 = vld [vmem:[%s2] sm:$0xff]
    %v201 = vld [vmem:[%s2 + $0x8] sm:$0xff]
    %v202 = vld [vmem:[%s2 + $0x10] sm:$0xff]
    %v203 = vld [vmem:[%s2 + $0x18] sm:$0xff]
    %v204 = vld [vmem:[%s2 + $0x20] sm:$0xff]
    %v205 = vld [vmem:[%s2 + $0x28] sm:$0xff]
    %v206 = vld [vmem:[%s2 + $0x30] sm:$0xff]
    %v207 = vld [vmem:[%s2 + $0x38] sm:$0xff]
    %v208 = vld [vmem:[%s2 + $0x40] sm:$0xff]
    %v209 = vld [vmem:[%s2 + $0x48] sm:$0xff]
    %v210 = vld [vmem:[%s2 + $0x50] sm:$0xff]
    %v211 = vld [vmem:[%s2 + $0x58] sm:$0xff]
    %v212 = vld [vmem:[%s2 + $0x60] sm:$0xff]
    %v213 = vld [vmem:[%s2 + $0x68] sm:$0xff]
    %v214 = vld [vmem:[%s2 + $0x70] sm:$0xff]
    %v215 = vld [vmem:[%s2 + $0x78] sm:$0xff]
    %vm216 = vcmask 523264
    %v218 = vsel %vm216, 0.0, 0
    %220 = vmatprep.subr.mxu0 %v201
    %221 = vmatpush1.msra.mxu0 %v200
    %222 = vmatprep.subr.mxu0 %v203
    %223 = vmatpush1.msra.mxu0 %v202
    %224 = vmatprep.subr.mxu0 %v205
    %225 = vmatpush1.msra.mxu0 %v204
    %226 = vmatprep.subr.mxu0 %v207
    %227 = vmatpush1.msra.mxu0 %v206
    %228 = vmatprep.subr.mxu0 %v209
    %229 = vmatpush1.msra.mxu0 %v208
    %230 = vmatprep.subr.mxu0 %v211
    %231 = vmatpush1.msra.mxu0 %v210
    %232 = vmatprep.subr.mxu0 %v213
    %233 = vmatpush1.msra.mxu0 %v212
    %234 = vmatprep.subr.mxu0 %v215
    %235 = vmatpush1.msra.mxu0 %v214
    %236 = vmatprep.subr.mxu0 0.0
    %237 = vmatpush1.msra.mxu0 0.0
    %238 = vmatprep.subr.mxu0 0.0
    %239 = vmatpush1.msra.mxu0 0.0
    %240 = vmatprep.subr.mxu0 0.0
    %241 = vmatpush1.msra.mxu0 0.0
    %242 = vmatprep.subr.mxu0 0.0
    %243 = vmatpush1.msra.mxu0 0.0
    %244 = vmatprep.subr.mxu0 0.0
    %245 = vmatpush1.msra.mxu0 0.0
    %246 = vmatprep.subr.mxu0 0.0
    %247 = vmatpush1.msra.mxu0 0.0
    %248 = vmatprep.subr.mxu0 0.0
    %249 = vmatpush1.msra.mxu0 0.0
    %250 = vmatprep.subr.mxu0 0.0
    %251 = vmatpush1.msra.mxu0 0.0
    %252 = vmatprep.subr.mxu0 0.0
    %253 = vmatpush1.msra.mxu0 0.0
    %254 = vmatprep.subr.mxu0 0.0
    %255 = vmatpush1.msra.mxu0 0.0
    %256 = vmatprep.subr.mxu0 0.0
    %257 = vmatpush1.msra.mxu0 0.0
    %258 = vmatprep.subr.mxu0 0.0
    %259 = vmatpush1.msra.mxu0 0.0
    %260 = vmatprep.subr.mxu0 0.0
    %261 = vmatpush1.msra.mxu0 0.0
    %262 = vmatprep.subr.mxu0 0.0
    %263 = vmatpush1.msra.mxu0 0.0
    %264 = vmatprep.subr.mxu0 0.0
    %265 = vmatpush1.msra.mxu0 0.0
    %266 = vmatprep.subr.mxu0 0.0
    %267 = vmatpush1.msra.mxu0 0.0
    %268 = vmatprep.subr.mxu0 0.0
    %269 = vmatpush1.msra.mxu0 0.0
    %270 = vmatprep.subr.mxu0 0.0
    %271 = vmatpush1.msra.mxu0 0.0
    %272 = vmatprep.subr.mxu0 0.0
    %273 = vmatpush1.msra.mxu0 0.0
    %274 = vmatprep.subr.mxu0 0.0
    %275 = vmatpush1.msra.mxu0 0.0
    %276 = vmatprep.subr.mxu0 0.0
    %277 = vmatpush1.msra.mxu0 0.0
    %278 = vmatprep.subr.mxu0 0.0
    %279 = vmatpush1.msra.mxu0 0.0
    %280 = vmatprep.subr.mxu0 0.0
    %281 = vmatpush1.msra.mxu0 0.0
    %282 = vmatprep.subr.mxu0 0.0
    %283 = vmatpush1.msra.mxu0 0.0
    %284 = vmatprep.mubr.f32.mxu0 0.0
    %285 = vmatmul.mubr.f32.gmra.mrb[0].mxu0 %v218
    %v286 = vpop.f32.mrb[0].mxu0
    %v287 = vadd.f32 0.0, %v286
    %v288 = vpop.f32.mrb[0].mxu0
    %v289 = vadd.f32 0.0, %v288
    %290 = vdwg.mxu0
    %v291 = vadd.f32 %v190, %v287
    %v292 = vadd.f32 %v192, %v289
    %v293 = vxor.u32 %v291, 2147483648
    %v294 = vmul.f32 %v293, 1.442695
    %v295 = vpow.pop %v294
    %v296 = vadd.f32 %v295, 1.0
    %v297 = vrcp.pop %v296
    %v298 = vmul.f32 1.0, %v297
    %v299 = vtanh.pop %v292
    %v300 = vxor.u32 %v292, 2147483648
    %v301 = vmul.f32 %v300, 1.442695
    %v302 = vpow.pop %v301
    %v303 = vadd.f32 %v302, 1.0
    %v304 = vrcp.pop %v303
    %v305 = vmul.f32 1.0, %v304
    %v306 = vmul.f32 %v298, 0.0
    %v307 = vmul.f32 %v298, %v299
    %309 = vrot.lane.b32.xlu0 %v307, 64
    %v310 = vpop.permute.xlu0 %309
    %v312 = vadd.f32 %v306, %v310
    %v313 = vtanh.pop %v312
    %v314 = vmul.f32 %v305, %v313
    %316 = vrot.lane.b32.xlu0 %v314, 64
    %v317 = vpop.permute.xlu0 %316
    %vm319 = vcmask 517120
    %320 = vst.msk [vmem:[#allocation3] sm:$0x3] %vm319, %v317
    %v321 = vsel %vm216, %v317, 0
    %323 = vmatprep.subr.mxu0 %v201
    %324 = vmatpush1.msra.mxu0 %v200
    %325 = vmatprep.subr.mxu0 %v203
    %326 = vmatpush1.msra.mxu0 %v202
    %327 = vmatprep.subr.mxu0 %v205
    %328 = vmatpush1.msra.mxu0 %v204
    %329 = vmatprep.subr.mxu0 %v207
    %330 = vmatpush1.msra.mxu0 %v206
    %331 = vmatprep.subr.mxu0 %v209
    %332 = vmatpush1.msra.mxu0 %v208
    %333 = vmatprep.subr.mxu0 %v211
    %334 = vmatpush1.msra.mxu0 %v210
    %335 = vmatprep.subr.mxu0 %v213
    %336 = vmatpush1.msra.mxu0 %v212
    %337 = vmatprep.subr.mxu0 %v215
    %338 = vmatpush1.msra.mxu0 %v214
    %339 = vmatprep.subr.mxu0 0.0
    %340 = vmatpush1.msra.mxu0 0.0
    %341 = vmatprep.subr.mxu0 0.0
    %342 = vmatpush1.msra.mxu0 0.0
    %343 = vmatprep.subr.mxu0 0.0
    %344 = vmatpush1.msra.mxu0 0.0
    %345 = vmatprep.subr.mxu0 0.0
    %346 = vmatpush1.msra.mxu0 0.0
    %347 = vmatprep.subr.mxu0 0.0
    %348 = vmatpush1.msra.mxu0 0.0
    %349 = vmatprep.subr.mxu0 0.0
    %350 = vmatpush1.msra.mxu0 0.0
    %351 = vmatprep.subr.mxu0 0.0
    %352 = vmatpush1.msra.mxu0 0.0
    %353 = vmatprep.subr.mxu0 0.0
    %354 = vmatpush1.msra.mxu0 0.0
    %355 = vmatprep.subr.mxu0 0.0
    %356 = vmatpush1.msra.mxu0 0.0
    %357 = vmatprep.subr.mxu0 0.0
    %358 = vmatpush1.msra.mxu0 0.0
    %359 = vmatprep.subr.mxu0 0.0
    %360 = vmatpush1.msra.mxu0 0.0
    %361 = vmatprep.subr.mxu0 0.0
    %362 = vmatpush1.msra.mxu0 0.0
    %363 = vmatprep.subr.mxu0 0.0
    %364 = vmatpush1.msra.mxu0 0.0
    %365 = vmatprep.subr.mxu0 0.0
    %366 = vmatpush1.msra.mxu0 0.0
    %367 = vmatprep.subr.mxu0 0.0
    %368 = vmatpush1.msra.mxu0 0.0
    %369 = vmatprep.subr.mxu0 0.0
    %370 = vmatpush1.msra.mxu0 0.0
    %371 = vmatprep.subr.mxu0 0.0
    %372 = vmatpush1.msra.mxu0 0.0
    %373 = vmatprep.subr.mxu0 0.0
    %374 = vmatpush1.msra.mxu0 0.0
    %375 = vmatprep.subr.mxu0 0.0
    %376 = vmatpush1.msra.mxu0 0.0
    %377 = vmatprep.subr.mxu0 0.0
    %378 = vmatpush1.msra.mxu0 0.0
    %379 = vmatprep.subr.mxu0 0.0
    %380 = vmatpush1.msra.mxu0 0.0
    %381 = vmatprep.subr.mxu0 0.0
    %382 = vmatpush1.msra.mxu0 0.0
    %383 = vmatprep.subr.mxu0 0.0
    %384 = vmatpush1.msra.mxu0 0.0
    %385 = vmatprep.subr.mxu0 0.0
    %386 = vmatpush1.msra.mxu0 0.0
    %387 = vmatprep.mubr.f32.mxu0 0.0
    %388 = vmatmul.mubr.f32.gmra.mrb[0].mxu0 %v321
    %v389 = vpop.f32.mrb[0].mxu0
    %v390 = vadd.f32 0.0, %v389
    %v391 = vpop.f32.mrb[0].mxu0
    %v392 = vadd.f32 0.0, %v391
    %393 = vdwg.mxu0
    %v396 = vrot.slane %v390, 6
    %v397 = vrot.slane %v392, 6
    %v400 = vadd.f32 %v190, %v396
    %v401 = vadd.f32 %v192, %v397
    %v402 = vxor.u32 %v400, 2147483648
    %v403 = vmul.f32 %v402, 1.442695
    %v404 = vpow.pop %v403
    %v405 = vadd.f32 %v404, 1.0
    %v406 = vrcp.pop %v405
    %v407 = vmul.f32 1.0, %v406
    %v408 = vtanh.pop %v401
    %v409 = vxor.u32 %v401, 2147483648
    %v410 = vmul.f32 %v409, 1.442695
    %v411 = vpow.pop %v410
    %v412 = vadd.f32 %v411, 1.0
    %v413 = vrcp.pop %v412
    %v414 = vmul.f32 1.0, %v413
    %v416 = vrot.slane %v312, 6
    %v418 = vmul.f32 %v407, %v416
    %v419 = vmul.f32 %v407, %v408
    %421 = vrot.lane.b32.xlu0 %v419, 64
    %v422 = vpop.permute.xlu0 %421
    %v424 = vadd.f32 %v418, %v422
    %v425 = vtanh.pop %v424
    %v426 = vmul.f32 %v414, %v425
    %428 = vrot.lane.b32.xlu0 %v426, 64
    %v429 = vpop.permute.xlu0 %428
    %vm431 = vcmask 519170
    %432 = vst.msk [vmem:[#allocation3] sm:$0xc] %vm431, %v429
    %v433 = vrot.slane %v426, 2
    %434 = vrot.lane.b32.xlu0 %v433, 64
    %v435 = vpop.permute.xlu0 %434
    %v436 = vsel %vm216, %v435, 0
    %438 = vmatprep.subr.mxu0 %v201
    %439 = vmatpush1.msra.mxu0 %v200
    %440 = vmatprep.subr.mxu0 %v203
    %441 = vmatpush1.msra.mxu0 %v202
    %442 = vmatprep.subr.mxu0 %v205
    %443 = vmatpush1.msra.mxu0 %v204
    %444 = vmatprep.subr.mxu0 %v207
    %445 = vmatpush1.msra.mxu0 %v206
    %446 = vmatprep.subr.mxu0 %v209
    %447 = vmatpush1.msra.mxu0 %v208
    %448 = vmatprep.subr.mxu0 %v211
    %449 = vmatpush1.msra.mxu0 %v210
    %450 = vmatprep.subr.mxu0 %v213
    %451 = vmatpush1.msra.mxu0 %v212
    %452 = vmatprep.subr.mxu0 %v215
    %453 = vmatpush1.msra.mxu0 %v214
    %454 = vmatprep.subr.mxu0 0.0
    %455 = vmatpush1.msra.mxu0 0.0
    %456 = vmatprep.subr.mxu0 0.0
    %457 = vmatpush1.msra.mxu0 0.0
    %458 = vmatprep.subr.mxu0 0.0
    %459 = vmatpush1.msra.mxu0 0.0
    %460 = vmatprep.subr.mxu0 0.0
    %461 = vmatpush1.msra.mxu0 0.0
    %462 = vmatprep.subr.mxu0 0.0
    %463 = vmatpush1.msra.mxu0 0.0
    %464 = vmatprep.subr.mxu0 0.0
    %465 = vmatpush1.msra.mxu0 0.0
    %466 = vmatprep.subr.mxu0 0.0
    %467 = vmatpush1.msra.mxu0 0.0
    %468 = vmatprep.subr.mxu0 0.0
    %469 = vmatpush1.msra.mxu0 0.0
    %470 = vmatprep.subr.mxu0 0.0
    %471 = vmatpush1.msra.mxu0 0.0
    %472 = vmatprep.subr.mxu0 0.0
    %473 = vmatpush1.msra.mxu0 0.0
    %474 = vmatprep.subr.mxu0 0.0
    %475 = vmatpush1.msra.mxu0 0.0
    %476 = vmatprep.subr.mxu0 0.0
    %477 = vmatpush1.msra.mxu0 0.0
    %478 = vmatprep.subr.mxu0 0.0
    %479 = vmatpush1.msra.mxu0 0.0
    %480 = vmatprep.subr.mxu0 0.0
    %481 = vmatpush1.msra.mxu0 0.0
    %482 = vmatprep.subr.mxu0 0.0
    %483 = vmatpush1.msra.mxu0 0.0
    %484 = vmatprep.subr.mxu0 0.0
    %485 = vmatpush1.msra.mxu0 0.0
    %486 = vmatprep.subr.mxu0 0.0
    %487 = vmatpush1.msra.mxu0 0.0
    %488 = vmatprep.subr.mxu0 0.0
    %489 = vmatpush1.msra.mxu0 0.0
    %490 = vmatprep.subr.mxu0 0.0
    %491 = vmatpush1.msra.mxu0 0.0
    %492 = vmatprep.subr.mxu0 0.0
    %493 = vmatpush1.msra.mxu0 0.0
    %494 = vmatprep.subr.mxu0 0.0
    %495 = vmatpush1.msra.mxu0 0.0
    %496 = vmatprep.subr.mxu0 0.0
    %497 = vmatpush1.msra.mxu0 0.0
    %498 = vmatprep.subr.mxu0 0.0
    %499 = vmatpush1.msra.mxu0 0.0
    %500 = vmatprep.subr.mxu0 0.0
    %501 = vmatpush1.msra.mxu0 0.0
    %502 = vmatprep.mubr.f32.mxu0 0.0
    %503 = vmatmul.mubr.f32.gmra.mrb[0].mxu0 %v436
    %v504 = vpop.f32.mrb[0].mxu0
    %v505 = vadd.f32 0.0, %v504
    %v506 = vpop.f32.mrb[0].mxu0
    %v507 = vadd.f32 0.0, %v506
    %508 = vdwg.mxu0
    %v511 = vrot.slane %v505, 4
    %v512 = vrot.slane %v507, 4
    %v515 = vadd.f32 %v190, %v511
    %v516 = vadd.f32 %v192, %v512
    %v517 = vxor.u32 %v515, 2147483648
    %v518 = vmul.f32 %v517, 1.442695
    %v519 = vpow.pop %v518
    %v520 = vadd.f32 %v519, 1.0
    %v521 = vrcp.pop %v520
    %v522 = vmul.f32 1.0, %v521
    %v523 = vtanh.pop %v516
    %v524 = vxor.u32 %v516, 2147483648
    %v525 = vmul.f32 %v524, 1.442695
    %v526 = vpow.pop %v525
    %v527 = vadd.f32 %v526, 1.0
    %v528 = vrcp.pop %v527
    %v529 = vmul.f32 1.0, %v528
    %v531 = vrot.slane %v424, 6
    %v533 = vmul.f32 %v522, %v531
    %v534 = vmul.f32 %v522, %v523
    %536 = vrot.lane.b32.xlu0 %v534, 64
    %v537 = vpop.permute.xlu0 %536
    %v539 = vadd.f32 %v533, %v537
    %v540 = vtanh.pop %v539
    %v541 = vmul.f32 %v529, %v540
    %543 = vrot.lane.b32.xlu0 %v541, 64
    %v544 = vpop.permute.xlu0 %543
    %vm546 = vcmask 521220
    %547 = vst.msk [vmem:[#allocation3] sm:$0x30] %vm546, %v544
    %v548 = vrot.slane %v541, 4
    %549 = vrot.lane.b32.xlu0 %v548, 64
    %v550 = vpop.permute.xlu0 %549
    %v551 = vsel %vm216, %v550, 0
    %553 = vmatprep.subr.mxu0 %v201
    %554 = vmatpush1.msra.mxu0 %v200
    %555 = vmatprep.subr.mxu0 %v203
    %556 = vmatpush1.msra.mxu0 %v202
    %557 = vmatprep.subr.mxu0 %v205
    %558 = vmatpush1.msra.mxu0 %v204
    %559 = vmatprep.subr.mxu0 %v207
    %560 = vmatpush1.msra.mxu0 %v206
    %561 = vmatprep.subr.mxu0 %v209
    %562 = vmatpush1.msra.mxu0 %v208
    %563 = vmatprep.subr.mxu0 %v211
    %564 = vmatpush1.msra.mxu0 %v210
    %565 = vmatprep.subr.mxu0 %v213
    %566 = vmatpush1.msra.mxu0 %v212
    %567 = vmatprep.subr.mxu0 %v215
    %568 = vmatpush1.msra.mxu0 %v214
    %569 = vmatprep.subr.mxu0 0.0
    %570 = vmatpush1.msra.mxu0 0.0
    %571 = vmatprep.subr.mxu0 0.0
    %572 = vmatpush1.msra.mxu0 0.0
    %573 = vmatprep.subr.mxu0 0.0
    %574 = vmatpush1.msra.mxu0 0.0
    %575 = vmatprep.subr.mxu0 0.0
    %576 = vmatpush1.msra.mxu0 0.0
    %577 = vmatprep.subr.mxu0 0.0
    %578 = vmatpush1.msra.mxu0 0.0
    %579 = vmatprep.subr.mxu0 0.0
    %580 = vmatpush1.msra.mxu0 0.0
    %581 = vmatprep.subr.mxu0 0.0
    %582 = vmatpush1.msra.mxu0 0.0
    %583 = vmatprep.subr.mxu0 0.0
    %584 = vmatpush1.msra.mxu0 0.0
    %585 = vmatprep.subr.mxu0 0.0
    %586 = vmatpush1.msra.mxu0 0.0
    %587 = vmatprep.subr.mxu0 0.0
    %588 = vmatpush1.msra.mxu0 0.0
    %589 = vmatprep.subr.mxu0 0.0
    %590 = vmatpush1.msra.mxu0 0.0
    %591 = vmatprep.subr.mxu0 0.0
    %592 = vmatpush1.msra.mxu0 0.0
    %593 = vmatprep.subr.mxu0 0.0
    %594 = vmatpush1.msra.mxu0 0.0
    %595 = vmatprep.subr.mxu0 0.0
    %596 = vmatpush1.msra.mxu0 0.0
    %597 = vmatprep.subr.mxu0 0.0
    %598 = vmatpush1.msra.mxu0 0.0
    %599 = vmatprep.subr.mxu0 0.0
    %600 = vmatpush1.msra.mxu0 0.0
    %601 = vmatprep.subr.mxu0 0.0
    %602 = vmatpush1.msra.mxu0 0.0
    %603 = vmatprep.subr.mxu0 0.0
    %604 = vmatpush1.msra.mxu0 0.0
    %605 = vmatprep.subr.mxu0 0.0
    %606 = vmatpush1.msra.mxu0 0.0
    %607 = vmatprep.subr.mxu0 0.0
    %608 = vmatpush1.msra.mxu0 0.0
    %609 = vmatprep.subr.mxu0 0.0
    %610 = vmatpush1.msra.mxu0 0.0
    %611 = vmatprep.subr.mxu0 0.0
    %612 = vmatpush1.msra.mxu0 0.0
    %613 = vmatprep.subr.mxu0 0.0
    %614 = vmatpush1.msra.mxu0 0.0
    %615 = vmatprep.subr.mxu0 0.0
    %616 = vmatpush1.msra.mxu0 0.0
    %617 = vmatprep.mubr.f32.mxu0 0.0
    %618 = vmatmul.mubr.f32.gmra.mrb[0].mxu0 %v551
    %v619 = vpop.f32.mrb[0].mxu0
    %v620 = vadd.f32 0.0, %v619
    %v621 = vpop.f32.mrb[0].mxu0
    %v622 = vadd.f32 0.0, %v621
    %623 = vdwg.mxu0
    %v626 = vrot.slane %v620, 2
    %v627 = vrot.slane %v622, 2
    %v630 = vadd.f32 %v190, %v626
    %v631 = vadd.f32 %v192, %v627
    %v632 = vxor.u32 %v630, 2147483648
    %v633 = vmul.f32 %v632, 1.442695
    %v634 = vpow.pop %v633
    %v635 = vadd.f32 %v634, 1.0
    %v636 = vrcp.pop %v635
    %v637 = vmul.f32 1.0, %v636
    %v638 = vtanh.pop %v631
    %v639 = vxor.u32 %v631, 2147483648
    %v640 = vmul.f32 %v639, 1.442695
    %v641 = vpow.pop %v640
    %v642 = vadd.f32 %v641, 1.0
    %v643 = vrcp.pop %v642
    %v644 = vmul.f32 1.0, %v643
    %v646 = vrot.slane %v539, 6
    %v648 = vmul.f32 %v637, %v646
    %v649 = vmul.f32 %v637, %v638
    %651 = vrot.lane.b32.xlu0 %v649, 64
    %v652 = vpop.permute.xlu0 %651
    %v654 = vadd.f32 %v648, %v652
    %v655 = vtanh.pop %v654
    %v656 = vmul.f32 %v644, %v655
    %658 = vrot.lane.b32.xlu0 %v656, 64
    %v659 = vpop.permute.xlu0 %658
    %vm661 = vcmask 523270
    %662 = vst.msk [vmem:[#allocation3] sm:$0xc0] %vm661, %v659
    %v663 = vrot.slane %v656, 6
    %664 = vrot.lane.b32.xlu0 %v663, 64
    %v665 = vpop.permute.xlu0 %664
    %v666 = vsel %vm216, %v665, 0
    %668 = vmatprep.subr.mxu0 %v201
    %669 = vmatpush1.msra.mxu0 %v200
    %670 = vmatprep.subr.mxu0 %v203
    %671 = vmatpush1.msra.mxu0 %v202
    %672 = vmatprep.subr.mxu0 %v205
    %673 = vmatpush1.msra.mxu0 %v204
    %674 = vmatprep.subr.mxu0 %v207
    %675 = vmatpush1.msra.mxu0 %v206
    %676 = vmatprep.subr.mxu0 %v209
    %677 = vmatpush1.msra.mxu0 %v208
    %678 = vmatprep.subr.mxu0 %v211
    %679 = vmatpush1.msra.mxu0 %v210
    %680 = vmatprep.subr.mxu0 %v213
    %681 = vmatpush1.msra.mxu0 %v212
    %682 = vmatprep.subr.mxu0 %v215
    %683 = vmatpush1.msra.mxu0 %v214
    %684 = vmatprep.subr.mxu0 0.0
    %685 = vmatpush1.msra.mxu0 0.0
    %686 = vmatprep.subr.mxu0 0.0
    %687 = vmatpush1.msra.mxu0 0.0
    %688 = vmatprep.subr.mxu0 0.0
    %689 = vmatpush1.msra.mxu0 0.0
    %690 = vmatprep.subr.mxu0 0.0
    %691 = vmatpush1.msra.mxu0 0.0
    %692 = vmatprep.subr.mxu0 0.0
    %693 = vmatpush1.msra.mxu0 0.0
    %694 = vmatprep.subr.mxu0 0.0
    %695 = vmatpush1.msra.mxu0 0.0
    %696 = vmatprep.subr.mxu0 0.0
    %697 = vmatpush1.msra.mxu0 0.0
    %698 = vmatprep.subr.mxu0 0.0
    %699 = vmatpush1.msra.mxu0 0.0
    %700 = vmatprep.subr.mxu0 0.0
    %701 = vmatpush1.msra.mxu0 0.0
    %702 = vmatprep.subr.mxu0 0.0
    %703 = vmatpush1.msra.mxu0 0.0
    %704 = vmatprep.subr.mxu0 0.0
    %705 = vmatpush1.msra.mxu0 0.0
    %706 = vmatprep.subr.mxu0 0.0
    %707 = vmatpush1.msra.mxu0 0.0
    %708 = vmatprep.subr.mxu0 0.0
    %709 = vmatpush1.msra.mxu0 0.0
    %710 = vmatprep.subr.mxu0 0.0
    %711 = vmatpush1.msra.mxu0 0.0
    %712 = vmatprep.subr.mxu0 0.0
    %713 = vmatpush1.msra.mxu0 0.0
    %714 = vmatprep.subr.mxu0 0.0
    %715 = vmatpush1.msra.mxu0 0.0
    %716 = vmatprep.subr.mxu0 0.0
    %717 = vmatpush1.msra.mxu0 0.0
    %718 = vmatprep.subr.mxu0 0.0
    %719 = vmatpush1.msra.mxu0 0.0
    %720 = vmatprep.subr.mxu0 0.0
    %721 = vmatpush1.msra.mxu0 0.0
    %722 = vmatprep.subr.mxu0 0.0
    %723 = vmatpush1.msra.mxu0 0.0
    %724 = vmatprep.subr.mxu0 0.0
    %725 = vmatpush1.msra.mxu0 0.0
    %726 = vmatprep.subr.mxu0 0.0
    %727 = vmatpush1.msra.mxu0 0.0
    %728 = vmatprep.subr.mxu0 0.0
    %729 = vmatpush1.msra.mxu0 0.0
    %730 = vmatprep.subr.mxu0 0.0
    %731 = vmatpush1.msra.mxu0 0.0
    %732 = vmatprep.mubr.f32.mxu0 0.0
    %733 = vmatmul.mubr.f32.gmra.mrb[0].mxu0 %v666
    %v734 = vpop.f32.mrb[0].mxu0
    %v735 = vadd.f32 0.0, %v734
    %v736 = vpop.f32.mrb[0].mxu0
    %v737 = vadd.f32 0.0, %v736
    %738 = vdwg.mxu0
    %v739 = vadd.f32 %v196, %v735
    %v740 = vadd.f32 %v198, %v737
    %v741 = vxor.u32 %v739, 2147483648
    %v742 = vmul.f32 %v741, 1.442695
    %v743 = vpow.pop %v742
    %v744 = vadd.f32 %v743, 1.0
    %v745 = vrcp.pop %v744
    %v746 = vmul.f32 1.0, %v745
    %v747 = vtanh.pop %v740
    %v748 = vxor.u32 %v740, 2147483648
    %v749 = vmul.f32 %v748, 1.442695
    %v750 = vpow.pop %v749
    %v751 = vadd.f32 %v750, 1.0
    %v752 = vrcp.pop %v751
    %v753 = vmul.f32 1.0, %v752
    %v755 = vrot.slane %v654, 6
    %v757 = vmul.f32 %v746, %v755
    %v758 = vmul.f32 %v746, %v747
    %760 = vrot.lane.b32.xlu0 %v758, 64
    %v761 = vpop.permute.xlu0 %760
    %v763 = vadd.f32 %v757, %v761
    %v764 = vtanh.pop %v763
    %v765 = vmul.f32 %v753, %v764
    %767 = vrot.lane.b32.xlu0 %v765, 64
    %v768 = vpop.permute.xlu0 %767
    %770 = vst.msk [vmem:[#allocation3 + $0x8] sm:$0x3] %vm319, %v768
    %v771 = vsel %vm216, %v768, 0
    %773 = vmatprep.subr.mxu0 %v201
    %774 = vmatpush1.msra.mxu0 %v200
    %775 = vmatprep.subr.mxu0 %v203
    %776 = vmatpush1.msra.mxu0 %v202
    %777 = vmatprep.subr.mxu0 %v205
    %778 = vmatpush1.msra.mxu0 %v204
    %779 = vmatprep.subr.mxu0 %v207
    %780 = vmatpush1.msra.mxu0 %v206
    %781 = vmatprep.subr.mxu0 %v209
    %782 = vmatpush1.msra.mxu0 %v208
    %783 = vmatprep.subr.mxu0 %v211
    %784 = vmatpush1.msra.mxu0 %v210
    %785 = vmatprep.subr.mxu0 %v213
    %786 = vmatpush1.msra.mxu0 %v212
    %787 = vmatprep.subr.mxu0 %v215
    %788 = vmatpush1.msra.mxu0 %v214
    %789 = vmatprep.subr.mxu0 0.0
    %790 = vmatpush1.msra.mxu0 0.0
    %791 = vmatprep.subr.mxu0 0.0
    %792 = vmatpush1.msra.mxu0 0.0
    %793 = vmatprep.subr.mxu0 0.0
    %794 = vmatpush1.msra.mxu0 0.0
    %795 = vmatprep.subr.mxu0 0.0
    %796 = vmatpush1.msra.mxu0 0.0
    %797 = vmatprep.subr.mxu0 0.0
    %798 = vmatpush1.msra.mxu0 0.0
    %799 = vmatprep.subr.mxu0 0.0
    %800 = vmatpush1.msra.mxu0 0.0
    %801 = vmatprep.subr.mxu0 0.0
    %802 = vmatpush1.msra.mxu0 0.0
    %803 = vmatprep.subr.mxu0 0.0
    %804 = vmatpush1.msra.mxu0 0.0
    %805 = vmatprep.subr.mxu0 0.0
    %806 = vmatpush1.msra.mxu0 0.0
    %807 = vmatprep.subr.mxu0 0.0
    %808 = vmatpush1.msra.mxu0 0.0
    %809 = vmatprep.subr.mxu0 0.0
    %810 = vmatpush1.msra.mxu0 0.0
    %811 = vmatprep.subr.mxu0 0.0
    %812 = vmatpush1.msra.mxu0 0.0
    %813 = vmatprep.subr.mxu0 0.0
    %814 = vmatpush1.msra.mxu0 0.0
    %815 = vmatprep.subr.mxu0 0.0
    %816 = vmatpush1.msra.mxu0 0.0
    %817 = vmatprep.subr.mxu0 0.0
    %818 = vmatpush1.msra.mxu0 0.0
    %819 = vmatprep.subr.mxu0 0.0
    %820 = vmatpush1.msra.mxu0 0.0
    %821 = vmatprep.subr.mxu0 0.0
    %822 = vmatpush1.msra.mxu0 0.0
    %823 = vmatprep.subr.mxu0 0.0
    %824 = vmatpush1.msra.mxu0 0.0
    %825 = vmatprep.subr.mxu0 0.0
    %826 = vmatpush1.msra.mxu0 0.0
    %827 = vmatprep.subr.mxu0 0.0
    %828 = vmatpush1.msra.mxu0 0.0
    %829 = vmatprep.subr.mxu0 0.0
    %830 = vmatpush1.msra.mxu0 0.0
    %831 = vmatprep.subr.mxu0 0.0
    %832 = vmatpush1.msra.mxu0 0.0
    %833 = vmatprep.subr.mxu0 0.0
    %834 = vmatpush1.msra.mxu0 0.0
    %835 = vmatprep.subr.mxu0 0.0
    %836 = vmatpush1.msra.mxu0 0.0
    %837 = vmatprep.mubr.f32.mxu0 0.0
    %838 = vmatmul.mubr.f32.gmra.mrb[0].mxu0 %v771
    %v839 = vpop.f32.mrb[0].mxu0
    %v840 = vadd.f32 0.0, %v839
    %v841 = vpop.f32.mrb[0].mxu0
    %v842 = vadd.f32 0.0, %v841
    %843 = vdwg.mxu0
    %v846 = vrot.slane %v840, 6
    %v847 = vrot.slane %v842, 6
    %v850 = vadd.f32 %v196, %v846
    %v851 = vadd.f32 %v198, %v847
    %v852 = vxor.u32 %v850, 2147483648
    %v853 = vmul.f32 %v852, 1.442695
    %v854 = vpow.pop %v853
    %v855 = vadd.f32 %v854, 1.0
    %v856 = vrcp.pop %v855
    %v857 = vmul.f32 1.0, %v856
    %v858 = vtanh.pop %v851
    %v859 = vxor.u32 %v851, 2147483648
    %v860 = vmul.f32 %v859, 1.442695
    %v861 = vpow.pop %v860
    %v862 = vadd.f32 %v861, 1.0
    %v863 = vrcp.pop %v862
    %v864 = vmul.f32 1.0, %v863
    %v866 = vrot.slane %v763, 6
    %v868 = vmul.f32 %v857, %v866
    %v869 = vmul.f32 %v857, %v858
    %871 = vrot.lane.b32.xlu0 %v869, 64
    %v872 = vpop.permute.xlu0 %871
    %v874 = vadd.f32 %v868, %v872
    %v875 = vtanh.pop %v874
    %v876 = vmul.f32 %v864, %v875
    %878 = vrot.lane.b32.xlu0 %v876, 64
    %v879 = vpop.permute.xlu0 %878
    %881 = vst.msk [vmem:[#allocation3 + $0x8] sm:$0xc] %vm431, %v879
    %v882 = vrot.slane %v876, 2
    %883 = vrot.lane.b32.xlu0 %v882, 64
    %v884 = vpop.permute.xlu0 %883
    %v885 = vsel %vm216, %v884, 0
    %887 = vmatprep.subr.mxu0 %v201
    %888 = vmatpush1.msra.mxu0 %v200
    %889 = vmatprep.subr.mxu0 %v203
    %890 = vmatpush1.msra.mxu0 %v202
    %891 = vmatprep.subr.mxu0 %v205
    %892 = vmatpush1.msra.mxu0 %v204
    %893 = vmatprep.subr.mxu0 %v207
    %894 = vmatpush1.msra.mxu0 %v206
    %895 = vmatprep.subr.mxu0 %v209
    %896 = vmatpush1.msra.mxu0 %v208
    %897 = vmatprep.subr.mxu0 %v211
    %898 = vmatpush1.msra.mxu0 %v210
    %899 = vmatprep.subr.mxu0 %v213
    %900 = vmatpush1.msra.mxu0 %v212
    %901 = vmatprep.subr.mxu0 %v215
    %902 = vmatpush1.msra.mxu0 %v214
    %903 = vmatprep.subr.mxu0 0.0
    %904 = vmatpush1.msra.mxu0 0.0
    %905 = vmatprep.subr.mxu0 0.0
    %906 = vmatpush1.msra.mxu0 0.0
    %907 = vmatprep.subr.mxu0 0.0
    %908 = vmatpush1.msra.mxu0 0.0
    %909 = vmatprep.subr.mxu0 0.0
    %910 = vmatpush1.msra.mxu0 0.0
    %911 = vmatprep.subr.mxu0 0.0
    %912 = vmatpush1.msra.mxu0 0.0
    %913 = vmatprep.subr.mxu0 0.0
    %914 = vmatpush1.msra.mxu0 0.0
    %915 = vmatprep.subr.mxu0 0.0
    %916 = vmatpush1.msra.mxu0 0.0
    %917 = vmatprep.subr.mxu0 0.0
    %918 = vmatpush1.msra.mxu0 0.0
    %919 = vmatprep.subr.mxu0 0.0
    %920 = vmatpush1.msra.mxu0 0.0
    %921 = vmatprep.subr.mxu0 0.0
    %922 = vmatpush1.msra.mxu0 0.0
    %923 = vmatprep.subr.mxu0 0.0
    %924 = vmatpush1.msra.mxu0 0.0
    %925 = vmatprep.subr.mxu0 0.0
    %926 = vmatpush1.msra.mxu0 0.0
    %927 = vmatprep.subr.mxu0 0.0
    %928 = vmatpush1.msra.mxu0 0.0
    %929 = vmatprep.subr.mxu0 0.0
    %930 = vmatpush1.msra.mxu0 0.0
    %931 = vmatprep.subr.mxu0 0.0
    %932 = vmatpush1.msra.mxu0 0.0
    %933 = vmatprep.subr.mxu0 0.0
    %934 = vmatpush1.msra.mxu0 0.0
    %935 = vmatprep.subr.mxu0 0.0
    %936 = vmatpush1.msra.mxu0 0.0
    %937 = vmatprep.subr.mxu0 0.0
    %938 = vmatpush1.msra.mxu0 0.0
    %939 = vmatprep.subr.mxu0 0.0
    %940 = vmatpush1.msra.mxu0 0.0
    %941 = vmatprep.subr.mxu0 0.0
    %942 = vmatpush1.msra.mxu0 0.0
    %943 = vmatprep.subr.mxu0 0.0
    %944 = vmatpush1.msra.mxu0 0.0
    %945 = vmatprep.subr.mxu0 0.0
    %946 = vmatpush1.msra.mxu0 0.0
    %947 = vmatprep.subr.mxu0 0.0
    %948 = vmatpush1.msra.mxu0 0.0
    %949 = vmatprep.subr.mxu0 0.0
    %950 = vmatpush1.msra.mxu0 0.0
    %951 = vmatprep.mubr.f32.mxu0 0.0
    %952 = vmatmul.mubr.f32.gmra.mrb[0].mxu0 %v885
    %v953 = vpop.f32.mrb[0].mxu0
    %v954 = vadd.f32 0.0, %v953
    %v955 = vpop.f32.mrb[0].mxu0
    %v956 = vadd.f32 0.0, %v955
    %957 = vdwg.mxu0
    %v960 = vrot.slane %v954, 4
    %v961 = vrot.slane %v956, 4
    %v964 = vadd.f32 %v196, %v960
    %v965 = vadd.f32 %v198, %v961
    %v966 = vxor.u32 %v964, 2147483648
    %v967 = vmul.f32 %v966, 1.442695
    %v968 = vpow.pop %v967
    %v969 = vadd.f32 %v968, 1.0
    %v970 = vrcp.pop %v969
    %v971 = vmul.f32 1.0, %v970
    %v972 = vtanh.pop %v965
    %v973 = vxor.u32 %v965, 2147483648
    %v974 = vmul.f32 %v973, 1.442695
    %v975 = vpow.pop %v974
    %v976 = vadd.f32 %v975, 1.0
    %v977 = vrcp.pop %v976
    %v978 = vmul.f32 1.0, %v977
    %v980 = vrot.slane %v874, 6
    %v982 = vmul.f32 %v971, %v980
    %v983 = vmul.f32 %v971, %v972
    %985 = vrot.lane.b32.xlu0 %v983, 64
    %v986 = vpop.permute.xlu0 %985
    %v988 = vadd.f32 %v982, %v986
    %v989 = vtanh.pop %v988
    %v990 = vmul.f32 %v978, %v989
    %992 = vrot.lane.b32.xlu0 %v990, 64
    %v993 = vpop.permute.xlu0 %992
    %995 = vst.msk [vmem:[#allocation3 + $0x8] sm:$0x30] %vm546, %v993
    %v996 = vrot.slane %v990, 4
    %997 = vrot.lane.b32.xlu0 %v996, 64
    %v998 = vpop.permute.xlu0 %997
    %v999 = vsel %vm216, %v998, 0
    %1001 = vmatprep.subr.mxu0 %v201
    %1002 = vmatpush1.msra.mxu0 %v200
    %1003 = vmatprep.subr.mxu0 %v203
    %1004 = vmatpush1.msra.mxu0 %v202
    %1005 = vmatprep.subr.mxu0 %v205
    %1006 = vmatpush1.msra.mxu0 %v204
    %1007 = vmatprep.subr.mxu0 %v207
    %1008 = vmatpush1.msra.mxu0 %v206
    %1009 = vmatprep.subr.mxu0 %v209
    %1010 = vmatpush1.msra.mxu0 %v208
    %1011 = vmatprep.subr.mxu0 %v211
    %1012 = vmatpush1.msra.mxu0 %v210
    %1013 = vmatprep.subr.mxu0 %v213
    %1014 = vmatpush1.msra.mxu0 %v212
    %1015 = vmatprep.subr.mxu0 %v215
    %1016 = vmatpush1.msra.mxu0 %v214
    %1017 = vmatprep.subr.mxu0 0.0
    %1018 = vmatpush1.msra.mxu0 0.0
    %1019 = vmatprep.subr.mxu0 0.0
    %1020 = vmatpush1.msra.mxu0 0.0
    %1021 = vmatprep.subr.mxu0 0.0
    %1022 = vmatpush1.msra.mxu0 0.0
    %1023 = vmatprep.subr.mxu0 0.0
    %1024 = vmatpush1.msra.mxu0 0.0
    %1025 = vmatprep.subr.mxu0 0.0
    %1026 = vmatpush1.msra.mxu0 0.0
    %1027 = vmatprep.subr.mxu0 0.0
    %1028 = vmatpush1.msra.mxu0 0.0
    %1029 = vmatprep.subr.mxu0 0.0
    %1030 = vmatpush1.msra.mxu0 0.0
    %1031 = vmatprep.subr.mxu0 0.0
    %1032 = vmatpush1.msra.mxu0 0.0
    %1033 = vmatprep.subr.mxu0 0.0
    %1034 = vmatpush1.msra.mxu0 0.0
    %1035 = vmatprep.subr.mxu0 0.0
    %1036 = vmatpush1.msra.mxu0 0.0
    %1037 = vmatprep.subr.mxu0 0.0
    %1038 = vmatpush1.msra.mxu0 0.0
    %1039 = vmatprep.subr.mxu0 0.0
    %1040 = vmatpush1.msra.mxu0 0.0
    %1041 = vmatprep.subr.mxu0 0.0
    %1042 = vmatpush1.msra.mxu0 0.0
    %1043 = vmatprep.subr.mxu0 0.0
    %1044 = vmatpush1.msra.mxu0 0.0
    %1045 = vmatprep.subr.mxu0 0.0
    %1046 = vmatpush1.msra.mxu0 0.0
    %1047 = vmatprep.subr.mxu0 0.0
    %1048 = vmatpush1.msra.mxu0 0.0
    %1049 = vmatprep.subr.mxu0 0.0
    %1050 = vmatpush1.msra.mxu0 0.0
    %1051 = vmatprep.subr.mxu0 0.0
    %1052 = vmatpush1.msra.mxu0 0.0
    %1053 = vmatprep.subr.mxu0 0.0
    %1054 = vmatpush1.msra.mxu0 0.0
    %1055 = vmatprep.subr.mxu0 0.0
    %1056 = vmatpush1.msra.mxu0 0.0
    %1057 = vmatprep.subr.mxu0 0.0
    %1058 = vmatpush1.msra.mxu0 0.0
    %1059 = vmatprep.subr.mxu0 0.0
    %1060 = vmatpush1.msra.mxu0 0.0
    %1061 = vmatprep.subr.mxu0 0.0
    %1062 = vmatpush1.msra.mxu0 0.0
    %1063 = vmatprep.subr.mxu0 0.0
    %1064 = vmatpush1.msra.mxu0 0.0
    %1065 = vmatprep.mubr.f32.mxu0 0.0
    %1066 = vmatmul.mubr.f32.gmra.mrb[0].mxu0 %v999
    %v1067 = vpop.f32.mrb[0].mxu0
    %v1068 = vadd.f32 0.0, %v1067
    %v1069 = vpop.f32.mrb[0].mxu0
    %v1070 = vadd.f32 0.0, %v1069
    %1071 = vdwg.mxu0
    %v1074 = vrot.slane %v1068, 2
    %v1075 = vrot.slane %v1070, 2
    %v1078 = vadd.f32 %v196, %v1074
    %v1079 = vadd.f32 %v198, %v1075
    %v1080 = vxor.u32 %v1078, 2147483648
    %v1081 = vmul.f32 %v1080, 1.442695
    %v1082 = vpow.pop %v1081
    %v1083 = vadd.f32 %v1082, 1.0
    %v1084 = vrcp.pop %v1083
    %v1085 = vmul.f32 1.0, %v1084
    %v1086 = vtanh.pop %v1079
    %v1087 = vxor.u32 %v1079, 2147483648
    %v1088 = vmul.f32 %v1087, 1.442695
    %v1089 = vpow.pop %v1088
    %v1090 = vadd.f32 %v1089, 1.0
    %v1091 = vrcp.pop %v1090
    %v1092 = vmul.f32 1.0, %v1091
    %v1094 = vrot.slane %v988, 6
    %v1096 = vmul.f32 %v1085, %v1094
    %v1097 = vmul.f32 %v1085, %v1086
    %1099 = vrot.lane.b32.xlu0 %v1097, 64
    %v1100 = vpop.permute.xlu0 %1099
    %v1102 = vadd.f32 %v1096, %v1100
    %v1103 = vtanh.pop %v1102
    %v1104 = vmul.f32 %v1092, %v1103
    %1106 = vrot.lane.b32.xlu0 %v1104, 64
    %v1107 = vpop.permute.xlu0 %1106
    %1109 = vst.msk [vmem:[#allocation3 + $0x8] sm:$0xc0] %vm661, %v1107
    %v1110 = vld [vmem:[#allocation3] sm:$0xff]
    %v1111 = vld [vmem:[#allocation3 + $0x8] sm:$0xff]
    %v1112 = vld [vmem:[#allocation4] sm:$0xff]
    %v1113 = vld [vmem:[#allocation4 + $0x8] sm:$0xff]
    %v1114 = vld [vmem:[#allocation4 + $0x10] sm:$0xff]
    %v1115 = vld [vmem:[#allocation4 + $0x18] sm:$0xff]
    %v1116 = vld [vmem:[#allocation4 + $0x20] sm:$0xff]
    %v1117 = vld [vmem:[#allocation4 + $0x28] sm:$0xff]
    %v1118 = vld [vmem:[#allocation4 + $0x30] sm:$0xff]
    %v1119 = vld [vmem:[#allocation4 + $0x38] sm:$0xff]
    %v1120 = vld [vmem:[#allocation4 + $0x40] sm:$0xff]
    %v1121 = vld [vmem:[#allocation4 + $0x48] sm:$0xff]
    %v1122 = vld [vmem:[#allocation4 + $0x50] sm:$0xff]
    %v1123 = vld [vmem:[#allocation4 + $0x58] sm:$0xff]
    %v1124 = vld [vmem:[#allocation4 + $0x60] sm:$0xff]
    %v1125 = vld [vmem:[#allocation4 + $0x68] sm:$0xff]
    %v1126 = vld [vmem:[#allocation4 + $0x70] sm:$0xff]
    %v1127 = vld [vmem:[#allocation4 + $0x78] sm:$0xff]
    %v1128 = vld [vmem:[%s6] sm:$0x3]
    %v1130 = vlaneseq
    %v1131 = vshrl.u32 %v1130, 7
    %v1132 = vsub.s32 0, %v1131
    %v1133 = vrot.slane %v1128, %v1132
    %v1134 = vlaneseq
    %v1135 = vshrl.u32 %v1134, 7
    %v1136 = vsub.s32 1, %v1135
    %v1137 = vrot.slane %v1128, %v1136
    %v1141 = vsel %vm216, %v1110, 0
    %v1144 = vsel %vm216, %v1111, 0
    %1146 = vmatprep.subr.mxu0 %v1113
    %1147 = vmatpush1.msra.mxu0 %v1112
    %1148 = vmatprep.subr.mxu0 %v1115
    %1149 = vmatpush1.msra.mxu0 %v1114
    %1150 = vmatprep.subr.mxu0 %v1117
    %1151 = vmatpush1.msra.mxu0 %v1116
    %1152 = vmatprep.subr.mxu0 %v1119
    %1153 = vmatpush1.msra.mxu0 %v1118
    %1154 = vmatprep.subr.mxu0 %v1121
    %1155 = vmatpush1.msra.mxu0 %v1120
    %1156 = vmatprep.subr.mxu0 %v1123
    %1157 = vmatpush1.msra.mxu0 %v1122
    %1158 = vmatprep.subr.mxu0 %v1125
    %1159 = vmatpush1.msra.mxu0 %v1124
    %1160 = vmatprep.subr.mxu0 %v1127
    %1161 = vmatpush1.msra.mxu0 %v1126
    %1162 = vmatprep.subr.mxu0 0.0
    %1163 = vmatpush1.msra.mxu0 0.0
    %1164 = vmatprep.subr.mxu0 0.0
    %1165 = vmatpush1.msra.mxu0 0.0
    %1166 = vmatprep.subr.mxu0 0.0
    %1167 = vmatpush1.msra.mxu0 0.0
    %1168 = vmatprep.subr.mxu0 0.0
    %1169 = vmatpush1.msra.mxu0 0.0
    %1170 = vmatprep.subr.mxu0 0.0
    %1171 = vmatpush1.msra.mxu0 0.0
    %1172 = vmatprep.subr.mxu0 0.0
    %1173 = vmatpush1.msra.mxu0 0.0
    %1174 = vmatprep.subr.mxu0 0.0
    %1175 = vmatpush1.msra.mxu0 0.0
    %1176 = vmatprep.subr.mxu0 0.0
    %1177 = vmatpush1.msra.mxu0 0.0
    %1178 = vmatprep.subr.mxu0 0.0
    %1179 = vmatpush1.msra.mxu0 0.0
    %1180 = vmatprep.subr.mxu0 0.0
    %1181 = vmatpush1.msra.mxu0 0.0
    %1182 = vmatprep.subr.mxu0 0.0
    %1183 = vmatpush1.msra.mxu0 0.0
    %1184 = vmatprep.subr.mxu0 0.0
    %1185 = vmatpush1.msra.mxu0 0.0
    %1186 = vmatprep.subr.mxu0 0.0
    %1187 = vmatpush1.msra.mxu0 0.0
    %1188 = vmatprep.subr.mxu0 0.0
    %1189 = vmatpush1.msra.mxu0 0.0
    %1190 = vmatprep.subr.mxu0 0.0
    %1191 = vmatpush1.msra.mxu0 0.0
    %1192 = vmatprep.subr.mxu0 0.0
    %1193 = vmatpush1.msra.mxu0 0.0
    %1194 = vmatprep.subr.mxu0 0.0
    %1195 = vmatpush1.msra.mxu0 0.0
    %1196 = vmatprep.subr.mxu0 0.0
    %1197 = vmatpush1.msra.mxu0 0.0
    %1198 = vmatprep.subr.mxu0 0.0
    %1199 = vmatpush1.msra.mxu0 0.0
    %1200 = vmatprep.subr.mxu0 0.0
    %1201 = vmatpush1.msra.mxu0 0.0
    %1202 = vmatprep.subr.mxu0 0.0
    %1203 = vmatpush1.msra.mxu0 0.0
    %1204 = vmatprep.subr.mxu0 0.0
    %1205 = vmatpush1.msra.mxu0 0.0
    %1206 = vmatprep.subr.mxu0 0.0
    %1207 = vmatpush1.msra.mxu0 0.0
    %1208 = vmatprep.subr.mxu0 0.0
    %1209 = vmatpush1.msra.mxu0 0.0
    %1210 = vmatprep.mubr.f32.mxu0 0.0
    %1211 = vmatmul.mubr.f32.gmra.mrb[0].mxu0 %v1141
    %v1212 = vpop.f32.mrb[0].mxu0
    %v1213 = vadd.f32 %v1133, %v1212
    %v1214 = vpop.f32.mrb[0].mxu0
    %v1215 = vadd.f32 %v1137, %v1214
    %1216 = vmatprep.mubr.f32.mxu0 0.0
    %1217 = vmatmul.mubr.f32.gmra.mrb[0].mxu0 %v1144
    %v1218 = vpop.f32.mrb[0].mxu0
    %v1219 = vadd.f32 %v1133, %v1218
    %v1220 = vpop.f32.mrb[0].mxu0
    %v1221 = vadd.f32 %v1137, %v1220
    %1222 = vdwg.mxu0
    %v1223 = vld [vmem:[#allocation6] sm:$0xff]
    %v1224 = vld [vmem:[#allocation6 + $0x8] sm:$0xff]
    %v1225 = vld [vmem:[#allocation6 + $0x10] sm:$0xff]
    %v1226 = vld [vmem:[#allocation6 + $0x18] sm:$0xff]
    %v1227 = vld [vmem:[#allocation6 + $0x20] sm:$0xff]
    %v1228 = vld [vmem:[#allocation6 + $0x28] sm:$0xff]
    %v1229 = vld [vmem:[#allocation6 + $0x30] sm:$0xff]
    %v1230 = vld [vmem:[#allocation6 + $0x38] sm:$0xff]
    %v1231 = vld [vmem:[#allocation6 + $0x40] sm:$0xff]
    %v1232 = vld [vmem:[#allocation6 + $0x48] sm:$0xff]
    %v1233 = vld [vmem:[#allocation6 + $0x50] sm:$0xff]
    %v1234 = vld [vmem:[#allocation6 + $0x58] sm:$0xff]
    %v1235 = vld [vmem:[#allocation6 + $0x60] sm:$0xff]
    %v1236 = vld [vmem:[#allocation6 + $0x68] sm:$0xff]
    %v1237 = vld [vmem:[#allocation6 + $0x70] sm:$0xff]
    %v1238 = vld [vmem:[#allocation6 + $0x78] sm:$0xff]
    %1239 = vmatprep.subr.mxu0 %v1224
    %1240 = vmatpush1.msra.mxu0 %v1223
    %1241 = vmatprep.subr.mxu0 %v1226
    %1242 = vmatpush1.msra.mxu0 %v1225
    %1243 = vmatprep.subr.mxu0 %v1228
    %1244 = vmatpush1.msra.mxu0 %v1227
    %1245 = vmatprep.subr.mxu0 %v1230
    %1246 = vmatpush1.msra.mxu0 %v1229
    %1247 = vmatprep.subr.mxu0 %v1232
    %1248 = vmatpush1.msra.mxu0 %v1231
    %1249 = vmatprep.subr.mxu0 %v1234
    %1250 = vmatpush1.msra.mxu0 %v1233
    %1251 = vmatprep.subr.mxu0 %v1236
    %1252 = vmatpush1.msra.mxu0 %v1235
    %1253 = vmatprep.subr.mxu0 %v1238
    %1254 = vmatpush1.msra.mxu0 %v1237
    %1255 = vmatprep.subr.mxu0 0.0
    %1256 = vmatpush1.msra.mxu0 0.0
    %1257 = vmatprep.subr.mxu0 0.0
    %1258 = vmatpush1.msra.mxu0 0.0
    %1259 = vmatprep.subr.mxu0 0.0
    %1260 = vmatpush1.msra.mxu0 0.0
    %1261 = vmatprep.subr.mxu0 0.0
    %1262 = vmatpush1.msra.mxu0 0.0
    %1263 = vmatprep.subr.mxu0 0.0
    %1264 = vmatpush1.msra.mxu0 0.0
    %1265 = vmatprep.subr.mxu0 0.0
    %1266 = vmatpush1.msra.mxu0 0.0
    %1267 = vmatprep.subr.mxu0 0.0
    %1268 = vmatpush1.msra.mxu0 0.0
    %1269 = vmatprep.subr.mxu0 0.0
    %1270 = vmatpush1.msra.mxu0 0.0
    %1271 = vmatprep.subr.mxu0 0.0
    %1272 = vmatpush1.msra.mxu0 0.0
    %1273 = vmatprep.subr.mxu0 0.0
    %1274 = vmatpush1.msra.mxu0 0.0
    %1275 = vmatprep.subr.mxu0 0.0
    %1276 = vmatpush1.msra.mxu0 0.0
    %1277 = vmatprep.subr.mxu0 0.0
    %1278 = vmatpush1.msra.mxu0 0.0
    %1279 = vmatprep.subr.mxu0 0.0
    %1280 = vmatpush1.msra.mxu0 0.0
    %1281 = vmatprep.subr.mxu0 0.0
    %1282 = vmatpush1.msra.mxu0 0.0
    %1283 = vmatprep.subr.mxu0 0.0
    %1284 = vmatpush1.msra.mxu0 0.0
    %1285 = vmatprep.subr.mxu0 0.0
    %1286 = vmatpush1.msra.mxu0 0.0
    %1287 = vmatprep.subr.mxu0 0.0
    %1288 = vmatpush1.msra.mxu0 0.0
    %1289 = vmatprep.subr.mxu0 0.0
    %1290 = vmatpush1.msra.mxu0 0.0
    %1291 = vmatprep.subr.mxu0 0.0
    %1292 = vmatpush1.msra.mxu0 0.0
    %1293 = vmatprep.subr.mxu0 0.0
    %1294 = vmatpush1.msra.mxu0 0.0
    %1295 = vmatprep.subr.mxu0 0.0
    %1296 = vmatpush1.msra.mxu0 0.0
    %1297 = vmatprep.subr.mxu0 0.0
    %1298 = vmatpush1.msra.mxu0 0.0
    %1299 = vmatprep.subr.mxu0 0.0
    %1300 = vmatpush1.msra.mxu0 0.0
    %1301 = vmatprep.subr.mxu0 0.0
    %1302 = vmatpush1.msra.mxu0 0.0
    %1303 = vmatprep.mubr.f32.mxu0 0.0
    %1304 = vmatmul.mubr.f32.gmra.mrb[0].mxu0 %v218
    %v1305 = vpop.f32.mrb[0].mxu0
    %v1306 = vadd.f32 0.0, %v1305
    %v1307 = vpop.f32.mrb[0].mxu0
    %v1308 = vadd.f32 0.0, %v1307
    %1309 = vdwg.mxu0
    %v1310 = vadd.f32 %v1213, %v1306
    %v1311 = vadd.f32 %v1215, %v1308
    %v1312 = vxor.u32 %v1310, 2147483648
    %v1313 = vmul.f32 %v1312, 1.442695
    %v1314 = vpow.pop %v1313
    %v1315 = vadd.f32 %v1314, 1.0
    %v1316 = vrcp.pop %v1315
    %v1317 = vmul.f32 1.0, %v1316
    %v1318 = vtanh.pop %v1311
    %v1319 = vxor.u32 %v1311, 2147483648
    %v1320 = vmul.f32 %v1319, 1.442695
    %v1321 = vpow.pop %v1320
    %v1322 = vadd.f32 %v1321, 1.0
    %v1323 = vrcp.pop %v1322
    %v1324 = vmul.f32 1.0, %v1323
    %v1325 = vmul.f32 %v1317, 0.0
    %v1326 = vmul.f32 %v1317, %v1318
    %1328 = vrot.lane.b32.xlu0 %v1326, 64
    %v1329 = vpop.permute.xlu0 %1328
    %v1331 = vadd.f32 %v1325, %v1329
    %v1332 = vtanh.pop %v1331
    %v1333 = vmul.f32 %v1324, %v1332
    %1335 = vrot.lane.b32.xlu0 %v1333, 64
    %v1336 = vpop.permute.xlu0 %1335
    %vm1338 = vcmask 516096
    %1339 = vst.msk [vmem:[#allocation3] sm:$0x1] %vm1338, %v1336
    %vm1340 = vcmask 517121
    %1341 = vst.msk [vmem:[#allocation3 + $0x7] sm:$0x2] %vm1340, %v1336
    %v1342 = vsel %vm216, %v1336, 0
    %1344 = vmatprep.subr.mxu0 %v1224
    %1345 = vmatpush1.msra.mxu0 %v1223
    %1346 = vmatprep.subr.mxu0 %v1226
    %1347 = vmatpush1.msra.mxu0 %v1225
    %1348 = vmatprep.subr.mxu0 %v1228
    %1349 = vmatpush1.msra.mxu0 %v1227
    %1350 = vmatprep.subr.mxu0 %v1230
    %1351 = vmatpush1.msra.mxu0 %v1229
    %1352 = vmatprep.subr.mxu0 %v1232
    %1353 = vmatpush1.msra.mxu0 %v1231
    %1354 = vmatprep.subr.mxu0 %v1234
    %1355 = vmatpush1.msra.mxu0 %v1233
    %1356 = vmatprep.subr.mxu0 %v1236
    %1357 = vmatpush1.msra.mxu0 %v1235
    %1358 = vmatprep.subr.mxu0 %v1238
    %1359 = vmatpush1.msra.mxu0 %v1237
    %1360 = vmatprep.subr.mxu0 0.0
    %1361 = vmatpush1.msra.mxu0 0.0
    %1362 = vmatprep.subr.mxu0 0.0
    %1363 = vmatpush1.msra.mxu0 0.0
    %1364 = vmatprep.subr.mxu0 0.0
    %1365 = vmatpush1.msra.mxu0 0.0
    %1366 = vmatprep.subr.mxu0 0.0
    %1367 = vmatpush1.msra.mxu0 0.0
    %1368 = vmatprep.subr.mxu0 0.0
    %1369 = vmatpush1.msra.mxu0 0.0
    %1370 = vmatprep.subr.mxu0 0.0
    %1371 = vmatpush1.msra.mxu0 0.0
    %1372 = vmatprep.subr.mxu0 0.0
    %1373 = vmatpush1.msra.mxu0 0.0
    %1374 = vmatprep.subr.mxu0 0.0
    %1375 = vmatpush1.msra.mxu0 0.0
    %1376 = vmatprep.subr.mxu0 0.0
    %1377 = vmatpush1.msra.mxu0 0.0
    %1378 = vmatprep.subr.mxu0 0.0
    %1379 = vmatpush1.msra.mxu0 0.0
    %1380 = vmatprep.subr.mxu0 0.0
    %1381 = vmatpush1.msra.mxu0 0.0
    %1382 = vmatprep.subr.mxu0 0.0
    %1383 = vmatpush1.msra.mxu0 0.0
    %1384 = vmatprep.subr.mxu0 0.0
    %1385 = vmatpush1.msra.mxu0 0.0
    %1386 = vmatprep.subr.mxu0 0.0
    %1387 = vmatpush1.msra.mxu0 0.0
    %1388 = vmatprep.subr.mxu0 0.0
    %1389 = vmatpush1.msra.mxu0 0.0
    %1390 = vmatprep.subr.mxu0 0.0
    %1391 = vmatpush1.msra.mxu0 0.0
    %1392 = vmatprep.subr.mxu0 0.0
    %1393 = vmatpush1.msra.mxu0 0.0
    %1394 = vmatprep.subr.mxu0 0.0
    %1395 = vmatpush1.msra.mxu0 0.0
    %1396 = vmatprep.subr.mxu0 0.0
    %1397 = vmatpush1.msra.mxu0 0.0
    %1398 = vmatprep.subr.mxu0 0.0
    %1399 = vmatpush1.msra.mxu0 0.0
    %1400 = vmatprep.subr.mxu0 0.0
    %1401 = vmatpush1.msra.mxu0 0.0
    %1402 = vmatprep.subr.mxu0 0.0
    %1403 = vmatpush1.msra.mxu0 0.0
    %1404 = vmatprep.subr.mxu0 0.0
    %1405 = vmatpush1.msra.mxu0 0.0
    %1406 = vmatprep.subr.mxu0 0.0
    %1407 = vmatpush1.msra.mxu0 0.0
    %1408 = vmatprep.mubr.f32.mxu0 0.0
    %1409 = vmatmul.mubr.f32.gmra.mrb[0].mxu0 %v1342
    %v1410 = vpop.f32.mrb[0].mxu0
    %v1411 = vadd.f32 0.0, %v1410
    %v1412 = vpop.f32.mrb[0].mxu0
    %v1413 = vadd.f32 0.0, %v1412
    %1414 = vdwg.mxu0
    %v1417 = vrot.slane %v1411, 6
    %v1418 = vrot.slane %v1413, 6
    %v1421 = vadd.f32 %v1213, %v1417
    %v1422 = vadd.f32 %v1215, %v1418
    %v1423 = vxor.u32 %v1421, 2147483648
    %v1424 = vmul.f32 %v1423, 1.442695
    %v1425 = vpow.pop %v1424
    %v1426 = vadd.f32 %v1425, 1.0
    %v1427 = vrcp.pop %v1426
    %v1428 = vmul.f32 1.0, %v1427
    %v1429 = vtanh.pop %v1422
    %v1430 = vxor.u32 %v1422, 2147483648
    %v1431 = vmul.f32 %v1430, 1.442695
    %v1432 = vpow.pop %v1431
    %v1433 = vadd.f32 %v1432, 1.0
    %v1434 = vrcp.pop %v1433
    %v1435 = vmul.f32 1.0, %v1434
    %v1437 = vrot.slane %v1331, 6
    %v1439 = vmul.f32 %v1428, %v1437
    %v1440 = vmul.f32 %v1428, %v1429
    %1442 = vrot.lane.b32.xlu0 %v1440, 64
    %v1443 = vpop.permute.xlu0 %1442
    %v1445 = vadd.f32 %v1439, %v1443
    %v1446 = vtanh.pop %v1445
    %v1447 = vmul.f32 %v1435, %v1446
    %1449 = vrot.lane.b32.xlu0 %v1447, 64
    %v1450 = vpop.permute.xlu0 %1449
    %vm1452 = vcmask 518146
    %1453 = vst.msk [vmem:[#allocation3 - $0x1] sm:$0x4] %vm1452, %v1450
    %vm1454 = vcmask 519171
    %1455 = vst.msk [vmem:[#allocation3 + $0x6] sm:$0x8] %vm1454, %v1450
    %v1456 = vrot.slane %v1447, 2
    %1457 = vrot.lane.b32.xlu0 %v1456, 64
    %v1458 = vpop.permute.xlu0 %1457
    %v1459 = vsel %vm216, %v1458, 0
    %1461 = vmatprep.subr.mxu0 %v1224
    %1462 = vmatpush1.msra.mxu0 %v1223
    %1463 = vmatprep.subr.mxu0 %v1226
    %1464 = vmatpush1.msra.mxu0 %v1225
    %1465 = vmatprep.subr.mxu0 %v1228
    %1466 = vmatpush1.msra.mxu0 %v1227
    %1467 = vmatprep.subr.mxu0 %v1230
    %1468 = vmatpush1.msra.mxu0 %v1229
    %1469 = vmatprep.subr.mxu0 %v1232
    %1470 = vmatpush1.msra.mxu0 %v1231
    %1471 = vmatprep.subr.mxu0 %v1234
    %1472 = vmatpush1.msra.mxu0 %v1233
    %1473 = vmatprep.subr.mxu0 %v1236
    %1474 = vmatpush1.msra.mxu0 %v1235
    %1475 = vmatprep.subr.mxu0 %v1238
    %1476 = vmatpush1.msra.mxu0 %v1237
    %1477 = vmatprep.subr.mxu0 0.0
    %1478 = vmatpush1.msra.mxu0 0.0
    %1479 = vmatprep.subr.mxu0 0.0
    %1480 = vmatpush1.msra.mxu0 0.0
    %1481 = vmatprep.subr.mxu0 0.0
    %1482 = vmatpush1.msra.mxu0 0.0
    %1483 = vmatprep.subr.mxu0 0.0
    %1484 = vmatpush1.msra.mxu0 0.0
    %1485 = vmatprep.subr.mxu0 0.0
    %1486 = vmatpush1.msra.mxu0 0.0
    %1487 = vmatprep.subr.mxu0 0.0
    %1488 = vmatpush1.msra.mxu0 0.0
    %1489 = vmatprep.subr.mxu0 0.0
    %1490 = vmatpush1.msra.mxu0 0.0
    %1491 = vmatprep.subr.mxu0 0.0
    %1492 = vmatpush1.msra.mxu0 0.0
    %1493 = vmatprep.subr.mxu0 0.0
    %1494 = vmatpush1.msra.mxu0 0.0
    %1495 = vmatprep.subr.mxu0 0.0
    %1496 = vmatpush1.msra.mxu0 0.0
    %1497 = vmatprep.subr.mxu0 0.0
    %1498 = vmatpush1.msra.mxu0 0.0
    %1499 = vmatprep.subr.mxu0 0.0
    %1500 = vmatpush1.msra.mxu0 0.0
    %1501 = vmatprep.subr.mxu0 0.0
    %1502 = vmatpush1.msra.mxu0 0.0
    %1503 = vmatprep.subr.mxu0 0.0
    %1504 = vmatpush1.msra.mxu0 0.0
    %1505 = vmatprep.subr.mxu0 0.0
    %1506 = vmatpush1.msra.mxu0 0.0
    %1507 = vmatprep.subr.mxu0 0.0
    %1508 = vmatpush1.msra.mxu0 0.0
    %1509 = vmatprep.subr.mxu0 0.0
    %1510 = vmatpush1.msra.mxu0 0.0
    %1511 = vmatprep.subr.mxu0 0.0
    %1512 = vmatpush1.msra.mxu0 0.0
    %1513 = vmatprep.subr.mxu0 0.0
    %1514 = vmatpush1.msra.mxu0 0.0
    %1515 = vmatprep.subr.mxu0 0.0
    %1516 = vmatpush1.msra.mxu0 0.0
    %1517 = vmatprep.subr.mxu0 0.0
    %1518 = vmatpush1.msra.mxu0 0.0
    %1519 = vmatprep.subr.mxu0 0.0
    %1520 = vmatpush1.msra.mxu0 0.0
    %1521 = vmatprep.subr.mxu0 0.0
    %1522 = vmatpush1.msra.mxu0 0.0
    %1523 = vmatprep.subr.mxu0 0.0
    %1524 = vmatpush1.msra.mxu0 0.0
    %1525 = vmatprep.mubr.f32.mxu0 0.0
    %1526 = vmatmul.mubr.f32.gmra.mrb[0].mxu0 %v1459
    %v1527 = vpop.f32.mrb[0].mxu0
    %v1528 = vadd.f32 0.0, %v1527
    %v1529 = vpop.f32.mrb[0].mxu0
    %v1530 = vadd.f32 0.0, %v1529
    %1531 = vdwg.mxu0
    %v1534 = vrot.slane %v1528, 4
    %v1535 = vrot.slane %v1530, 4
    %v1538 = vadd.f32 %v1213, %v1534
    %v1539 = vadd.f32 %v1215, %v1535
    %v1540 = vxor.u32 %v1538, 2147483648
    %v1541 = vmul.f32 %v1540, 1.442695
    %v1542 = vpow.pop %v1541
    %v1543 = vadd.f32 %v1542, 1.0
    %v1544 = vrcp.pop %v1543
    %v1545 = vmul.f32 1.0, %v1544
    %v1546 = vtanh.pop %v1539
    %v1547 = vxor.u32 %v1539, 2147483648
    %v1548 = vmul.f32 %v1547, 1.442695
    %v1549 = vpow.pop %v1548
    %v1550 = vadd.f32 %v1549, 1.0
    %v1551 = vrcp.pop %v1550
    %v1552 = vmul.f32 1.0, %v1551
    %v1554 = vrot.slane %v1445, 6
    %v1556 = vmul.f32 %v1545, %v1554
    %v1557 = vmul.f32 %v1545, %v1546
    %1559 = vrot.lane.b32.xlu0 %v1557, 64
    %v1560 = vpop.permute.xlu0 %1559
    %v1562 = vadd.f32 %v1556, %v1560
    %v1563 = vtanh.pop %v1562
    %v1564 = vmul.f32 %v1552, %v1563
    %1566 = vrot.lane.b32.xlu0 %v1564, 64
    %v1567 = vpop.permute.xlu0 %1566
    %vm1569 = vcmask 520196
    %1570 = vst.msk [vmem:[#allocation3 - $0x2] sm:$0x10] %vm1569, %v1567
    %vm1571 = vcmask 521221
    %1572 = vst.msk [vmem:[#allocation3 + $0x5] sm:$0x20] %vm1571, %v1567
    %v1573 = vrot.slane %v1564, 4
    %1574 = vrot.lane.b32.xlu0 %v1573, 64
    %v1575 = vpop.permute.xlu0 %1574
    %v1576 = vsel %vm216, %v1575, 0
    %1578 = vmatprep.subr.mxu0 %v1224
    %1579 = vmatpush1.msra.mxu0 %v1223
    %1580 = vmatprep.subr.mxu0 %v1226
    %1581 = vmatpush1.msra.mxu0 %v1225
    %1582 = vmatprep.subr.mxu0 %v1228
    %1583 = vmatpush1.msra.mxu0 %v1227
    %1584 = vmatprep.subr.mxu0 %v1230
    %1585 = vmatpush1.msra.mxu0 %v1229
    %1586 = vmatprep.subr.mxu0 %v1232
    %1587 = vmatpush1.msra.mxu0 %v1231
    %1588 = vmatprep.subr.mxu0 %v1234
    %1589 = vmatpush1.msra.mxu0 %v1233
    %1590 = vmatprep.subr.mxu0 %v1236
    %1591 = vmatpush1.msra.mxu0 %v1235
    %1592 = vmatprep.subr.mxu0 %v1238
    %1593 = vmatpush1.msra.mxu0 %v1237
    %1594 = vmatprep.subr.mxu0 0.0
    %1595 = vmatpush1.msra.mxu0 0.0
    %1596 = vmatprep.subr.mxu0 0.0
    %1597 = vmatpush1.msra.mxu0 0.0
    %1598 = vmatprep.subr.mxu0 0.0
    %1599 = vmatpush1.msra.mxu0 0.0
    %1600 = vmatprep.subr.mxu0 0.0
    %1601 = vmatpush1.msra.mxu0 0.0
    %1602 = vmatprep.subr.mxu0 0.0
    %1603 = vmatpush1.msra.mxu0 0.0
    %1604 = vmatprep.subr.mxu0 0.0
    %1605 = vmatpush1.msra.mxu0 0.0
    %1606 = vmatprep.subr.mxu0 0.0
    %1607 = vmatpush1.msra.mxu0 0.0
    %1608 = vmatprep.subr.mxu0 0.0
    %1609 = vmatpush1.msra.mxu0 0.0
    %1610 = vmatprep.subr.mxu0 0.0
    %1611 = vmatpush1.msra.mxu0 0.0
    %1612 = vmatprep.subr.mxu0 0.0
    %1613 = vmatpush1.msra.mxu0 0.0
    %1614 = vmatprep.subr.mxu0 0.0
    %1615 = vmatpush1.msra.mxu0 0.0
    %1616 = vmatprep.subr.mxu0 0.0
    %1617 = vmatpush1.msra.mxu0 0.0
    %1618 = vmatprep.subr.mxu0 0.0
    %1619 = vmatpush1.msra.mxu0 0.0
    %1620 = vmatprep.subr.mxu0 0.0
    %1621 = vmatpush1.msra.mxu0 0.0
    %1622 = vmatprep.subr.mxu0 0.0
    %1623 = vmatpush1.msra.mxu0 0.0
    %1624 = vmatprep.subr.mxu0 0.0
    %1625 = vmatpush1.msra.mxu0 0.0
    %1626 = vmatprep.subr.mxu0 0.0
    %1627 = vmatpush1.msra.mxu0 0.0
    %1628 = vmatprep.subr.mxu0 0.0
    %1629 = vmatpush1.msra.mxu0 0.0
    %1630 = vmatprep.subr.mxu0 0.0
    %1631 = vmatpush1.msra.mxu0 0.0
    %1632 = vmatprep.subr.mxu0 0.0
    %1633 = vmatpush1.msra.mxu0 0.0
    %1634 = vmatprep.subr.mxu0 0.0
    %1635 = vmatpush1.msra.mxu0 0.0
    %1636 = vmatprep.subr.mxu0 0.0
    %1637 = vmatpush1.msra.mxu0 0.0
    %1638 = vmatprep.subr.mxu0 0.0
    %1639 = vmatpush1.msra.mxu0 0.0
    %1640 = vmatprep.subr.mxu0 0.0
    %1641 = vmatpush1.msra.mxu0 0.0
    %1642 = vmatprep.mubr.f32.mxu0 0.0
    %1643 = vmatmul.mubr.f32.gmra.mrb[0].mxu0 %v1576
    %v1644 = vpop.f32.mrb[0].mxu0
    %v1645 = vadd.f32 0.0, %v1644
    %v1646 = vpop.f32.mrb[0].mxu0
    %v1647 = vadd.f32 0.0, %v1646
    %1648 = vdwg.mxu0
    %v1651 = vrot.slane %v1645, 2
    %v1652 = vrot.slane %v1647, 2
    %v1655 = vadd.f32 %v1213, %v1651
    %v1656 = vadd.f32 %v1215, %v1652
    %v1657 = vxor.u32 %v1655, 2147483648
    %v1658 = vmul.f32 %v1657, 1.442695
    %v1659 = vpow.pop %v1658
    %v1660 = vadd.f32 %v1659, 1.0
    %v1661 = vrcp.pop %v1660
    %v1662 = vmul.f32 1.0, %v1661
    %v1663 = vtanh.pop %v1656
    %v1664 = vxor.u32 %v1656, 2147483648
    %v1665 = vmul.f32 %v1664, 1.442695
    %v1666 = vpow.pop %v1665
    %v1667 = vadd.f32 %v1666, 1.0
    %v1668 = vrcp.pop %v1667
    %v1669 = vmul.f32 1.0, %v1668
    %v1671 = vrot.slane %v1562, 6
    %v1673 = vmul.f32 %v1662, %v1671
    %v1674 = vmul.f32 %v1662, %v1663
    %1676 = vrot.lane.b32.xlu0 %v1674, 64
    %v1677 = vpop.permute.xlu0 %1676
    %v1679 = vadd.f32 %v1673, %v1677
    %v1680 = vtanh.pop %v1679
    %v1681 = vmul.f32 %v1669, %v1680
    %1683 = vrot.lane.b32.xlu0 %v1681, 64
    %v1684 = vpop.permute.xlu0 %1683
    %vm1686 = vcmask 522246
    %1687 = vst.msk [vmem:[#allocation3 - $0x3] sm:$0x40] %vm1686, %v1684
    %vm1688 = vcmask 523271
    %1689 = vst.msk [vmem:[#allocation3 + $0x4] sm:$0x80] %vm1688, %v1684
    %v1690 = vrot.slane %v1681, 6
    %1691 = vrot.lane.b32.xlu0 %v1690, 64
    %v1692 = vpop.permute.xlu0 %1691
    %v1693 = vsel %vm216, %v1692, 0
    %1695 = vmatprep.subr.mxu0 %v1224
    %1696 = vmatpush1.msra.mxu0 %v1223
    %1697 = vmatprep.subr.mxu0 %v1226
    %1698 = vmatpush1.msra.mxu0 %v1225
    %1699 = vmatprep.subr.mxu0 %v1228
    %1700 = vmatpush1.msra.mxu0 %v1227
    %1701 = vmatprep.subr.mxu0 %v1230
    %1702 = vmatpush1.msra.mxu0 %v1229
    %1703 = vmatprep.subr.mxu0 %v1232
    %1704 = vmatpush1.msra.mxu0 %v1231
    %1705 = vmatprep.subr.mxu0 %v1234
    %1706 = vmatpush1.msra.mxu0 %v1233
    %1707 = vmatprep.subr.mxu0 %v1236
    %1708 = vmatpush1.msra.mxu0 %v1235
    %1709 = vmatprep.subr.mxu0 %v1238
    %1710 = vmatpush1.msra.mxu0 %v1237
    %1711 = vmatprep.subr.mxu0 0.0
    %1712 = vmatpush1.msra.mxu0 0.0
    %1713 = vmatprep.subr.mxu0 0.0
    %1714 = vmatpush1.msra.mxu0 0.0
    %1715 = vmatprep.subr.mxu0 0.0
    %1716 = vmatpush1.msra.mxu0 0.0
    %1717 = vmatprep.subr.mxu0 0.0
    %1718 = vmatpush1.msra.mxu0 0.0
    %1719 = vmatprep.subr.mxu0 0.0
    %1720 = vmatpush1.msra.mxu0 0.0
    %1721 = vmatprep.subr.mxu0 0.0
    %1722 = vmatpush1.msra.mxu0 0.0
    %1723 = vmatprep.subr.mxu0 0.0
    %1724 = vmatpush1.msra.mxu0 0.0
    %1725 = vmatprep.subr.mxu0 0.0
    %1726 = vmatpush1.msra.mxu0 0.0
    %1727 = vmatprep.subr.mxu0 0.0
    %1728 = vmatpush1.msra.mxu0 0.0
    %1729 = vmatprep.subr.mxu0 0.0
    %1730 = vmatpush1.msra.mxu0 0.0
    %1731 = vmatprep.subr.mxu0 0.0
    %1732 = vmatpush1.msra.mxu0 0.0
    %1733 = vmatprep.subr.mxu0 0.0
    %1734 = vmatpush1.msra.mxu0 0.0
    %1735 = vmatprep.subr.mxu0 0.0
    %1736 = vmatpush1.msra.mxu0 0.0
    %1737 = vmatprep.subr.mxu0 0.0
    %1738 = vmatpush1.msra.mxu0 0.0
    %1739 = vmatprep.subr.mxu0 0.0
    %1740 = vmatpush1.msra.mxu0 0.0
    %1741 = vmatprep.subr.mxu0 0.0
    %1742 = vmatpush1.msra.mxu0 0.0
    %1743 = vmatprep.subr.mxu0 0.0
    %1744 = vmatpush1.msra.mxu0 0.0
    %1745 = vmatprep.subr.mxu0 0.0
    %1746 = vmatpush1.msra.mxu0 0.0
    %1747 = vmatprep.subr.mxu0 0.0
    %1748 = vmatpush1.msra.mxu0 0.0
    %1749 = vmatprep.subr.mxu0 0.0
    %1750 = vmatpush1.msra.mxu0 0.0
    %1751 = vmatprep.subr.mxu0 0.0
    %1752 = vmatpush1.msra.mxu0 0.0
    %1753 = vmatprep.subr.mxu0 0.0
    %1754 = vmatpush1.msra.mxu0 0.0
    %1755 = vmatprep.subr.mxu0 0.0
    %1756 = vmatpush1.msra.mxu0 0.0
    %1757 = vmatprep.subr.mxu0 0.0
    %1758 = vmatpush1.msra.mxu0 0.0
    %1759 = vmatprep.mubr.f32.mxu0 0.0
    %1760 = vmatmul.mubr.f32.gmra.mrb[0].mxu0 %v1693
    %v1761 = vpop.f32.mrb[0].mxu0
    %v1762 = vadd.f32 0.0, %v1761
    %v1763 = vpop.f32.mrb[0].mxu0
    %v1764 = vadd.f32 0.0, %v1763
    %1765 = vdwg.mxu0
    %v1766 = vadd.f32 %v1219, %v1762
    %v1767 = vadd.f32 %v1221, %v1764
    %v1768 = vxor.u32 %v1766, 2147483648
    %v1769 = vmul.f32 %v1768, 1.442695
    %v1770 = vpow.pop %v1769
    %v1771 = vadd.f32 %v1770, 1.0
    %v1772 = vrcp.pop %v1771
    %v1773 = vmul.f32 1.0, %v1772
    %v1774 = vtanh.pop %v1767
    %v1775 = vxor.u32 %v1767, 2147483648
    %v1776 = vmul.f32 %v1775, 1.442695
    %v1777 = vpow.pop %v1776
    %v1778 = vadd.f32 %v1777, 1.0
    %v1779 = vrcp.pop %v1778
    %v1780 = vmul.f32 1.0, %v1779
    %v1782 = vrot.slane %v1679, 6
    %v1784 = vmul.f32 %v1773, %v1782
    %v1785 = vmul.f32 %v1773, %v1774
    %1787 = vrot.lane.b32.xlu0 %v1785, 64
    %v1788 = vpop.permute.xlu0 %1787
    %v1790 = vadd.f32 %v1784, %v1788
    %v1791 = vtanh.pop %v1790
    %v1792 = vmul.f32 %v1780, %v1791
    %1794 = vrot.lane.b32.xlu0 %v1792, 64
    %v1795 = vpop.permute.xlu0 %1794
    %1797 = vst.msk [vmem:[#allocation3 + $0x4] sm:$0x1] %vm1338, %v1795
    %1798 = vst.msk [vmem:[#allocation3 + $0xb] sm:$0x2] %vm1340, %v1795
    %v1799 = vsel %vm216, %v1795, 0
    %1801 = vmatprep.subr.mxu0 %v1224
    %1802 = vmatpush1.msra.mxu0 %v1223
    %1803 = vmatprep.subr.mxu0 %v1226
    %1804 = vmatpush1.msra.mxu0 %v1225
    %1805 = vmatprep.subr.mxu0 %v1228
    %1806 = vmatpush1.msra.mxu0 %v1227
    %1807 = vmatprep.subr.mxu0 %v1230
    %1808 = vmatpush1.msra.mxu0 %v1229
    %1809 = vmatprep.subr.mxu0 %v1232
    %1810 = vmatpush1.msra.mxu0 %v1231
    %1811 = vmatprep.subr.mxu0 %v1234
    %1812 = vmatpush1.msra.mxu0 %v1233
    %1813 = vmatprep.subr.mxu0 %v1236
    %1814 = vmatpush1.msra.mxu0 %v1235
    %1815 = vmatprep.subr.mxu0 %v1238
    %1816 = vmatpush1.msra.mxu0 %v1237
    %1817 = vmatprep.subr.mxu0 0.0
    %1818 = vmatpush1.msra.mxu0 0.0
    %1819 = vmatprep.subr.mxu0 0.0
    %1820 = vmatpush1.msra.mxu0 0.0
    %1821 = vmatprep.subr.mxu0 0.0
    %1822 = vmatpush1.msra.mxu0 0.0
    %1823 = vmatprep.subr.mxu0 0.0
    %1824 = vmatpush1.msra.mxu0 0.0
    %1825 = vmatprep.subr.mxu0 0.0
    %1826 = vmatpush1.msra.mxu0 0.0
    %1827 = vmatprep.subr.mxu0 0.0
    %1828 = vmatpush1.msra.mxu0 0.0
    %1829 = vmatprep.subr.mxu0 0.0
    %1830 = vmatpush1.msra.mxu0 0.0
    %1831 = vmatprep.subr.mxu0 0.0
    %1832 = vmatpush1.msra.mxu0 0.0
    %1833 = vmatprep.subr.mxu0 0.0
    %1834 = vmatpush1.msra.mxu0 0.0
    %1835 = vmatprep.subr.mxu0 0.0
    %1836 = vmatpush1.msra.mxu0 0.0
    %1837 = vmatprep.subr.mxu0 0.0
    %1838 = vmatpush1.msra.mxu0 0.0
    %1839 = vmatprep.subr.mxu0 0.0
    %1840 = vmatpush1.msra.mxu0 0.0
    %1841 = vmatprep.subr.mxu0 0.0
    %1842 = vmatpush1.msra.mxu0 0.0
    %1843 = vmatprep.subr.mxu0 0.0
    %1844 = vmatpush1.msra.mxu0 0.0
    %1845 = vmatprep.subr.mxu0 0.0
    %1846 = vmatpush1.msra.mxu0 0.0
    %1847 = vmatprep.subr.mxu0 0.0
    %1848 = vmatpush1.msra.mxu0 0.0
    %1849 = vmatprep.subr.mxu0 0.0
    %1850 = vmatpush1.msra.mxu0 0.0
    %1851 = vmatprep.subr.mxu0 0.0
    %1852 = vmatpush1.msra.mxu0 0.0
    %1853 = vmatprep.subr.mxu0 0.0
    %1854 = vmatpush1.msra.mxu0 0.0
    %1855 = vmatprep.subr.mxu0 0.0
    %1856 = vmatpush1.msra.mxu0 0.0
    %1857 = vmatprep.subr.mxu0 0.0
    %1858 = vmatpush1.msra.mxu0 0.0
    %1859 = vmatprep.subr.mxu0 0.0
    %1860 = vmatpush1.msra.mxu0 0.0
    %1861 = vmatprep.subr.mxu0 0.0
    %1862 = vmatpush1.msra.mxu0 0.0
    %1863 = vmatprep.subr.mxu0 0.0
    %1864 = vmatpush1.msra.mxu0 0.0
    %1865 = vmatprep.mubr.f32.mxu0 0.0
    %1866 = vmatmul.mubr.f32.gmra.mrb[0].mxu0 %v1799
    %v1867 = vpop.f32.mrb[0].mxu0
    %v1868 = vadd.f32 0.0, %v1867
    %v1869 = vpop.f32.mrb[0].mxu0
    %v1870 = vadd.f32 0.0, %v1869
    %1871 = vdwg.mxu0
    %v1874 = vrot.slane %v1868, 6
    %v1875 = vrot.slane %v1870, 6
    %v1878 = vadd.f32 %v1219, %v1874
    %v1879 = vadd.f32 %v1221, %v1875
    %v1880 = vxor.u32 %v1878, 2147483648
    %v1881 = vmul.f32 %v1880, 1.442695
    %v1882 = vpow.pop %v1881
    %v1883 = vadd.f32 %v1882, 1.0
    %v1884 = vrcp.pop %v1883
    %v1885 = vmul.f32 1.0, %v1884
    %v1886 = vtanh.pop %v1879
    %v1887 = vxor.u32 %v1879, 2147483648
    %v1888 = vmul.f32 %v1887, 1.442695
    %v1889 = vpow.pop %v1888
    %v1890 = vadd.f32 %v1889, 1.0
    %v1891 = vrcp.pop %v1890
    %v1892 = vmul.f32 1.0, %v1891
    %v1894 = vrot.slane %v1790, 6
    %v1896 = vmul.f32 %v1885, %v1894
    %v1897 = vmul.f32 %v1885, %v1886
    %1899 = vrot.lane.b32.xlu0 %v1897, 64
    %v1900 = vpop.permute.xlu0 %1899
    %v1902 = vadd.f32 %v1896, %v1900
    %v1903 = vtanh.pop %v1902
    %v1904 = vmul.f32 %v1892, %v1903
    %1906 = vrot.lane.b32.xlu0 %v1904, 64
    %v1907 = vpop.permute.xlu0 %1906
    %1909 = vst.msk [vmem:[#allocation3 + $0x3] sm:$0x4] %vm1452, %v1907
    %1910 = vst.msk [vmem:[#allocation3 + $0xa] sm:$0x8] %vm1454, %v1907
    %v1911 = vrot.slane %v1904, 2
    %1912 = vrot.lane.b32.xlu0 %v1911, 64
    %v1913 = vpop.permute.xlu0 %1912
    %v1914 = vsel %vm216, %v1913, 0
    %1916 = vmatprep.subr.mxu0 %v1224
    %1917 = vmatpush1.msra.mxu0 %v1223
    %1918 = vmatprep.subr.mxu0 %v1226
    %1919 = vmatpush1.msra.mxu0 %v1225
    %1920 = vmatprep.subr.mxu0 %v1228
    %1921 = vmatpush1.msra.mxu0 %v1227
    %1922 = vmatprep.subr.mxu0 %v1230
    %1923 = vmatpush1.msra.mxu0 %v1229
    %1924 = vmatprep.subr.mxu0 %v1232
    %1925 = vmatpush1.msra.mxu0 %v1231
    %1926 = vmatprep.subr.mxu0 %v1234
    %1927 = vmatpush1.msra.mxu0 %v1233
    %1928 = vmatprep.subr.mxu0 %v1236
    %1929 = vmatpush1.msra.mxu0 %v1235
    %1930 = vmatprep.subr.mxu0 %v1238
    %1931 = vmatpush1.msra.mxu0 %v1237
    %1932 = vmatprep.subr.mxu0 0.0
    %1933 = vmatpush1.msra.mxu0 0.0
    %1934 = vmatprep.subr.mxu0 0.0
    %1935 = vmatpush1.msra.mxu0 0.0
    %1936 = vmatprep.subr.mxu0 0.0
    %1937 = vmatpush1.msra.mxu0 0.0
    %1938 = vmatprep.subr.mxu0 0.0
    %1939 = vmatpush1.msra.mxu0 0.0
    %1940 = vmatprep.subr.mxu0 0.0
    %1941 = vmatpush1.msra.mxu0 0.0
    %1942 = vmatprep.subr.mxu0 0.0
    %1943 = vmatpush1.msra.mxu0 0.0
    %1944 = vmatprep.subr.mxu0 0.0
    %1945 = vmatpush1.msra.mxu0 0.0
    %1946 = vmatprep.subr.mxu0 0.0
    %1947 = vmatpush1.msra.mxu0 0.0
    %1948 = vmatprep.subr.mxu0 0.0
    %1949 = vmatpush1.msra.mxu0 0.0
    %1950 = vmatprep.subr.mxu0 0.0
    %1951 = vmatpush1.msra.mxu0 0.0
    %1952 = vmatprep.subr.mxu0 0.0
    %1953 = vmatpush1.msra.mxu0 0.0
    %1954 = vmatprep.subr.mxu0 0.0
    %1955 = vmatpush1.msra.mxu0 0.0
    %1956 = vmatprep.subr.mxu0 0.0
    %1957 = vmatpush1.msra.mxu0 0.0
    %1958 = vmatprep.subr.mxu0 0.0
    %1959 = vmatpush1.msra.mxu0 0.0
    %1960 = vmatprep.subr.mxu0 0.0
    %1961 = vmatpush1.msra.mxu0 0.0
    %1962 = vmatprep.subr.mxu0 0.0
    %1963 = vmatpush1.msra.mxu0 0.0
    %1964 = vmatprep.subr.mxu0 0.0
    %1965 = vmatpush1.msra.mxu0 0.0
    %1966 = vmatprep.subr.mxu0 0.0
    %1967 = vmatpush1.msra.mxu0 0.0
    %1968 = vmatprep.subr.mxu0 0.0
    %1969 = vmatpush1.msra.mxu0 0.0
    %1970 = vmatprep.subr.mxu0 0.0
    %1971 = vmatpush1.msra.mxu0 0.0
    %1972 = vmatprep.subr.mxu0 0.0
    %1973 = vmatpush1.msra.mxu0 0.0
    %1974 = vmatprep.subr.mxu0 0.0
    %1975 = vmatpush1.msra.mxu0 0.0
    %1976 = vmatprep.subr.mxu0 0.0
    %1977 = vmatpush1.msra.mxu0 0.0
    %1978 = vmatprep.subr.mxu0 0.0
    %1979 = vmatpush1.msra.mxu0 0.0
    %1980 = vmatprep.mubr.f32.mxu0 0.0
    %1981 = vmatmul.mubr.f32.gmra.mrb[0].mxu0 %v1914
    %v1982 = vpop.f32.mrb[0].mxu0
    %v1983 = vadd.f32 0.0, %v1982
    %v1984 = vpop.f32.mrb[0].mxu0
    %v1985 = vadd.f32 0.0, %v1984
    %1986 = vdwg.mxu0
    %v1989 = vrot.slane %v1983, 4
    %v1990 = vrot.slane %v1985, 4
    %v1993 = vadd.f32 %v1219, %v1989
    %v1994 = vadd.f32 %v1221, %v1990
    %v1995 = vxor.u32 %v1993, 2147483648
    %v1996 = vmul.f32 %v1995, 1.442695
    %v1997 = vpow.pop %v1996
    %v1998 = vadd.f32 %v1997, 1.0
    %v1999 = vrcp.pop %v1998
    %v2000 = vmul.f32 1.0, %v1999
    %v2001 = vtanh.pop %v1994
    %v2002 = vxor.u32 %v1994, 2147483648
    %v2003 = vmul.f32 %v2002, 1.442695
    %v2004 = vpow.pop %v2003
    %v2005 = vadd.f32 %v2004, 1.0
    %v2006 = vrcp.pop %v2005
    %v2007 = vmul.f32 1.0, %v2006
    %v2009 = vrot.slane %v1902, 6
    %v2011 = vmul.f32 %v2000, %v2009
    %v2012 = vmul.f32 %v2000, %v2001
    %2014 = vrot.lane.b32.xlu0 %v2012, 64
    %v2015 = vpop.permute.xlu0 %2014
    %v2017 = vadd.f32 %v2011, %v2015
    %v2018 = vtanh.pop %v2017
    %v2019 = vmul.f32 %v2007, %v2018
    %2021 = vrot.lane.b32.xlu0 %v2019, 64
    %v2022 = vpop.permute.xlu0 %2021
    %2024 = vst.msk [vmem:[#allocation3 + $0x2] sm:$0x10] %vm1569, %v2022
    %2025 = vst.msk [vmem:[#allocation3 + $0x9] sm:$0x20] %vm1571, %v2022
    %v2026 = vrot.slane %v2019, 4
    %2027 = vrot.lane.b32.xlu0 %v2026, 64
    %v2028 = vpop.permute.xlu0 %2027
    %v2029 = vsel %vm216, %v2028, 0
    %2031 = vmatprep.subr.mxu0 %v1224
    %2032 = vmatpush1.msra.mxu0 %v1223
    %2033 = vmatprep.subr.mxu0 %v1226
    %2034 = vmatpush1.msra.mxu0 %v1225
    %2035 = vmatprep.subr.mxu0 %v1228
    %2036 = vmatpush1.msra.mxu0 %v1227
    %2037 = vmatprep.subr.mxu0 %v1230
    %2038 = vmatpush1.msra.mxu0 %v1229
    %2039 = vmatprep.subr.mxu0 %v1232
    %2040 = vmatpush1.msra.mxu0 %v1231
    %2041 = vmatprep.subr.mxu0 %v1234
    %2042 = vmatpush1.msra.mxu0 %v1233
    %2043 = vmatprep.subr.mxu0 %v1236
    %2044 = vmatpush1.msra.mxu0 %v1235
    %2045 = vmatprep.subr.mxu0 %v1238
    %2046 = vmatpush1.msra.mxu0 %v1237
    %2047 = vmatprep.subr.mxu0 0.0
    %2048 = vmatpush1.msra.mxu0 0.0
    %2049 = vmatprep.subr.mxu0 0.0
    %2050 = vmatpush1.msra.mxu0 0.0
    %2051 = vmatprep.subr.mxu0 0.0
    %2052 = vmatpush1.msra.mxu0 0.0
    %2053 = vmatprep.subr.mxu0 0.0
    %2054 = vmatpush1.msra.mxu0 0.0
    %2055 = vmatprep.subr.mxu0 0.0
    %2056 = vmatpush1.msra.mxu0 0.0
    %2057 = vmatprep.subr.mxu0 0.0
    %2058 = vmatpush1.msra.mxu0 0.0
    %2059 = vmatprep.subr.mxu0 0.0
    %2060 = vmatpush1.msra.mxu0 0.0
    %2061 = vmatprep.subr.mxu0 0.0
    %2062 = vmatpush1.msra.mxu0 0.0
    %2063 = vmatprep.subr.mxu0 0.0
    %2064 = vmatpush1.msra.mxu0 0.0
    %2065 = vmatprep.subr.mxu0 0.0
    %2066 = vmatpush1.msra.mxu0 0.0
    %2067 = vmatprep.subr.mxu0 0.0
    %2068 = vmatpush1.msra.mxu0 0.0
    %2069 = vmatprep.subr.mxu0 0.0
    %2070 = vmatpush1.msra.mxu0 0.0
    %2071 = vmatprep.subr.mxu0 0.0
    %2072 = vmatpush1.msra.mxu0 0.0
    %2073 = vmatprep.subr.mxu0 0.0
    %2074 = vmatpush1.msra.mxu0 0.0
    %2075 = vmatprep.subr.mxu0 0.0
    %2076 = vmatpush1.msra.mxu0 0.0
    %2077 = vmatprep.subr.mxu0 0.0
    %2078 = vmatpush1.msra.mxu0 0.0
    %2079 = vmatprep.subr.mxu0 0.0
    %2080 = vmatpush1.msra.mxu0 0.0
    %2081 = vmatprep.subr.mxu0 0.0
    %2082 = vmatpush1.msra.mxu0 0.0
    %2083 = vmatprep.subr.mxu0 0.0
    %2084 = vmatpush1.msra.mxu0 0.0
    %2085 = vmatprep.subr.mxu0 0.0
    %2086 = vmatpush1.msra.mxu0 0.0
    %2087 = vmatprep.subr.mxu0 0.0
    %2088 = vmatpush1.msra.mxu0 0.0
    %2089 = vmatprep.subr.mxu0 0.0
    %2090 = vmatpush1.msra.mxu0 0.0
    %2091 = vmatprep.subr.mxu0 0.0
    %2092 = vmatpush1.msra.mxu0 0.0
    %2093 = vmatprep.subr.mxu0 0.0
    %2094 = vmatpush1.msra.mxu0 0.0
    %2095 = vmatprep.mubr.f32.mxu0 0.0
    %2096 = vmatmul.mubr.f32.gmra.mrb[0].mxu0 %v2029
    %v2097 = vpop.f32.mrb[0].mxu0
    %v2098 = vadd.f32 0.0, %v2097
    %v2099 = vpop.f32.mrb[0].mxu0
    %v2100 = vadd.f32 0.0, %v2099
    %2101 = vdwg.mxu0
    %v2104 = vrot.slane %v2098, 2
    %v2105 = vrot.slane %v2100, 2
    %v2108 = vadd.f32 %v1219, %v2104
    %v2109 = vadd.f32 %v1221, %v2105
    %v2110 = vxor.u32 %v2108, 2147483648
    %v2111 = vmul.f32 %v2110, 1.442695
    %v2112 = vpow.pop %v2111
    %v2113 = vadd.f32 %v2112, 1.0
    %v2114 = vrcp.pop %v2113
    %v2115 = vmul.f32 1.0, %v2114
    %v2116 = vtanh.pop %v2109
    %v2117 = vxor.u32 %v2109, 2147483648
    %v2118 = vmul.f32 %v2117, 1.442695
    %v2119 = vpow.pop %v2118
    %v2120 = vadd.f32 %v2119, 1.0
    %v2121 = vrcp.pop %v2120
    %v2122 = vmul.f32 1.0, %v2121
    %v2124 = vrot.slane %v2017, 6
    %v2126 = vmul.f32 %v2115, %v2124
    %v2127 = vmul.f32 %v2115, %v2116
    %2129 = vrot.lane.b32.xlu0 %v2127, 64
    %v2130 = vpop.permute.xlu0 %2129
    %v2132 = vadd.f32 %v2126, %v2130
    %v2133 = vtanh.pop %v2132
    %v2134 = vmul.f32 %v2122, %v2133
    %2136 = vrot.lane.b32.xlu0 %v2134, 64
    %v2137 = vpop.permute.xlu0 %2136
    %2139 = vst.msk [vmem:[#allocation3 + $0x1] sm:$0x40] %vm1686, %v2137
    %2140 = vst.msk [vmem:[#allocation3 + $0x8] sm:$0x80] %vm1688, %v2137
    %v2141 = vld [vmem:[#allocation3] sm:$0xff]
    %v2142 = vld [vmem:[#allocation3 + $0x8] sm:$0xff]
    %v2143 = vld [vmem:[%s7] sm:$0xff]
    %v2144 = vld [vmem:[%s7 + $0x8] sm:$0xff]
    %v2145 = vld [vmem:[%s7 + $0x10] sm:$0xff]
    %v2146 = vld [vmem:[%s7 + $0x18] sm:$0xff]
    %v2147 = vld [vmem:[%s7 + $0x20] sm:$0xff]
    %v2148 = vld [vmem:[%s7 + $0x28] sm:$0xff]
    %v2149 = vld [vmem:[%s7 + $0x30] sm:$0xff]
    %v2150 = vld [vmem:[%s7 + $0x38] sm:$0xff]
    %v2151 = vld [vmem:[%s8] sm:$0x1]
    %v2153 = vlaneseq
    %v2154 = vshrl.u32 %v2153, 7
    %v2155 = vsub.s32 0, %v2154
    %v2156 = vrot.slane %v2151, %v2155
    %v2159 = vsel %vm216, %v2141, 0
    %v2162 = vsel %vm216, %v2142, 0
    %2164 = vmatprep.subr.mxu0 0.0
    %2165 = vmatpush1.msra.mxu0 %v2143
    %2166 = vmatprep.subr.mxu0 0.0
    %2167 = vmatpush1.msra.mxu0 %v2144
    %2168 = vmatprep.subr.mxu0 0.0
    %2169 = vmatpush1.msra.mxu0 %v2145
    %2170 = vmatprep.subr.mxu0 0.0
    %2171 = vmatpush1.msra.mxu0 %v2146
    %2172 = vmatprep.subr.mxu0 0.0
    %2173 = vmatpush1.msra.mxu0 %v2147
    %2174 = vmatprep.subr.mxu0 0.0
    %2175 = vmatpush1.msra.mxu0 %v2148
    %2176 = vmatprep.subr.mxu0 0.0
    %2177 = vmatpush1.msra.mxu0 %v2149
    %2178 = vmatprep.subr.mxu0 0.0
    %2179 = vmatpush1.msra.mxu0 %v2150
    %2180 = vmatprep.subr.mxu0 0.0
    %2181 = vmatpush1.msra.mxu0 0.0
    %2182 = vmatprep.subr.mxu0 0.0
    %2183 = vmatpush1.msra.mxu0 0.0
    %2184 = vmatprep.subr.mxu0 0.0
    %2185 = vmatpush1.msra.mxu0 0.0
    %2186 = vmatprep.subr.mxu0 0.0
    %2187 = vmatpush1.msra.mxu0 0.0
    %2188 = vmatprep.subr.mxu0 0.0
    %2189 = vmatpush1.msra.mxu0 0.0
    %2190 = vmatprep.subr.mxu0 0.0
    %2191 = vmatpush1.msra.mxu0 0.0
    %2192 = vmatprep.subr.mxu0 0.0
    %2193 = vmatpush1.msra.mxu0 0.0
    %2194 = vmatprep.subr.mxu0 0.0
    %2195 = vmatpush1.msra.mxu0 0.0
    %2196 = vmatprep.subr.mxu0 0.0
    %2197 = vmatpush1.msra.mxu0 0.0
    %2198 = vmatprep.subr.mxu0 0.0
    %2199 = vmatpush1.msra.mxu0 0.0
    %2200 = vmatprep.subr.mxu0 0.0
    %2201 = vmatpush1.msra.mxu0 0.0
    %2202 = vmatprep.subr.mxu0 0.0
    %2203 = vmatpush1.msra.mxu0 0.0
    %2204 = vmatprep.subr.mxu0 0.0
    %2205 = vmatpush1.msra.mxu0 0.0
    %2206 = vmatprep.subr.mxu0 0.0
    %2207 = vmatpush1.msra.mxu0 0.0
    %2208 = vmatprep.subr.mxu0 0.0
    %2209 = vmatpush1.msra.mxu0 0.0
    %2210 = vmatprep.subr.mxu0 0.0
    %2211 = vmatpush1.msra.mxu0 0.0
    %2212 = vmatprep.subr.mxu0 0.0
    %2213 = vmatpush1.msra.mxu0 0.0
    %2214 = vmatprep.subr.mxu0 0.0
    %2215 = vmatpush1.msra.mxu0 0.0
    %2216 = vmatprep.subr.mxu0 0.0
    %2217 = vmatpush1.msra.mxu0 0.0
    %2218 = vmatprep.subr.mxu0 0.0
    %2219 = vmatpush1.msra.mxu0 0.0
    %2220 = vmatprep.subr.mxu0 0.0
    %2221 = vmatpush1.msra.mxu0 0.0
    %2222 = vmatprep.subr.mxu0 0.0
    %2223 = vmatpush1.msra.mxu0 0.0
    %2224 = vmatprep.subr.mxu0 0.0
    %2225 = vmatpush1.msra.mxu0 0.0
    %2226 = vmatprep.subr.mxu0 0.0
    %2227 = vmatpush1.msra.mxu0 0.0
    %2228 = vmatprep.mubr.f32.mxu0 0.0
    %2229 = vmatmul.mubr.f32.gmra.mrb[0].mxu0 %v2159
    %v2230 = vpop.f32.mrb[0].mxu0
    %v2231 = vadd.f32 %v2156, %v2230
    %v2232 = vpop.f32.mrb[0].mxu0
    %2233 = vmatprep.mubr.f32.mxu0 0.0
    %2234 = vmatmul.mubr.f32.gmra.mrb[0].mxu0 %v2162
    %v2235 = vpop.f32.mrb[0].mxu0
    %v2236 = vadd.f32 %v2156, %v2235
    %v2237 = vpop.f32.mrb[0].mxu0
    %2238 = vdwg.mxu0
    %vm2239 = vcmask 39936
    %2240 = vst.msk [vmem:[%s9] sm:$0xff] %vm2239, %v2231
    %2241 = vst.msk [vmem:[%s9 + $0x8] sm:$0xff] %vm2239, %v2236
    // Predicated region
    $region46: #{lstm_model_forward.1} parent=1 // pred_check
      _
    $region47: #{lstm_model_forward.1} parent=1 // pred_check_branch
      %2243 = sbr.rel (0) target = $region49
    $region48: #{lstm_model_forward.1} parent=1 // pred_region
      _
    $region49: #{lstm_model_forward.1} parent=1 // pred_fallthru
      _
    // Predicated region
    $region50: #{lstm_model_forward.1} parent=1 // pred_check
      _
    $region51: #{lstm_model_forward.1} parent=1 // pred_check_branch
      %2245 = sbr.rel (0) target = $region53
    $region52: #{lstm_model_forward.1} parent=1 // pred_region
      _
    $region53: #{lstm_model_forward.1} parent=1 // pred_fallthru
      _
    %2246 = vsyncpa [#allocation5], 1
    %2247 = vsyncpa [#allocation7], 1

</llo_original>
